<compile_context>
chip_gen: v6e
topology: v6e:2x2x1
jax: 0.10.0
libtpu: 0.0.40
codegen_flags: <defaults>
</compile_context>

<pallas_src>
import numpy as np

import jax
import jax.numpy as jnp
from jax import lax
from jax.experimental import pallas as pl
from jax.experimental.pallas import tpu as pltpu

BN_EPS = 1e-5

# output-row/col parity -> ConvT kernel taps (kh/kw) paired with padded-input offsets (dh/dw)
_PHASE_KH = {0: (1, 3), 1: (0, 2)}
_PHASE_DH = {0: (1, 0), 1: (2, 1)}


def _round_up(x, m):
    return ((x + m - 1) // m) * m


def _vmem_limit_bytes():
    # Per-generation VMEM budget: ~half of physical (v5e/v6e: 64 of 128 MiB; v7x: 32 of 64),
    # clamped to a safe range so a v6e-tuned limit never collides with v7x's 64 MiB ceiling.
    cap = 64 * 1024 * 1024
    try:
        cap = int(pltpu.get_tpu_info().vmem_capacity_bytes)
    except Exception:
        pass
    return int(min(max(cap // 2, 32 * 1024 * 1024), 100 * 1024 * 1024))


VMEM_LIMIT_BYTES = _vmem_limit_bytes()


def _lane_tile(v, reps):
    # Lane-dim tiling via concatenation (avoids in-kernel reshape relayouts).
    return jnp.concatenate([v] * reps, axis=-1)


# --------------------------------------------------------------------------------------
# Kernel 1: latent projection  (matmul + bias + BatchNorm + ReLU, fully fused)
# --------------------------------------------------------------------------------------
def _proj_bn_relu_kernel(C0, n_pos, inv_count):
    def kernel(z_ref, w_ref, b_ref, g_ref, bt_ref, o_ref):
        # (N, latent) @ (latent, n_pos*C0) on the MXU, f32 accumulation.
        acc = jnp.dot(z_ref[...], w_ref[...],
                      preferred_element_type=jnp.float32) + b_ref[...]
        # Training-mode BatchNorm: per-channel stats pooled over batch rows and the n_pos
        # spatial positions packed along lanes.  Stats live on (1, n_pos*C0) vectors only.
        s = jnp.sum(acc, axis=0, keepdims=True)
        mean_c = sum(s[:, p * C0:(p + 1) * C0] for p in range(n_pos)) * inv_count
        d = acc - _lane_tile(mean_c, n_pos)
        s2 = jnp.sum(d * d, axis=0, keepdims=True)
        var_c = sum(s2[:, p * C0:(p + 1) * C0] for p in range(n_pos)) * inv_count
        scale_c = g_ref[...] * lax.rsqrt(var_c + BN_EPS)
        shift_c = bt_ref[...] - mean_c * scale_c
        out = acc * _lane_tile(scale_c, n_pos) + _lane_tile(shift_c, n_pos)
        o_ref[...] = jnp.maximum(out, 0.0).astype(o_ref.dtype)
    return kernel


def proj_bn_relu(z, w, b, g, beta, *, C0):
    N = z.shape[0]
    cols = w.shape[1]
    n_pos = cols // C0
    vmem = pl.BlockSpec(memory_space=pltpu.MemorySpace.VMEM)
    return pl.pallas_call(
        _proj_bn_relu_kernel(C0, n_pos, 1.0 / float(n_pos * N)),
        out_shape=jax.ShapeDtypeStruct((N, cols), jnp.bfloat16),
        in_specs=[vmem] * 5,
        out_specs=vmem,
        compiler_params=pltpu.CompilerParams(vmem_limit_bytes=VMEM_LIMIT_BYTES),
    )(z, w, b, g, beta)


# --------------------------------------------------------------------------------------
# Kernel 2: ConvTranspose2d(4,2,1) + bias + BatchNorm + ReLU — single block-diagonal matmul
#           over all 4 output-parity phases; whole batch resident so BN stats stay exact.
# --------------------------------------------------------------------------------------
def _convt_bn_relu_kernel(Wp, Mrows, Cp, inv_count):
    def kernel(x3_ref, w_ref, b_ref, g_ref, bt_ref, mask_ref, o_ref):
        # x3 lane layout per flattened row g: [xp[g] | xp[g+1] | xp[g+2]] -> dw taps are
        # already lane-packed; the dh taps are 3 even-offset bf16 sublane slices.
        x = x3_ref[...]                                                    # (Rtot, 3*Cin)
        patch = jnp.concatenate(
            [x[dh * Wp: dh * Wp + Mrows, :] for dh in range(3)], axis=-1)  # (Mrows, 9*Cin)
        # One 128-lane matmul computes all 4 phases (block-diagonal weight).
        acc = jnp.dot(patch, w_ref[...],
                      preferred_element_type=jnp.float32) + b_ref[...]     # (Mrows, 4*Cp)
        mask = mask_ref[...]                                               # (Mrows, 1)
        # Training-mode BN pooled over batch/space and the 4 phases; junk rows masked out.
        s = jnp.sum(acc * mask, axis=0, keepdims=True)                     # (1, 4*Cp)
        mean_c = sum(s[:, p * Cp:(p + 1) * Cp] for p in range(4)) * inv_count
        d = acc - _lane_tile(mean_c, 4)
        s2 = jnp.sum(d * d * mask, axis=0, keepdims=True)
        var_c = sum(s2[:, p * Cp:(p + 1) * Cp] for p in range(4)) * inv_count
        scale_c = g_ref[...] * lax.rsqrt(var_c + BN_EPS)
        shift_c = bt_ref[...] - mean_c * scale_c
        out = acc * _lane_tile(scale_c, 4) + _lane_tile(shift_c, 4)
        o_ref[...] = jnp.maximum(out, 0.0).astype(o_ref.dtype)
    return kernel


def convt_bn_relu(x3, w, b, g, beta, mask, *, Wp, Mrows, Cp, count):
    vmem = pl.BlockSpec(memory_space=pltpu.MemorySpace.VMEM)
    return pl.pallas_call(
        _convt_bn_relu_kernel(Wp, Mrows, Cp, 1.0 / float(count)),
        out_shape=jax.ShapeDtypeStruct((Mrows, 4 * Cp), jnp.bfloat16),
        in_specs=[vmem] * 6,
        out_specs=vmem,
        compiler_params=pltpu.CompilerParams(vmem_limit_bytes=VMEM_LIMIT_BYTES),
    )(x3, w, b, g, beta, mask)


# --------------------------------------------------------------------------------------
# Kernel 3: final ConvTranspose2d(4,2,1) + bias + tanh, grid over batch ("parallel"), bf16 out
# --------------------------------------------------------------------------------------
def _convt_tanh_kernel(Wp, Mrows):
    def kernel(x3_ref, w_ref, b_ref, o_ref):
        x = x3_ref[0]                                                      # (Rtot, 3*Cin)
        patch = jnp.concatenate(
            [x[dh * Wp: dh * Wp + Mrows, :] for dh in range(3)], axis=-1)
        acc = jnp.dot(patch, w_ref[...],
                      preferred_element_type=jnp.float32) + b_ref[...]
        o_ref[0] = jnp.tanh(acc).astype(o_ref.dtype)                       # bf16, 128 lanes
    return kernel


def convt_tanh(x3, w, b, *, Wp, Rtot, Mrows, Cin, Cp):
    N = x3.shape[0]
    return pl.pallas_call(
        _convt_tanh_kernel(Wp, Mrows),
        out_shape=jax.ShapeDtypeStruct((N, Mrows, 4 * Cp), jnp.bfloat16),
        grid=(N,),
        in_specs=[
            pl.BlockSpec((1, Rtot, 3 * Cin), lambda n: (n, 0, 0)),
            pl.BlockSpec((9 * Cin, 4 * Cp), lambda n: (0, 0)),
            pl.BlockSpec((1, 4 * Cp), lambda n: (0, 0)),
        ],
        out_specs=pl.BlockSpec((1, Mrows, 4 * Cp), lambda n: (n, 0, 0)),
        compiler_params=pltpu.CompilerParams(
            dimension_semantics=("parallel",),      # v7x: both TensorCores split the batch
            vmem_limit_bytes=VMEM_LIMIT_BYTES),
    )(x3, w, b)


# --------------------------------------------------------------------------------------
# Parameter preparation (done once, not per forward) and wrapper glue
# --------------------------------------------------------------------------------------
def convt_block_weight(w, Cp):
    """torch ConvTranspose2d weight (Cin, Cout, 4, 4) -> block-diagonal (9*Cin, 4*Cp) matrix.

    Tap t = dh*3 + dw (dh, dw in {0,1,2}) indexes Cin-wide row blocks; phase
    p = (oh%2)*2 + (ow%2) indexes Cp-wide column blocks.  Each phase block is nonzero only at
    its 4 taps, so ONE 128-lane matmul replaces four 32-lane per-phase matmuls.
    """
    Cin, Cout, K, _ = w.shape
    assert K == 4
    wnp = np.asarray(w, np.float32)
    wb = np.zeros((9 * Cin, 4 * Cp), np.float32)
    for rh in (0, 1):
        for rw in (0, 1):
            p = rh * 2 + rw
            for dh, kh in zip(_PHASE_DH[rh], _PHASE_KH[rh]):
                for dw, kw in zip(_PHASE_DH[rw], _PHASE_KH[rw]):
                    t = dh * 3 + dw
                    wb[t * Cin:(t + 1) * Cin, p * Cp:p * Cp + Cout] = wnp[:, :, kh, kw]
    return jnp.asarray(wb, jnp.bfloat16)


def make_valid_mask(N, H, W, Hp, Wp, Mrows):
    """1.0 on rows that are real (n, h, w) output positions, 0.0 on junk rows.
    Built with host numpy at trace time -> a compile-time constant under jit."""
    m = np.zeros((N, Hp, Wp), np.float32)
    m[:, :H, :W] = 1.0
    return jnp.asarray(m.reshape(-1)[:Mrows].reshape(Mrows, 1))


def unpack_phases(y3, H, W, Wp, Cout, Cp):
    """(N, rows, 4*Cp) phase-packed kernel output -> (N, 2H, 2W, Cout) NHWC.

    Row r of each image corresponds to input position (h, w) with r = h*Wp + w; junk rows
    (horizontal/bottom padding) and padded channels are dropped; 2x2 parity depth-to-space.
    """
    N, R, _ = y3.shape
    need = H * Wp
    if R < need:
        y3 = jnp.pad(y3, ((0, 0), (0, need - R), (0, 0)))
    else:
        y3 = y3[:, :need, :]
    y = y3.reshape(N, H, Wp, 4, Cp)[:, :, :W, :, :Cout]          # (N, H, W, 4, Cout)
    y = y.reshape(N, H, W, 2, 2, Cout)
    return jnp.transpose(y, (0, 1, 3, 2, 4, 5)).reshape(N, 2 * H, 2 * W, Cout)


def init_generator_params(key, latent_dim, min_channels, max_channels, resolution, out_channels):
    chans, c, s = [], max_channels, 4
    while s < resolution:
        chans.append(c)
        c = max(min_channels, c // 2)
        s *= 2
    keys = jax.random.split(key, 4 * len(chans) + 2)
    ki = iter(range(len(keys)))
    nrm = lambda k, shape, scale=0.02: scale * jax.random.normal(k, shape, jnp.float32)

    params = {}
    params["w0"] = nrm(keys[next(ki)], (latent_dim, chans[0], 4, 4))
    params["b0"] = nrm(keys[next(ki)], (chans[0],))
    params["g0"] = 1.0 + nrm(keys[next(ki)], (chans[0],))
    params["beta0"] = nrm(keys[next(ki)], (chans[0],))
    for i in range(1, len(chans)):
        params[f"w{i}"] = nrm(keys[next(ki)], (chans[i - 1], chans[i], 4, 4))
        params[f"b{i}"] = nrm(keys[next(ki)], (chans[i],))
        params[f"g{i}"] = 1.0 + nrm(keys[next(ki)], (chans[i],))
        params[f"beta{i}"] = nrm(keys[next(ki)], (chans[i],))
    params["wf"] = nrm(keys[next(ki)], (chans[-1], out_channels, 4, 4))
    params["bf"] = nrm(keys[next(ki)], (out_channels,))
    return params, chans


def prepare_generator_params(params, chans):
    """Precompute all kernel-ready (bf16) matrices / tiled biases once."""
    C0 = chans[0]
    prep = {
        "w0_mat": jnp.transpose(params["w0"].astype(jnp.bfloat16),
                                (0, 2, 3, 1)).reshape(params["w0"].shape[0], 16 * C0),
        "b0": jnp.tile(params["b0"], 16).reshape(1, 16 * C0).astype(jnp.float32),
        "g0": params["g0"].reshape(1, C0).astype(jnp.float32),
        "beta0": params["beta0"].reshape(1, C0).astype(jnp.float32),
        "C0": C0,
        "layers": [],
    }
    n = len(chans)
    for i in range(1, n + 1):
        final = (i == n)
        w = params["wf"] if final else params[f"w{i}"]
        b = params["bf"] if final else params[f"b{i}"]
        Cin, Cout = int(w.shape[0]), int(w.shape[1])
        Cp = _round_up(Cout, 32)                    # 4*Cp is a multiple of 128 lanes
        b_np = np.pad(np.asarray(b, np.float32), (0, Cp - Cout))
        layer = {
            "w": convt_block_weight(w, Cp),
            "b": jnp.asarray(np.tile(b_np, 4).reshape(1, 4 * Cp)),
            "Cin": Cin, "Cout": Cout, "Cp": Cp, "final": final,
        }
        if not final:
            layer["g"] = jnp.pad(params[f"g{i}"],
                                 (0, Cp - Cout)).reshape(1, Cp).astype(jnp.float32)
            layer["beta"] = jnp.pad(params[f"beta{i}"],
                                    (0, Cp - Cout)).reshape(1, Cp).astype(jnp.float32)
        prep["layers"].append(layer)
    return prep


def _shifted_lane_pack(flat, Rtot):
    """(rows, Cin) -> (Rtot, 3*Cin) with lane groups = rows g, g+1, g+2 (the dw taps)."""
    rows, Cin = flat.shape
    flat = jnp.pad(flat, ((0, Rtot + 2 - rows), (0, 0)))
    return jnp.concatenate([flat[0:Rtot], flat[1:Rtot + 1], flat[2:Rtot + 2]], axis=-1)


def dcgan_forward(prep, z):
    """z: (N, latent_dim) -> (N, out_channels, R, R) NCHW, same as PyTorch netG(z).
    Call under jax.jit (prep closed over) so all wrapper glue fuses."""
    N = z.shape[0]
    C0 = prep["C0"]

    # Latent projection to a 4x4xC0 map: fused matmul + bias + BN + ReLU (one kernel).
    h = proj_bn_relu(z.astype(jnp.bfloat16), prep["w0_mat"], prep["b0"],
                     prep["g0"], prep["beta0"], C0=C0)
    x = h.reshape(N, 4, 4, C0)                                   # NHWC, bf16

    for layer in prep["layers"]:
        H, W, Cin = int(x.shape[1]), int(x.shape[2]), int(x.shape[3])
        assert Cin == layer["Cin"]
        Cout, Cp = layer["Cout"], layer["Cp"]
        Hp, Wp = H + 3, W + 2                                    # 1-px halo + bottom margin
        xp = jnp.pad(x, ((0, 0), (1, 2), (1, 1), (0, 0)))
        if not layer["final"]:
            Mrows = _round_up((N - 1) * Hp * Wp + (H - 1) * Wp + W, 8)
            Rtot = _round_up(max(N * Hp * Wp, 2 * Wp + Mrows), 8)
            assert 2 * Wp + Mrows <= Rtot and Mrows <= N * Hp * Wp  # tap slices in-bounds
            x3 = _shifted_lane_pack(xp.reshape(N * Hp * Wp, Cin), Rtot)
            out = convt_bn_relu(
                x3, layer["w"], layer["b"], layer["g"], layer["beta"],
                make_valid_mask(N, H, W, Hp, Wp, Mrows),
                Wp=Wp, Mrows=Mrows, Cp=Cp, count=4 * N * H * W)
            out = jnp.pad(out, ((0, N * Hp * Wp - Mrows), (0, 0)))
            x = unpack_phases(out.reshape(N, Hp * Wp, 4 * Cp), H, W, Wp, Cout, Cp)
        else:
            Mrows = _round_up((H - 1) * Wp + W, 8)
            Rtot = _round_up(max(Hp * Wp, 2 * Wp + Mrows), 8)
            assert 2 * Wp + Mrows <= Rtot                          # tap slices in-bounds
            xp3 = xp.reshape(N, Hp * Wp, Cin)
            xp3 = jnp.pad(xp3, ((0, 0), (0, Rtot + 2 - Hp * Wp), (0, 0)))
            x3 = jnp.concatenate(
                [xp3[:, 0:Rtot], xp3[:, 1:Rtot + 1], xp3[:, 2:Rtot + 2]], axis=-1)
            out = convt_tanh(x3, layer["w"], layer["b"],
                             Wp=Wp, Rtot=Rtot, Mrows=Mrows, Cin=Cin, Cp=Cp)
            x = unpack_phases(out, H, W, Wp, Cout, Cp)
    return jnp.transpose(x, (0, 3, 1, 2)).astype(jnp.float32)    # NCHW like PyTorch


# --------------------------------------------------------------------------------------
# Independent pure-JAX reference (zero-dilation + pad + im2col formulation) for validation
# --------------------------------------------------------------------------------------
def build_patches_nhwc(x, K=4, stride=2, pad=1):
    N, H, W, C = x.shape
    Hd, Wd = (H - 1) * stride + 1, (W - 1) * stride + 1
    xd = jnp.zeros((N, Hd, Wd, C), x.dtype).at[:, ::stride, ::stride, :].set(x)
    p = K - 1 - pad
    xp = jnp.pad(xd, ((0, 0), (p, p), (p, p), (0, 0)))
    Ho = Hd + 2 * p - K + 1
    Wo = Wd + 2 * p - K + 1
    slices = [xp[:, ki:ki + Ho, kj:kj + Wo, :] for ki in range(K) for kj in range(K)]
    patches = jnp.stack(slices, axis=3)
    return patches.reshape(N * Ho * Wo, K * K * C), Ho, Wo


def convT_weight_to_matrix(w):
    Cin, Cout, K, _ = w.shape
    wf = w[:, :, ::-1, ::-1]
    return jnp.transpose(wf, (2, 3, 0, 1)).reshape(K * K * Cin, Cout)


def dcgan_forward_ref(params, prep, chans, z):
    N = z.shape[0]
    C0 = chans[0]
    h = jnp.dot(z.astype(jnp.bfloat16), prep["w0_mat"],
                preferred_element_type=jnp.float32) + prep["b0"]
    h = h.reshape(N, 4, 4, C0)
    mean = jnp.mean(h, axis=(0, 1, 2), keepdims=True)
    var = jnp.mean(jnp.square(h - mean), axis=(0, 1, 2), keepdims=True)
    h = (h - mean) * lax.rsqrt(var + BN_EPS)
    h = h * prep["g0"].reshape(1, 1, 1, C0) + prep["beta0"].reshape(1, 1, 1, C0)
    x = jnp.maximum(h, 0.0).astype(jnp.bfloat16)

    n = len(chans)
    for i in range(1, n + 1):
        final = (i == n)
        w = (params["wf"] if final else params[f"w{i}"]).astype(jnp.bfloat16)
        b = (params["bf"] if final else params[f"b{i}"]).astype(jnp.float32)
        Cout = w.shape[1]
        patches, Ho, Wo = build_patches_nhwc(x, K=4, stride=2, pad=1)
        out = jnp.dot(patches, convT_weight_to_matrix(w),
                      preferred_element_type=jnp.float32) + b.reshape(1, -1)
        if not final:
            mean = jnp.mean(out, axis=0, keepdims=True)
            var = jnp.mean(jnp.square(out - mean), axis=0, keepdims=True)
            out = (out - mean) * lax.rsqrt(var + BN_EPS)
            out = out * params[f"g{i}"].reshape(1, -1) + params[f"beta{i}"].reshape(1, -1)
            x = jnp.maximum(out, 0.0).reshape(N, Ho, Wo, Cout).astype(jnp.bfloat16)
        else:
            x = jnp.tanh(out).reshape(N, Ho, Wo, Cout)
    return jnp.transpose(x, (0, 3, 1, 2)).astype(jnp.float32)


# --------------------------------------------------------------------------------------
if __name__ == "__main__":
    # Small, deterministic "sketch" config: 32x32x1 output, latent_dim=32, batch=2.
    config = dict(latent_dim=32, n_channel_start=16, n_channel_max=64,
                  resolution=32, out_channels=1, batch=2)

    key = jax.random.PRNGKey(0)
    k_param, k_z = jax.random.split(key)
    params, chans = init_generator_params(
        k_param, config["latent_dim"], config["n_channel_start"],
        config["n_channel_max"], config["resolution"], config["out_channels"])
    prep = prepare_generator_params(params, chans)
    z = jax.random.normal(k_z, (config["batch"], config["latent_dim"]), jnp.float32)

    forward = jax.jit(lambda zz: dcgan_forward(prep, zz))       # prep closed over -> constants
    out = jax.block_until_ready(forward(z))
    assert out.shape == (config["batch"], config["out_channels"],
                         config["resolution"], config["resolution"])

    # Validate the block-diagonal 4-phase Pallas decomposition against an independent
    # dilate+pad+im2col reference.
    ref_fn = jax.jit(lambda zz: dcgan_forward_ref(params, prep, chans, zz))
    ref = jax.block_until_ready(ref_fn(z))
    np.testing.assert_allclose(np.asarray(out), np.asarray(ref), atol=1e-2, rtol=1e-2)

    print("KERNEL_OK")
</pallas_src>

<mosaic_0001>
module attributes {stable_mosaic.version = 11 : i64} {
  func.func @kernel(%arg0: memref<2x32xbf16, #tpu.memory_space<vmem>>, %arg1: memref<32x1024xbf16, #tpu.memory_space<vmem>>, %arg2: memref<1x1024xf32, #tpu.memory_space<vmem>>, %arg3: memref<1x64xf32, #tpu.memory_space<vmem>>, %arg4: memref<1x64xf32, #tpu.memory_space<vmem>>, %arg5: memref<2x1024xbf16, #tpu.memory_space<vmem>>) attributes {dimension_semantics = [], scalar_prefetch = 0 : i64, scratch_operands = 0 : i64, tpu.core_type = #tpu.core_type<tc>} {
    %c0 = arith.constant 0 : index
    %c0_0 = arith.constant 0 : index
    %0 = vector.load %arg0[%c0, %c0_0] : memref<2x32xbf16, #tpu.memory_space<vmem>>, vector<2x32xbf16>
    %c0_1 = arith.constant 0 : index
    %c0_2 = arith.constant 0 : index
    %1 = vector.load %arg1[%c0_1, %c0_2] : memref<32x1024xbf16, #tpu.memory_space<vmem>>, vector<32x1024xbf16>
    %cst = arith.constant dense<0.000000e+00> : vector<2x1024xf32>
    %2 = tpu.matmul %0, %1, %cst {dimension_numbers = #tpu.dot_dimension_numbers<[1], [0], [0], [1], [0, 0, 1, 1], [], []>} : vector<2x32xbf16>, vector<32x1024xbf16>, vector<2x1024xf32> -> vector<2x1024xf32>
    %c0_3 = arith.constant 0 : index
    %c0_4 = arith.constant 0 : index
    %3 = vector.load %arg2[%c0_3, %c0_4] : memref<1x1024xf32, #tpu.memory_space<vmem>>, vector<1x1024xf32>
    %4 = vector.broadcast %3 : vector<1x1024xf32> to vector<2x1024xf32>
    %5 = arith.addf %2, %4 : vector<2x1024xf32>
    %cst_5 = arith.constant dense<0.000000e+00> : vector<1024xf32>
    %6 = vector.multi_reduction <add>, %5, %cst_5 [0] : vector<2x1024xf32> to vector<1024xf32>
    %7 = vector.shape_cast %6 : vector<1024xf32> to vector<1x1024xf32>
    %8 = vector.extract_strided_slice %7 {offsets = [0, 0], sizes = [1, 64], strides = [1, 1]} : vector<1x1024xf32> to vector<1x64xf32>
    %cst_6 = arith.constant 0.000000e+00 : f32
    %9 = vector.broadcast %cst_6 : f32 to vector<1x64xf32>
    %10 = arith.addf %9, %8 : vector<1x64xf32>
    %11 = vector.extract_strided_slice %7 {offsets = [0, 64], sizes = [1, 64], strides = [1, 1]} : vector<1x1024xf32> to vector<1x64xf32>
    %12 = arith.addf %10, %11 : vector<1x64xf32>
    %13 = vector.extract_strided_slice %7 {offsets = [0, 128], sizes = [1, 64], strides = [1, 1]} : vector<1x1024xf32> to vector<1x64xf32>
    %14 = arith.addf %12, %13 : vector<1x64xf32>
    %15 = vector.extract_strided_slice %7 {offsets = [0, 192], sizes = [1, 64], strides = [1, 1]} : vector<1x1024xf32> to vector<1x64xf32>
    %16 = arith.addf %14, %15 : vector<1x64xf32>
    %17 = vector.extract_strided_slice %7 {offsets = [0, 256], sizes = [1, 64], strides = [1, 1]} : vector<1x1024xf32> to vector<1x64xf32>
    %18 = arith.addf %16, %17 : vector<1x64xf32>
    %19 = vector.extract_strided_slice %7 {offsets = [0, 320], sizes = [1, 64], strides = [1, 1]} : vector<1x1024xf32> to vector<1x64xf32>
    %20 = arith.addf %18, %19 : vector<1x64xf32>
    %21 = vector.extract_strided_slice %7 {offsets = [0, 384], sizes = [1, 64], strides = [1, 1]} : vector<1x1024xf32> to vector<1x64xf32>
    %22 = arith.addf %20, %21 : vector<1x64xf32>
    %23 = vector.extract_strided_slice %7 {offsets = [0, 448], sizes = [1, 64], strides = [1, 1]} : vector<1x1024xf32> to vector<1x64xf32>
    %24 = arith.addf %22, %23 : vector<1x64xf32>
    %25 = vector.extract_strided_slice %7 {offsets = [0, 512], sizes = [1, 64], strides = [1, 1]} : vector<1x1024xf32> to vector<1x64xf32>
    %26 = arith.addf %24, %25 : vector<1x64xf32>
    %27 = vector.extract_strided_slice %7 {offsets = [0, 576], sizes = [1, 64], strides = [1, 1]} : vector<1x1024xf32> to vector<1x64xf32>
    %28 = arith.addf %26, %27 : vector<1x64xf32>
    %29 = vector.extract_strided_slice %7 {offsets = [0, 640], sizes = [1, 64], strides = [1, 1]} : vector<1x1024xf32> to vector<1x64xf32>
    %30 = arith.addf %28, %29 : vector<1x64xf32>
    %31 = vector.extract_strided_slice %7 {offsets = [0, 704], sizes = [1, 64], strides = [1, 1]} : vector<1x1024xf32> to vector<1x64xf32>
    %32 = arith.addf %30, %31 : vector<1x64xf32>
    %33 = vector.extract_strided_slice %7 {offsets = [0, 768], sizes = [1, 64], strides = [1, 1]} : vector<1x1024xf32> to vector<1x64xf32>
    %34 = arith.addf %32, %33 : vector<1x64xf32>
    %35 = vector.extract_strided_slice %7 {offsets = [0, 832], sizes = [1, 64], strides = [1, 1]} : vector<1x1024xf32> to vector<1x64xf32>
    %36 = arith.addf %34, %35 : vector<1x64xf32>
    %37 = vector.extract_strided_slice %7 {offsets = [0, 896], sizes = [1, 64], strides = [1, 1]} : vector<1x1024xf32> to vector<1x64xf32>
    %38 = arith.addf %36, %37 : vector<1x64xf32>
    %39 = vector.extract_strided_slice %7 {offsets = [0, 960], sizes = [1, 64], strides = [1, 1]} : vector<1x1024xf32> to vector<1x64xf32>
    %40 = arith.addf %38, %39 : vector<1x64xf32>
    %cst_7 = arith.constant 3.125000e-02 : f32
    %41 = vector.broadcast %cst_7 : f32 to vector<1x64xf32>
    %42 = arith.mulf %40, %41 : vector<1x64xf32>
    %43 = tpu.concatenate %42, %42, %42, %42, %42, %42, %42, %42, %42, %42, %42, %42, %42, %42, %42, %42 in 1 : vector<1x64xf32>, vector<1x64xf32>, vector<1x64xf32>, vector<1x64xf32>, vector<1x64xf32>, vector<1x64xf32>, vector<1x64xf32>, vector<1x64xf32>, vector<1x64xf32>, vector<1x64xf32>, vector<1x64xf32>, vector<1x64xf32>, vector<1x64xf32>, vector<1x64xf32>, vector<1x64xf32>, vector<1x64xf32> -> vector<1x1024xf32>
    %44 = vector.broadcast %43 : vector<1x1024xf32> to vector<2x1024xf32>
    %45 = arith.subf %5, %44 : vector<2x1024xf32>
    %46 = arith.mulf %45, %45 : vector<2x1024xf32>
    %cst_8 = arith.constant dense<0.000000e+00> : vector<1024xf32>
    %47 = vector.multi_reduction <add>, %46, %cst_8 [0] : vector<2x1024xf32> to vector<1024xf32>
    %48 = vector.shape_cast %47 : vector<1024xf32> to vector<1x1024xf32>
    %49 = vector.extract_strided_slice %48 {offsets = [0, 0], sizes = [1, 64], strides = [1, 1]} : vector<1x1024xf32> to vector<1x64xf32>
    %cst_9 = arith.constant 0.000000e+00 : f32
    %50 = vector.broadcast %cst_9 : f32 to vector<1x64xf32>
    %51 = arith.addf %50, %49 : vector<1x64xf32>
    %52 = vector.extract_strided_slice %48 {offsets = [0, 64], sizes = [1, 64], strides = [1, 1]} : vector<1x1024xf32> to vector<1x64xf32>
    %53 = arith.addf %51, %52 : vector<1x64xf32>
    %54 = vector.extract_strided_slice %48 {offsets = [0, 128], sizes = [1, 64], strides = [1, 1]} : vector<1x1024xf32> to vector<1x64xf32>
    %55 = arith.addf %53, %54 : vector<1x64xf32>
    %56 = vector.extract_strided_slice %48 {offsets = [0, 192], sizes = [1, 64], strides = [1, 1]} : vector<1x1024xf32> to vector<1x64xf32>
    %57 = arith.addf %55, %56 : vector<1x64xf32>
    %58 = vector.extract_strided_slice %48 {offsets = [0, 256], sizes = [1, 64], strides = [1, 1]} : vector<1x1024xf32> to vector<1x64xf32>
    %59 = arith.addf %57, %58 : vector<1x64xf32>
    %60 = vector.extract_strided_slice %48 {offsets = [0, 320], sizes = [1, 64], strides = [1, 1]} : vector<1x1024xf32> to vector<1x64xf32>
    %61 = arith.addf %59, %60 : vector<1x64xf32>
    %62 = vector.extract_strided_slice %48 {offsets = [0, 384], sizes = [1, 64], strides = [1, 1]} : vector<1x1024xf32> to vector<1x64xf32>
    %63 = arith.addf %61, %62 : vector<1x64xf32>
    %64 = vector.extract_strided_slice %48 {offsets = [0, 448], sizes = [1, 64], strides = [1, 1]} : vector<1x1024xf32> to vector<1x64xf32>
    %65 = arith.addf %63, %64 : vector<1x64xf32>
    %66 = vector.extract_strided_slice %48 {offsets = [0, 512], sizes = [1, 64], strides = [1, 1]} : vector<1x1024xf32> to vector<1x64xf32>
    %67 = arith.addf %65, %66 : vector<1x64xf32>
    %68 = vector.extract_strided_slice %48 {offsets = [0, 576], sizes = [1, 64], strides = [1, 1]} : vector<1x1024xf32> to vector<1x64xf32>
    %69 = arith.addf %67, %68 : vector<1x64xf32>
    %70 = vector.extract_strided_slice %48 {offsets = [0, 640], sizes = [1, 64], strides = [1, 1]} : vector<1x1024xf32> to vector<1x64xf32>
    %71 = arith.addf %69, %70 : vector<1x64xf32>
    %72 = vector.extract_strided_slice %48 {offsets = [0, 704], sizes = [1, 64], strides = [1, 1]} : vector<1x1024xf32> to vector<1x64xf32>
    %73 = arith.addf %71, %72 : vector<1x64xf32>
    %74 = vector.extract_strided_slice %48 {offsets = [0, 768], sizes = [1, 64], strides = [1, 1]} : vector<1x1024xf32> to vector<1x64xf32>
    %75 = arith.addf %73, %74 : vector<1x64xf32>
    %76 = vector.extract_strided_slice %48 {offsets = [0, 832], sizes = [1, 64], strides = [1, 1]} : vector<1x1024xf32> to vector<1x64xf32>
    %77 = arith.addf %75, %76 : vector<1x64xf32>
    %78 = vector.extract_strided_slice %48 {offsets = [0, 896], sizes = [1, 64], strides = [1, 1]} : vector<1x1024xf32> to vector<1x64xf32>
    %79 = arith.addf %77, %78 : vector<1x64xf32>
    %80 = vector.extract_strided_slice %48 {offsets = [0, 960], sizes = [1, 64], strides = [1, 1]} : vector<1x1024xf32> to vector<1x64xf32>
    %81 = arith.addf %79, %80 : vector<1x64xf32>
    %cst_10 = arith.constant 3.125000e-02 : f32
    %82 = vector.broadcast %cst_10 : f32 to vector<1x64xf32>
    %83 = arith.mulf %81, %82 : vector<1x64xf32>
    %c0_11 = arith.constant 0 : index
    %c0_12 = arith.constant 0 : index
    %84 = vector.load %arg3[%c0_11, %c0_12] : memref<1x64xf32, #tpu.memory_space<vmem>>, vector<1x64xf32>
    %cst_13 = arith.constant 9.99999974E-6 : f32
    %85 = vector.broadcast %cst_13 : f32 to vector<1x64xf32>
    %86 = arith.addf %83, %85 : vector<1x64xf32>
    %87 = math.rsqrt %86 : vector<1x64xf32>
    %88 = arith.mulf %84, %87 : vector<1x64xf32>
    %c0_14 = arith.constant 0 : index
    %c0_15 = arith.constant 0 : index
    %89 = vector.load %arg4[%c0_14, %c0_15] : memref<1x64xf32, #tpu.memory_space<vmem>>, vector<1x64xf32>
    %90 = arith.mulf %42, %88 : vector<1x64xf32>
    %91 = arith.subf %89, %90 : vector<1x64xf32>
    %92 = tpu.concatenate %88, %88, %88, %88, %88, %88, %88, %88, %88, %88, %88, %88, %88, %88, %88, %88 in 1 : vector<1x64xf32>, vector<1x64xf32>, vector<1x64xf32>, vector<1x64xf32>, vector<1x64xf32>, vector<1x64xf32>, vector<1x64xf32>, vector<1x64xf32>, vector<1x64xf32>, vector<1x64xf32>, vector<1x64xf32>, vector<1x64xf32>, vector<1x64xf32>, vector<1x64xf32>, vector<1x64xf32>, vector<1x64xf32> -> vector<1x1024xf32>
    %93 = vector.broadcast %92 : vector<1x1024xf32> to vector<2x1024xf32>
    %94 = arith.mulf %5, %93 : vector<2x1024xf32>
    %95 = tpu.concatenate %91, %91, %91, %91, %91, %91, %91, %91, %91, %91, %91, %91, %91, %91, %91, %91 in 1 : vector<1x64xf32>, vector<1x64xf32>, vector<1x64xf32>, vector<1x64xf32>, vector<1x64xf32>, vector<1x64xf32>, vector<1x64xf32>, vector<1x64xf32>, vector<1x64xf32>, vector<1x64xf32>, vector<1x64xf32>, vector<1x64xf32>, vector<1x64xf32>, vector<1x64xf32>, vector<1x64xf32>, vector<1x64xf32> -> vector<1x1024xf32>
    %96 = vector.broadcast %95 : vector<1x1024xf32> to vector<2x1024xf32>
    %97 = arith.addf %94, %96 : vector<2x1024xf32>
    %cst_16 = arith.constant 0.000000e+00 : f32
    %98 = vector.broadcast %cst_16 : f32 to vector<2x1024xf32>
    %99 = arith.maximumf %97, %98 : vector<2x1024xf32>
    %100 = arith.truncf %99 : vector<2x1024xf32> to vector<2x1024xbf16>
    %c0_17 = arith.constant 0 : index
    %c0_18 = arith.constant 0 : index
    %101 = vector.load %arg5[%c0_17, %c0_18] : memref<2x1024xbf16, #tpu.memory_space<vmem>>, vector<2x1024xbf16>
    tpu.vector_store %arg5[%c0_17, %c0_18], %100 {strides = array<i32>} : memref<2x1024xbf16, #tpu.memory_space<vmem>>, vector<2x1024xbf16>,
    return
  }
}

module attributes {stable_mosaic.version = 11 : i64} {
  func.func @kernel(%arg0: memref<88x192xbf16, #tpu.memory_space<vmem>>, %arg1: memref<576x128xbf16, #tpu.memory_space<vmem>>, %arg2: memref<1x128xf32, #tpu.memory_space<vmem>>, %arg3: memref<1x32xf32, #tpu.memory_space<vmem>>, %arg4: memref<1x32xf32, #tpu.memory_space<vmem>>, %arg5: memref<64x1xf32, #tpu.memory_space<vmem>>, %arg6: memref<64x128xbf16, #tpu.memory_space<vmem>>) attributes {dimension_semantics = [], scalar_prefetch = 0 : i64, scratch_operands = 0 : i64, tpu.core_type = #tpu.core_type<tc>} {
    %c0 = arith.constant 0 : index
    %c0_0 = arith.constant 0 : index
    %0 = vector.load %arg0[%c0, %c0_0] : memref<88x192xbf16, #tpu.memory_space<vmem>>, vector<88x192xbf16>
    %1 = vector.extract_strided_slice %0 {offsets = [0, 0], sizes = [64, 192], strides = [1, 1]} : vector<88x192xbf16> to vector<64x192xbf16>
    %2 = vector.extract_strided_slice %0 {offsets = [6, 0], sizes = [64, 192], strides = [1, 1]} : vector<88x192xbf16> to vector<64x192xbf16>
    %3 = vector.extract_strided_slice %0 {offsets = [12, 0], sizes = [64, 192], strides = [1, 1]} : vector<88x192xbf16> to vector<64x192xbf16>
    %4 = tpu.concatenate %1, %2, %3 in 1 : vector<64x192xbf16>, vector<64x192xbf16>, vector<64x192xbf16> -> vector<64x576xbf16>
    %c0_1 = arith.constant 0 : index
    %c0_2 = arith.constant 0 : index
    %5 = vector.load %arg1[%c0_1, %c0_2] : memref<576x128xbf16, #tpu.memory_space<vmem>>, vector<576x128xbf16>
    %cst = arith.constant dense<0.000000e+00> : vector<64x128xf32>
    %6 = tpu.matmul %4, %5, %cst {dimension_numbers = #tpu.dot_dimension_numbers<[1], [0], [0], [1], [0, 0, 1, 1], [], []>} : vector<64x576xbf16>, vector<576x128xbf16>, vector<64x128xf32> -> vector<64x128xf32>
    %c0_3 = arith.constant 0 : index
    %c0_4 = arith.constant 0 : index
    %7 = vector.load %arg2[%c0_3, %c0_4] : memref<1x128xf32, #tpu.memory_space<vmem>>, vector<1x128xf32>
    %8 = vector.broadcast %7 : vector<1x128xf32> to vector<64x128xf32>
    %9 = arith.addf %6, %8 : vector<64x128xf32>
    %c0_5 = arith.constant 0 : index
    %c0_6 = arith.constant 0 : index
    %10 = vector.load %arg5[%c0_5, %c0_6] : memref<64x1xf32, #tpu.memory_space<vmem>>, vector<64x1xf32>
    %11 = vector.broadcast %10 : vector<64x1xf32> to vector<64x128xf32>
    %12 = arith.mulf %9, %11 : vector<64x128xf32>
    %cst_7 = arith.constant dense<0.000000e+00> : vector<128xf32>
    %13 = vector.multi_reduction <add>, %12, %cst_7 [0] : vector<64x128xf32> to vector<128xf32>
    %14 = vector.shape_cast %13 : vector<128xf32> to vector<1x128xf32>
    %15 = vector.extract_strided_slice %14 {offsets = [0, 0], sizes = [1, 32], strides = [1, 1]} : vector<1x128xf32> to vector<1x32xf32>
    %cst_8 = arith.constant 0.000000e+00 : f32
    %16 = vector.broadcast %cst_8 : f32 to vector<1x32xf32>
    %17 = arith.addf %16, %15 : vector<1x32xf32>
    %18 = vector.extract_strided_slice %14 {offsets = [0, 32], sizes = [1, 32], strides = [1, 1]} : vector<1x128xf32> to vector<1x32xf32>
    %19 = arith.addf %17, %18 : vector<1x32xf32>
    %20 = vector.extract_strided_slice %14 {offsets = [0, 64], sizes = [1, 32], strides = [1, 1]} : vector<1x128xf32> to vector<1x32xf32>
    %21 = arith.addf %19, %20 : vector<1x32xf32>
    %22 = vector.extract_strided_slice %14 {offsets = [0, 96], sizes = [1, 32], strides = [1, 1]} : vector<1x128xf32> to vector<1x32xf32>
    %23 = arith.addf %21, %22 : vector<1x32xf32>
    %cst_9 = arith.constant 7.812500e-03 : f32
    %24 = vector.broadcast %cst_9 : f32 to vector<1x32xf32>
    %25 = arith.mulf %23, %24 : vector<1x32xf32>
    %26 = tpu.concatenate %25, %25, %25, %25 in 1 : vector<1x32xf32>, vector<1x32xf32>, vector<1x32xf32>, vector<1x32xf32> -> vector<1x128xf32>
    %27 = vector.broadcast %26 : vector<1x128xf32> to vector<64x128xf32>
    %28 = arith.subf %9, %27 : vector<64x128xf32>
    %29 = arith.mulf %28, %28 : vector<64x128xf32>
    %30 = vector.broadcast %10 : vector<64x1xf32> to vector<64x128xf32>
    %31 = arith.mulf %29, %30 : vector<64x128xf32>
    %cst_10 = arith.constant dense<0.000000e+00> : vector<128xf32>
    %32 = vector.multi_reduction <add>, %31, %cst_10 [0] : vector<64x128xf32> to vector<128xf32>
    %33 = vector.shape_cast %32 : vector<128xf32> to vector<1x128xf32>
    %34 = vector.extract_strided_slice %33 {offsets = [0, 0], sizes = [1, 32], strides = [1, 1]} : vector<1x128xf32> to vector<1x32xf32>
    %cst_11 = arith.constant 0.000000e+00 : f32
    %35 = vector.broadcast %cst_11 : f32 to vector<1x32xf32>
    %36 = arith.addf %35, %34 : vector<1x32xf32>
    %37 = vector.extract_strided_slice %33 {offsets = [0, 32], sizes = [1, 32], strides = [1, 1]} : vector<1x128xf32> to vector<1x32xf32>
    %38 = arith.addf %36, %37 : vector<1x32xf32>
    %39 = vector.extract_strided_slice %33 {offsets = [0, 64], sizes = [1, 32], strides = [1, 1]} : vector<1x128xf32> to vector<1x32xf32>
    %40 = arith.addf %38, %39 : vector<1x32xf32>
    %41 = vector.extract_strided_slice %33 {offsets = [0, 96], sizes = [1, 32], strides = [1, 1]} : vector<1x128xf32> to vector<1x32xf32>
    %42 = arith.addf %40, %41 : vector<1x32xf32>
    %cst_12 = arith.constant 7.812500e-03 : f32
    %43 = vector.broadcast %cst_12 : f32 to vector<1x32xf32>
    %44 = arith.mulf %42, %43 : vector<1x32xf32>
    %c0_13 = arith.constant 0 : index
    %c0_14 = arith.constant 0 : index
    %45 = vector.load %arg3[%c0_13, %c0_14] : memref<1x32xf32, #tpu.memory_space<vmem>>, vector<1x32xf32>
    %cst_15 = arith.constant 9.99999974E-6 : f32
    %46 = vector.broadcast %cst_15 : f32 to vector<1x32xf32>
    %47 = arith.addf %44, %46 : vector<1x32xf32>
    %48 = math.rsqrt %47 : vector<1x32xf32>
    %49 = arith.mulf %45, %48 : vector<1x32xf32>
    %c0_16 = arith.constant 0 : index
    %c0_17 = arith.constant 0 : index
    %50 = vector.load %arg4[%c0_16, %c0_17] : memref<1x32xf32, #tpu.memory_space<vmem>>, vector<1x32xf32>
    %51 = arith.mulf %25, %49 : vector<1x32xf32>
    %52 = arith.subf %50, %51 : vector<1x32xf32>
    %53 = tpu.concatenate %49, %49, %49, %49 in 1 : vector<1x32xf32>, vector<1x32xf32>, vector<1x32xf32>, vector<1x32xf32> -> vector<1x128xf32>
    %54 = vector.broadcast %53 : vector<1x128xf32> to vector<64x128xf32>
    %55 = arith.mulf %9, %54 : vector<64x128xf32>
    %56 = tpu.concatenate %52, %52, %52, %52 in 1 : vector<1x32xf32>, vector<1x32xf32>, vector<1x32xf32>, vector<1x32xf32> -> vector<1x128xf32>
    %57 = vector.broadcast %56 : vector<1x128xf32> to vector<64x128xf32>
    %58 = arith.addf %55, %57 : vector<64x128xf32>
    %cst_18 = arith.constant 0.000000e+00 : f32
    %59 = vector.broadcast %cst_18 : f32 to vector<64x128xf32>
    %60 = arith.maximumf %58, %59 : vector<64x128xf32>
    %61 = arith.truncf %60 : vector<64x128xf32> to vector<64x128xbf16>
    %c0_19 = arith.constant 0 : index
    %c0_20 = arith.constant 0 : index
    %62 = vector.load %arg6[%c0_19, %c0_20] : memref<64x128xbf16, #tpu.memory_space<vmem>>, vector<64x128xbf16>
    tpu.vector_store %arg6[%c0_19, %c0_20], %61 {strides = array<i32>} : memref<64x128xbf16, #tpu.memory_space<vmem>>, vector<64x128xbf16>,
    return
  }
}

module attributes {stable_mosaic.version = 11 : i64} {
  func.func @kernel(%arg0: memref<224x96xbf16, #tpu.memory_space<vmem>>, %arg1: memref<288x128xbf16, #tpu.memory_space<vmem>>, %arg2: memref<1x128xf32, #tpu.memory_space<vmem>>, %arg3: memref<1x32xf32, #tpu.memory_space<vmem>>, %arg4: memref<1x32xf32, #tpu.memory_space<vmem>>, %arg5: memref<192x1xf32, #tpu.memory_space<vmem>>, %arg6: memref<192x128xbf16, #tpu.memory_space<vmem>>) attributes {dimension_semantics = [], scalar_prefetch = 0 : i64, scratch_operands = 0 : i64, tpu.core_type = #tpu.core_type<tc>} {
    %c0 = arith.constant 0 : index
    %c0_0 = arith.constant 0 : index
    %0 = vector.load %arg0[%c0, %c0_0] : memref<224x96xbf16, #tpu.memory_space<vmem>>, vector<224x96xbf16>
    %1 = vector.extract_strided_slice %0 {offsets = [0, 0], sizes = [192, 96], strides = [1, 1]} : vector<224x96xbf16> to vector<192x96xbf16>
    %2 = vector.extract_strided_slice %0 {offsets = [10, 0], sizes = [192, 96], strides = [1, 1]} : vector<224x96xbf16> to vector<192x96xbf16>
    %3 = vector.extract_strided_slice %0 {offsets = [20, 0], sizes = [192, 96], strides = [1, 1]} : vector<224x96xbf16> to vector<192x96xbf16>
    %4 = tpu.concatenate %1, %2, %3 in 1 : vector<192x96xbf16>, vector<192x96xbf16>, vector<192x96xbf16> -> vector<192x288xbf16>
    %c0_1 = arith.constant 0 : index
    %c0_2 = arith.constant 0 : index
    %5 = vector.load %arg1[%c0_1, %c0_2] : memref<288x128xbf16, #tpu.memory_space<vmem>>, vector<288x128xbf16>
    %cst = arith.constant dense<0.000000e+00> : vector<192x128xf32>
    %6 = tpu.matmul %4, %5, %cst {dimension_numbers = #tpu.dot_dimension_numbers<[1], [0], [0], [1], [0, 0, 1, 1], [], []>} : vector<192x288xbf16>, vector<288x128xbf16>, vector<192x128xf32> -> vector<192x128xf32>
    %c0_3 = arith.constant 0 : index
    %c0_4 = arith.constant 0 : index
    %7 = vector.load %arg2[%c0_3, %c0_4] : memref<1x128xf32, #tpu.memory_space<vmem>>, vector<1x128xf32>
    %8 = vector.broadcast %7 : vector<1x128xf32> to vector<192x128xf32>
    %9 = arith.addf %6, %8 : vector<192x128xf32>
    %c0_5 = arith.constant 0 : index
    %c0_6 = arith.constant 0 : index
    %10 = vector.load %arg5[%c0_5, %c0_6] : memref<192x1xf32, #tpu.memory_space<vmem>>, vector<192x1xf32>
    %11 = vector.broadcast %10 : vector<192x1xf32> to vector<192x128xf32>
    %12 = arith.mulf %9, %11 : vector<192x128xf32>
    %cst_7 = arith.constant dense<0.000000e+00> : vector<128xf32>
    %13 = vector.multi_reduction <add>, %12, %cst_7 [0] : vector<192x128xf32> to vector<128xf32>
    %14 = vector.shape_cast %13 : vector<128xf32> to vector<1x128xf32>
    %15 = vector.extract_strided_slice %14 {offsets = [0, 0], sizes = [1, 32], strides = [1, 1]} : vector<1x128xf32> to vector<1x32xf32>
    %cst_8 = arith.constant 0.000000e+00 : f32
    %16 = vector.broadcast %cst_8 : f32 to vector<1x32xf32>
    %17 = arith.addf %16, %15 : vector<1x32xf32>
    %18 = vector.extract_strided_slice %14 {offsets = [0, 32], sizes = [1, 32], strides = [1, 1]} : vector<1x128xf32> to vector<1x32xf32>
    %19 = arith.addf %17, %18 : vector<1x32xf32>
    %20 = vector.extract_strided_slice %14 {offsets = [0, 64], sizes = [1, 32], strides = [1, 1]} : vector<1x128xf32> to vector<1x32xf32>
    %21 = arith.addf %19, %20 : vector<1x32xf32>
    %22 = vector.extract_strided_slice %14 {offsets = [0, 96], sizes = [1, 32], strides = [1, 1]} : vector<1x128xf32> to vector<1x32xf32>
    %23 = arith.addf %21, %22 : vector<1x32xf32>
    %cst_9 = arith.constant 0.001953125 : f32
    %24 = vector.broadcast %cst_9 : f32 to vector<1x32xf32>
    %25 = arith.mulf %23, %24 : vector<1x32xf32>
    %26 = tpu.concatenate %25, %25, %25, %25 in 1 : vector<1x32xf32>, vector<1x32xf32>, vector<1x32xf32>, vector<1x32xf32> -> vector<1x128xf32>
    %27 = vector.broadcast %26 : vector<1x128xf32> to vector<192x128xf32>
    %28 = arith.subf %9, %27 : vector<192x128xf32>
    %29 = arith.mulf %28, %28 : vector<192x128xf32>
    %30 = vector.broadcast %10 : vector<192x1xf32> to vector<192x128xf32>
    %31 = arith.mulf %29, %30 : vector<192x128xf32>
    %cst_10 = arith.constant dense<0.000000e+00> : vector<128xf32>
    %32 = vector.multi_reduction <add>, %31, %cst_10 [0] : vector<192x128xf32> to vector<128xf32>
    %33 = vector.shape_cast %32 : vector<128xf32> to vector<1x128xf32>
    %34 = vector.extract_strided_slice %33 {offsets = [0, 0], sizes = [1, 32], strides = [1, 1]} : vector<1x128xf32> to vector<1x32xf32>
    %cst_11 = arith.constant 0.000000e+00 : f32
    %35 = vector.broadcast %cst_11 : f32 to vector<1x32xf32>
    %36 = arith.addf %35, %34 : vector<1x32xf32>
    %37 = vector.extract_strided_slice %33 {offsets = [0, 32], sizes = [1, 32], strides = [1, 1]} : vector<1x128xf32> to vector<1x32xf32>
    %38 = arith.addf %36, %37 : vector<1x32xf32>
    %39 = vector.extract_strided_slice %33 {offsets = [0, 64], sizes = [1, 32], strides = [1, 1]} : vector<1x128xf32> to vector<1x32xf32>
    %40 = arith.addf %38, %39 : vector<1x32xf32>
    %41 = vector.extract_strided_slice %33 {offsets = [0, 96], sizes = [1, 32], strides = [1, 1]} : vector<1x128xf32> to vector<1x32xf32>
    %42 = arith.addf %40, %41 : vector<1x32xf32>
    %cst_12 = arith.constant 0.001953125 : f32
    %43 = vector.broadcast %cst_12 : f32 to vector<1x32xf32>
    %44 = arith.mulf %42, %43 : vector<1x32xf32>
    %c0_13 = arith.constant 0 : index
    %c0_14 = arith.constant 0 : index
    %45 = vector.load %arg3[%c0_13, %c0_14] : memref<1x32xf32, #tpu.memory_space<vmem>>, vector<1x32xf32>
    %cst_15 = arith.constant 9.99999974E-6 : f32
    %46 = vector.broadcast %cst_15 : f32 to vector<1x32xf32>
    %47 = arith.addf %44, %46 : vector<1x32xf32>
    %48 = math.rsqrt %47 : vector<1x32xf32>
    %49 = arith.mulf %45, %48 : vector<1x32xf32>
    %c0_16 = arith.constant 0 : index
    %c0_17 = arith.constant 0 : index
    %50 = vector.load %arg4[%c0_16, %c0_17] : memref<1x32xf32, #tpu.memory_space<vmem>>, vector<1x32xf32>
    %51 = arith.mulf %25, %49 : vector<1x32xf32>
    %52 = arith.subf %50, %51 : vector<1x32xf32>
    %53 = tpu.concatenate %49, %49, %49, %49 in 1 : vector<1x32xf32>, vector<1x32xf32>, vector<1x32xf32>, vector<1x32xf32> -> vector<1x128xf32>
    %54 = vector.broadcast %53 : vector<1x128xf32> to vector<192x128xf32>
    %55 = arith.mulf %9, %54 : vector<192x128xf32>
    %56 = tpu.concatenate %52, %52, %52, %52 in 1 : vector<1x32xf32>, vector<1x32xf32>, vector<1x32xf32>, vector<1x32xf32> -> vector<1x128xf32>
    %57 = vector.broadcast %56 : vector<1x128xf32> to vector<192x128xf32>
    %58 = arith.addf %55, %57 : vector<192x128xf32>
    %cst_18 = arith.constant 0.000000e+00 : f32
    %59 = vector.broadcast %cst_18 : f32 to vector<192x128xf32>
    %60 = arith.maximumf %58, %59 : vector<192x128xf32>
    %61 = arith.truncf %60 : vector<192x128xf32> to vector<192x128xbf16>
    %c0_19 = arith.constant 0 : index
    %c0_20 = arith.constant 0 : index
    %62 = vector.load %arg6[%c0_19, %c0_20] : memref<192x128xbf16, #tpu.memory_space<vmem>>, vector<192x128xbf16>
    tpu.vector_store %arg6[%c0_19, %c0_20], %61 {strides = array<i32>} : memref<192x128xbf16, #tpu.memory_space<vmem>>, vector<192x128xbf16>,
    return
  }
}

module attributes {stable_mosaic.version = 11 : i64} {
  func.func @kernel(%arg0: i32, %arg1: memref<1x344x48xbf16, #tpu.memory_space<vmem>>, %arg2: memref<144x128xbf16, #tpu.memory_space<vmem>>, %arg3: memref<1x128xf32, #tpu.memory_space<vmem>>, %arg4: memref<1x288x128xbf16, #tpu.memory_space<vmem>>) attributes {dimension_semantics = [#tpu.dimension_semantics<parallel>], iteration_bounds = array<i64: 2>, scalar_prefetch = 0 : i64, scratch_operands = 0 : i64, tpu.core_type = #tpu.core_type<tc>, window_params = [{transform_indices = @transform_0, window_bounds = array<i64: 1, 344, 48>}, {pipeline_mode = #tpu.pipeline_mode<synchronous>, transform_indices = @transform_1, window_bounds = array<i64: 144, 128>}, {pipeline_mode = #tpu.pipeline_mode<synchronous>, transform_indices = @transform_2, window_bounds = array<i64: 1, 128>}, {transform_indices = @transform_3, window_bounds = array<i64: 1, 288, 128>}]} {
    %c0 = arith.constant 0 : index
    %c0_0 = arith.constant 0 : index
    %c0_1 = arith.constant 0 : index
    %0 = vector.load %arg1[%c0, %c0_0, %c0_1] : memref<1x344x48xbf16, #tpu.memory_space<vmem>>, vector<1x344x48xbf16>
    %1 = vector.shape_cast %0 : vector<1x344x48xbf16> to vector<344x48xbf16>
    %2 = vector.extract_strided_slice %1 {offsets = [0, 0], sizes = [288, 48], strides = [1, 1]} : vector<344x48xbf16> to vector<288x48xbf16>
    %3 = vector.extract_strided_slice %1 {offsets = [18, 0], sizes = [288, 48], strides = [1, 1]} : vector<344x48xbf16> to vector<288x48xbf16>
    %4 = vector.extract_strided_slice %1 {offsets = [36, 0], sizes = [288, 48], strides = [1, 1]} : vector<344x48xbf16> to vector<288x48xbf16>
    %5 = tpu.concatenate %2, %3, %4 in 1 : vector<288x48xbf16>, vector<288x48xbf16>, vector<288x48xbf16> -> vector<288x144xbf16>
    %c0_2 = arith.constant 0 : index
    %c0_3 = arith.constant 0 : index
    %6 = vector.load %arg2[%c0_2, %c0_3] : memref<144x128xbf16, #tpu.memory_space<vmem>>, vector<144x128xbf16>
    %cst = arith.constant dense<0.000000e+00> : vector<288x128xf32>
    %7 = tpu.matmul %5, %6, %cst {dimension_numbers = #tpu.dot_dimension_numbers<[1], [0], [0], [1], [0, 0, 1, 1], [], []>} : vector<288x144xbf16>, vector<144x128xbf16>, vector<288x128xf32> -> vector<288x128xf32>
    %c0_4 = arith.constant 0 : index
    %c0_5 = arith.constant 0 : index
    %8 = vector.load %arg3[%c0_4, %c0_5] : memref<1x128xf32, #tpu.memory_space<vmem>>, vector<1x128xf32>
    %9 = vector.broadcast %8 : vector<1x128xf32> to vector<288x128xf32>
    %10 = arith.addf %7, %9 : vector<288x128xf32>
    %11 = math.tanh %10 : vector<288x128xf32>
    %12 = arith.truncf %11 : vector<288x128xf32> to vector<288x128xbf16>
    %c0_6 = arith.constant 0 : index
    %c0_7 = arith.constant 0 : index
    %c0_8 = arith.constant 0 : index
    %13 = vector.load %arg4[%c0_6, %c0_7, %c0_8] : memref<1x288x128xbf16, #tpu.memory_space<vmem>>, vector<1x288x128xbf16>
    %14 = vector.shape_cast %13 : vector<1x288x128xbf16> to vector<288x128xbf16>
    %15 = vector.shape_cast %12 : vector<288x128xbf16> to vector<1x288x128xbf16>
    tpu.vector_store %arg4[%c0_6, %c0_7, %c0_8], %15 {strides = array<i32>} : memref<1x288x128xbf16, #tpu.memory_space<vmem>>, vector<1x288x128xbf16>,
    return
  }
  func.func @transform_0(%arg0: i32) -> (i32, i32, i32) {
    %c0_i32 = arith.constant 0 : i32
    %c0_i32_0 = arith.constant 0 : i32
    %c0_i32_1 = arith.constant 0 : i32
    return %arg0, %c0_i32, %c0_i32_0 : i32, i32, i32
  }
  func.func @transform_1(%arg0: i32) -> (i32, i32) {
    %c0_i32 = arith.constant 0 : i32
    %c0_i32_0 = arith.constant 0 : i32
    %c0_i32_1 = arith.constant 0 : i32
    return %c0_i32, %c0_i32_0 : i32, i32
  }
  func.func @transform_2(%arg0: i32) -> (i32, i32) {
    %c0_i32 = arith.constant 0 : i32
    %c0_i32_0 = arith.constant 0 : i32
    %c0_i32_1 = arith.constant 0 : i32
    return %c0_i32, %c0_i32_0 : i32, i32
  }
  func.func @transform_3(%arg0: i32) -> (i32, i32, i32) {
    %c0_i32 = arith.constant 0 : i32
    %c0_i32_0 = arith.constant 0 : i32
    %c0_i32_1 = arith.constant 0 : i32
    return %arg0, %c0_i32, %c0_i32_0 : i32, i32, i32
  }
}

</mosaic_0001>

<llo_original>
// kernel: _lambda_.4
$region0: #{_lambda_.4}
  #allocation0 [shape = 'u32[]', space=smem, size = 0x4, offset = 0x4, fixed_abs, tag = 'smem constant byte address 0x4 - core index']
  #allocation1 [shape = 'u32[144,128]{1,0:T(1,128)}', space=vmem, size = 0x12000, scoped, tag = 'internal scratch']
  %s0 = inlined_call_operand.vmem [shape: bf16[2,32], index: 0, kind: input, shape index: {}]
  %s1 = inlined_call_operand.hbm [shape: bf16[32,1024], index: 1, kind: input, shape index: {}]
  %s2 = inlined_call_operand.vmem [shape: f32[1,1024], index: 2, kind: input, shape index: {}]
  %s3 = inlined_call_operand.vmem [shape: f32[1,64], index: 3, kind: input, shape index: {}]
  %s4 = inlined_call_operand.vmem [shape: f32[1,64], index: 4, kind: input, shape index: {}]
  %s5 = inlined_call_operand.vmem [shape: bf16[2,1024], index: 5, kind: output, shape index: {}]
  %s6 = sld [smem:[#allocation0]]
  $region34: #{_lambda_.4} parent=0
    _
  %s8 = ssub.s32 1, %s6
  %s9 = scalar_select 0, %s8, %s6
  $region1: #{_lambda_.4} parent=0
    #allocation2 [shape = 'u8[65536]{0}', space=vmem, size = 0x10000, scoped, tag = 'input window, operand 1, single buffered']
    #allocation3 [shape = 's32[1]{0}', space=sflag, size = 0x4, scoped, tag = 'scoped memory for _lambda_.4']
    %10 = vsyncpa [#allocation3], 0
    // Predicated region
    $region2: #{_lambda_.4} parent=1 // pred_check
      _
    $region3: #{_lambda_.4} parent=1 // pred_check_branch
      %12 = sbr.rel (0) target = $region5
    $region4: #{_lambda_.4} parent=1 // pred_region
      _
    $region5: #{_lambda_.4} parent=1 // pred_fallthru
      _
    // Predicated region
    $region6: #{_lambda_.4} parent=1 // pred_check
      _
    $region7: #{_lambda_.4} parent=1 // pred_check_branch
      %14 = sbr.rel (0) target = $region9
    $region8: #{_lambda_.4} parent=1 // pred_region
      %s16 = ssub.s32 2048, 2048
      %17 = vsyncadd [#allocation3], %s16
      %s18 = sshll.u32 [#allocation2], 4
      %s19 = int_to_ptr.vmem [resolvable:$true] %s18
      %24 = dma.hbm_to_vmem [thread:$0]  %s1, 2048, %s19, [#allocation3], 512, 512, 32
    $region9: #{_lambda_.4} parent=1 // pred_fallthru
      _
    // Predicated region
    $region10: #{_lambda_.4} parent=1 // pred_check
      _
    $region11: #{_lambda_.4} parent=1 // pred_check_branch
      %26 = sbr.rel (0) target = $region13
    $region12: #{_lambda_.4} parent=1 // pred_region
      _
    $region13: #{_lambda_.4} parent=1 // pred_fallthru
      _
    // Predicated region
    $region14: #{_lambda_.4} parent=1 // pred_check
      _
    $region15: #{_lambda_.4} parent=1 // pred_check_branch
      %28 = sbr.rel (0) target = $region17
    $region16: #{_lambda_.4} parent=1 // pred_region
      _
    $region17: #{_lambda_.4} parent=1 // pred_fallthru
      _
    // Predicated region
    $region18: #{_lambda_.4} parent=1 // pred_check
      _
    $region19: #{_lambda_.4} parent=1 // pred_check_branch
      %30 = sbr.rel (0) target = $region21
    $region20: #{_lambda_.4} parent=1 // pred_region
      _
    $region21: #{_lambda_.4} parent=1 // pred_fallthru
      _
    // Predicated region
    $region22: #{_lambda_.4} parent=1 // pred_check
      _
    $region23: #{_lambda_.4} parent=1 // pred_check_branch
      %32 = sbr.rel (0) target = $region25
    $region24: #{_lambda_.4} parent=1 // pred_region
      %33 = dma.done [#allocation3], 2048
    $region25: #{_lambda_.4} parent=1 // pred_fallthru
      _
    %v35 = vld [vmem:[%s0] sm:$0x1]
    %v36 = vld [vmem:[#allocation2] sm:$0xff]
    %v37 = vld [vmem:[#allocation2 + $0x8] sm:$0xff]
    %v38 = vld [vmem:[#allocation2 + $0x10] sm:$0xff]
    %v39 = vld [vmem:[#allocation2 + $0x18] sm:$0xff]
    %v40 = vld [vmem:[#allocation2 + $0x20] sm:$0xff]
    %v41 = vld [vmem:[#allocation2 + $0x28] sm:$0xff]
    %v42 = vld [vmem:[#allocation2 + $0x30] sm:$0xff]
    %v43 = vld [vmem:[#allocation2 + $0x38] sm:$0xff]
    %v44 = vld [vmem:[#allocation2 + $0x40] sm:$0xff]
    %v45 = vld [vmem:[#allocation2 + $0x48] sm:$0xff]
    %v46 = vld [vmem:[#allocation2 + $0x50] sm:$0xff]
    %v47 = vld [vmem:[#allocation2 + $0x58] sm:$0xff]
    %v48 = vld [vmem:[#allocation2 + $0x60] sm:$0xff]
    %v49 = vld [vmem:[#allocation2 + $0x68] sm:$0xff]
    %v50 = vld [vmem:[#allocation2 + $0x70] sm:$0xff]
    %v51 = vld [vmem:[#allocation2 + $0x78] sm:$0xff]
    %v52 = vld [vmem:[%s2] sm:$0xff]
    %v54 = vlaneseq
    %v55 = vshrl.u32 %v54, 7
    %v56 = vsub.s32 0, %v55
    %v57 = vrot.slane %v52, %v56
    %v58 = vlaneseq
    %v59 = vshrl.u32 %v58, 7
    %v60 = vsub.s32 1, %v59
    %v61 = vrot.slane %v52, %v60
    %v62 = vlaneseq
    %v63 = vshrl.u32 %v62, 7
    %v64 = vsub.s32 2, %v63
    %v65 = vrot.slane %v52, %v64
    %v66 = vlaneseq
    %v67 = vshrl.u32 %v66, 7
    %v68 = vsub.s32 3, %v67
    %v69 = vrot.slane %v52, %v68
    %v70 = vlaneseq
    %v71 = vshrl.u32 %v70, 7
    %v72 = vsub.s32 4, %v71
    %v73 = vrot.slane %v52, %v72
    %v74 = vlaneseq
    %v75 = vshrl.u32 %v74, 7
    %v76 = vsub.s32 5, %v75
    %v77 = vrot.slane %v52, %v76
    %v78 = vlaneseq
    %v79 = vshrl.u32 %v78, 7
    %v80 = vsub.s32 6, %v79
    %v81 = vrot.slane %v52, %v80
    %v82 = vlaneseq
    %v83 = vshrl.u32 %v82, 7
    %v84 = vsub.s32 7, %v83
    %v85 = vrot.slane %v52, %v84
    %v110 = vunpack.c.l.b16 %v36
    %v111 = vunpack.c.h.b16 %v36
    %v112 = vunpack.c.l.b16 %v37
    %v113 = vunpack.c.h.b16 %v37
    %v114 = vunpack.c.l.b16 %v38
    %v115 = vunpack.c.h.b16 %v38
    %v116 = vunpack.c.l.b16 %v39
    %v117 = vunpack.c.h.b16 %v39
    %v118 = vunpack.c.l.b16 %v40
    %v119 = vunpack.c.h.b16 %v40
    %v120 = vunpack.c.l.b16 %v41
    %v121 = vunpack.c.h.b16 %v41
    %v122 = vunpack.c.l.b16 %v42
    %v123 = vunpack.c.h.b16 %v42
    %v124 = vunpack.c.l.b16 %v43
    %v125 = vunpack.c.h.b16 %v43
    %v126 = vunpack.c.l.b16 %v44
    %v127 = vunpack.c.h.b16 %v44
    %v128 = vunpack.c.l.b16 %v45
    %v129 = vunpack.c.h.b16 %v45
    %v130 = vunpack.c.l.b16 %v46
    %v131 = vunpack.c.h.b16 %v46
    %v132 = vunpack.c.l.b16 %v47
    %v133 = vunpack.c.h.b16 %v47
    %v134 = vunpack.c.l.b16 %v48
    %v135 = vunpack.c.h.b16 %v48
    %v136 = vunpack.c.l.b16 %v49
    %v137 = vunpack.c.h.b16 %v49
    %v138 = vunpack.c.l.b16 %v50
    %v139 = vunpack.c.h.b16 %v50
    %v140 = vunpack.c.l.b16 %v51
    %v141 = vunpack.c.h.b16 %v51
    %v142 = vpack.c.b16 %v118, %v110
    %v143 = vpack.c.b16 %v119, %v111
    %v144 = vpack.c.b16 %v120, %v112
    %v145 = vpack.c.b16 %v121, %v113
    %v146 = vpack.c.b16 %v122, %v114
    %v147 = vpack.c.b16 %v123, %v115
    %v148 = vpack.c.b16 %v124, %v116
    %v149 = vpack.c.b16 %v125, %v117
    %v150 = vpack.c.b16 %v134, %v126
    %v151 = vpack.c.b16 %v135, %v127
    %v152 = vpack.c.b16 %v136, %v128
    %v153 = vpack.c.b16 %v137, %v129
    %v154 = vpack.c.b16 %v138, %v130
    %v155 = vpack.c.b16 %v139, %v131
    %v156 = vpack.c.b16 %v140, %v132
    %v157 = vpack.c.b16 %v141, %v133
    %vm174 = vcmask 261120
    %v176 = vsel %vm174, %v35, 0
    %178 = vmatprep.subr.bf16.mxu0 0
    %179 = vmatpush1.bf16.msra.mxu0 0
    %180 = vmatprep.subr.bf16.mxu0 0
    %181 = vmatpush1.bf16.msra.mxu0 0
    %182 = vmatprep.subr.bf16.mxu0 0
    %183 = vmatpush1.bf16.msra.mxu0 0
    %184 = vmatprep.subr.bf16.mxu0 0
    %185 = vmatpush1.bf16.msra.mxu0 0
    %186 = vmatprep.subr.bf16.mxu0 0
    %187 = vmatpush1.bf16.msra.mxu0 0
    %188 = vmatprep.subr.bf16.mxu0 0
    %189 = vmatpush1.bf16.msra.mxu0 0
    %190 = vmatprep.subr.bf16.mxu0 %v151
    %191 = vmatpush1.bf16.msra.mxu0 %v150
    %192 = vmatprep.subr.bf16.mxu0 %v143
    %193 = vmatpush1.bf16.msra.mxu0 %v142
    %194 = vmatprep.subr.bf16.mxu0 0
    %195 = vmatpush2.bf16.msra.mxu0 0
    %196 = vmatprep.subr.bf16.mxu0 0
    %197 = vmatpush2.bf16.msra.mxu0 0
    %198 = vmatprep.subr.bf16.mxu0 0
    %199 = vmatpush2.bf16.msra.mxu0 0
    %200 = vmatprep.subr.bf16.mxu0 0
    %201 = vmatpush2.bf16.msra.mxu0 0
    %202 = vmatprep.subr.bf16.mxu0 0
    %203 = vmatpush2.bf16.msra.mxu0 0
    %204 = vmatprep.subr.bf16.mxu0 0
    %205 = vmatpush2.bf16.msra.mxu0 0
    %206 = vmatprep.subr.bf16.mxu0 0
    %207 = vmatpush2.bf16.msra.mxu0 0
    %208 = vmatprep.subr.bf16.mxu0 0
    %209 = vmatpush2.bf16.msra.mxu0 0
    %210 = vmatprep.mubr.bf16.mxu0 0
    %211 = vmatmul.mubr.bf16.gmra.mxu0 %v176
    %v212 = vpop.f32.mrf.mxu0
    %v213 = vadd.f32 %v57, %v212
    %v214 = vpop.f32.mrf.mxu0
    %v215 = vadd.f32 %v61, %v214
    %v216 = vpop.f32.mrf.mxu0
    %v217 = vpop.f32.mrf.mxu0
    %218 = vdwg.mxu0
    %219 = vmatprep.subr.bf16.mxu0 0
    %220 = vmatpush1.bf16.msra.mxu0 0
    %221 = vmatprep.subr.bf16.mxu0 0
    %222 = vmatpush1.bf16.msra.mxu0 0
    %223 = vmatprep.subr.bf16.mxu0 0
    %224 = vmatpush1.bf16.msra.mxu0 0
    %225 = vmatprep.subr.bf16.mxu0 0
    %226 = vmatpush1.bf16.msra.mxu0 0
    %227 = vmatprep.subr.bf16.mxu0 0
    %228 = vmatpush1.bf16.msra.mxu0 0
    %229 = vmatprep.subr.bf16.mxu0 0
    %230 = vmatpush1.bf16.msra.mxu0 0
    %231 = vmatprep.subr.bf16.mxu0 %v153
    %232 = vmatpush1.bf16.msra.mxu0 %v152
    %233 = vmatprep.subr.bf16.mxu0 %v145
    %234 = vmatpush1.bf16.msra.mxu0 %v144
    %235 = vmatprep.subr.bf16.mxu0 0
    %236 = vmatpush2.bf16.msra.mxu0 0
    %237 = vmatprep.subr.bf16.mxu0 0
    %238 = vmatpush2.bf16.msra.mxu0 0
    %239 = vmatprep.subr.bf16.mxu0 0
    %240 = vmatpush2.bf16.msra.mxu0 0
    %241 = vmatprep.subr.bf16.mxu0 0
    %242 = vmatpush2.bf16.msra.mxu0 0
    %243 = vmatprep.subr.bf16.mxu0 0
    %244 = vmatpush2.bf16.msra.mxu0 0
    %245 = vmatprep.subr.bf16.mxu0 0
    %246 = vmatpush2.bf16.msra.mxu0 0
    %247 = vmatprep.subr.bf16.mxu0 0
    %248 = vmatpush2.bf16.msra.mxu0 0
    %249 = vmatprep.subr.bf16.mxu0 0
    %250 = vmatpush2.bf16.msra.mxu0 0
    %251 = vmatprep.mubr.bf16.mxu0 0
    %252 = vmatmul.mubr.bf16.gmra.mxu0 %v176
    %v253 = vpop.f32.mrf.mxu0
    %v254 = vadd.f32 %v65, %v253
    %v255 = vpop.f32.mrf.mxu0
    %v256 = vadd.f32 %v69, %v255
    %v257 = vpop.f32.mrf.mxu0
    %v258 = vpop.f32.mrf.mxu0
    %259 = vdwg.mxu0
    %260 = vmatprep.subr.bf16.mxu0 0
    %261 = vmatpush1.bf16.msra.mxu0 0
    %262 = vmatprep.subr.bf16.mxu0 0
    %263 = vmatpush1.bf16.msra.mxu0 0
    %264 = vmatprep.subr.bf16.mxu0 0
    %265 = vmatpush1.bf16.msra.mxu0 0
    %266 = vmatprep.subr.bf16.mxu0 0
    %267 = vmatpush1.bf16.msra.mxu0 0
    %268 = vmatprep.subr.bf16.mxu0 0
    %269 = vmatpush1.bf16.msra.mxu0 0
    %270 = vmatprep.subr.bf16.mxu0 0
    %271 = vmatpush1.bf16.msra.mxu0 0
    %272 = vmatprep.subr.bf16.mxu0 %v155
    %273 = vmatpush1.bf16.msra.mxu0 %v154
    %274 = vmatprep.subr.bf16.mxu0 %v147
    %275 = vmatpush1.bf16.msra.mxu0 %v146
    %276 = vmatprep.subr.bf16.mxu0 0
    %277 = vmatpush2.bf16.msra.mxu0 0
    %278 = vmatprep.subr.bf16.mxu0 0
    %279 = vmatpush2.bf16.msra.mxu0 0
    %280 = vmatprep.subr.bf16.mxu0 0
    %281 = vmatpush2.bf16.msra.mxu0 0
    %282 = vmatprep.subr.bf16.mxu0 0
    %283 = vmatpush2.bf16.msra.mxu0 0
    %284 = vmatprep.subr.bf16.mxu0 0
    %285 = vmatpush2.bf16.msra.mxu0 0
    %286 = vmatprep.subr.bf16.mxu0 0
    %287 = vmatpush2.bf16.msra.mxu0 0
    %288 = vmatprep.subr.bf16.mxu0 0
    %289 = vmatpush2.bf16.msra.mxu0 0
    %290 = vmatprep.subr.bf16.mxu0 0
    %291 = vmatpush2.bf16.msra.mxu0 0
    %292 = vmatprep.mubr.bf16.mxu0 0
    %293 = vmatmul.mubr.bf16.gmra.mxu0 %v176
    %v294 = vpop.f32.mrf.mxu0
    %v295 = vadd.f32 %v73, %v294
    %v296 = vpop.f32.mrf.mxu0
    %v297 = vadd.f32 %v77, %v296
    %v298 = vpop.f32.mrf.mxu0
    %v299 = vpop.f32.mrf.mxu0
    %300 = vdwg.mxu0
    %301 = vmatprep.subr.bf16.mxu0 0
    %302 = vmatpush1.bf16.msra.mxu0 0
    %303 = vmatprep.subr.bf16.mxu0 0
    %304 = vmatpush1.bf16.msra.mxu0 0
    %305 = vmatprep.subr.bf16.mxu0 0
    %306 = vmatpush1.bf16.msra.mxu0 0
    %307 = vmatprep.subr.bf16.mxu0 0
    %308 = vmatpush1.bf16.msra.mxu0 0
    %309 = vmatprep.subr.bf16.mxu0 0
    %310 = vmatpush1.bf16.msra.mxu0 0
    %311 = vmatprep.subr.bf16.mxu0 0
    %312 = vmatpush1.bf16.msra.mxu0 0
    %313 = vmatprep.subr.bf16.mxu0 %v157
    %314 = vmatpush1.bf16.msra.mxu0 %v156
    %315 = vmatprep.subr.bf16.mxu0 %v149
    %316 = vmatpush1.bf16.msra.mxu0 %v148
    %317 = vmatprep.subr.bf16.mxu0 0
    %318 = vmatpush2.bf16.msra.mxu0 0
    %319 = vmatprep.subr.bf16.mxu0 0
    %320 = vmatpush2.bf16.msra.mxu0 0
    %321 = vmatprep.subr.bf16.mxu0 0
    %322 = vmatpush2.bf16.msra.mxu0 0
    %323 = vmatprep.subr.bf16.mxu0 0
    %324 = vmatpush2.bf16.msra.mxu0 0
    %325 = vmatprep.subr.bf16.mxu0 0
    %326 = vmatpush2.bf16.msra.mxu0 0
    %327 = vmatprep.subr.bf16.mxu0 0
    %328 = vmatpush2.bf16.msra.mxu0 0
    %329 = vmatprep.subr.bf16.mxu0 0
    %330 = vmatpush2.bf16.msra.mxu0 0
    %331 = vmatprep.subr.bf16.mxu0 0
    %332 = vmatpush2.bf16.msra.mxu0 0
    %333 = vmatprep.mubr.bf16.mxu0 0
    %334 = vmatmul.mubr.bf16.gmra.mxu0 %v176
    %v335 = vpop.f32.mrf.mxu0
    %v336 = vadd.f32 %v81, %v335
    %v337 = vpop.f32.mrf.mxu0
    %v338 = vadd.f32 %v85, %v337
    %v339 = vpop.f32.mrf.mxu0
    %v340 = vpop.f32.mrf.mxu0
    %341 = vdwg.mxu0
    %vm342 = vcmask 1041408
    %v343 = vsel %vm342, %v213, 0.0
    %v344 = vrot.slane %v343, 4
    %v345 = vadd.f32 %v343, %v344
    %v346 = vrot.slane %v345, 2
    %v347 = vadd.f32 %v345, %v346
    %v348 = vrot.slane %v347, 1
    %v349 = vadd.f32 %v347, %v348
    %v350 = vsel %vm342, %v215, 0.0
    %v351 = vrot.slane %v350, 4
    %v352 = vadd.f32 %v350, %v351
    %v353 = vrot.slane %v352, 2
    %v354 = vadd.f32 %v352, %v353
    %v355 = vrot.slane %v354, 1
    %v356 = vadd.f32 %v354, %v355
    %v357 = vsel %vm342, %v254, 0.0
    %v358 = vrot.slane %v357, 4
    %v359 = vadd.f32 %v357, %v358
    %v360 = vrot.slane %v359, 2
    %v361 = vadd.f32 %v359, %v360
    %v362 = vrot.slane %v361, 1
    %v363 = vadd.f32 %v361, %v362
    %v364 = vsel %vm342, %v256, 0.0
    %v365 = vrot.slane %v364, 4
    %v366 = vadd.f32 %v364, %v365
    %v367 = vrot.slane %v366, 2
    %v368 = vadd.f32 %v366, %v367
    %v369 = vrot.slane %v368, 1
    %v370 = vadd.f32 %v368, %v369
    %v371 = vsel %vm342, %v295, 0.0
    %v372 = vrot.slane %v371, 4
    %v373 = vadd.f32 %v371, %v372
    %v374 = vrot.slane %v373, 2
    %v375 = vadd.f32 %v373, %v374
    %v376 = vrot.slane %v375, 1
    %v377 = vadd.f32 %v375, %v376
    %v378 = vsel %vm342, %v297, 0.0
    %v379 = vrot.slane %v378, 4
    %v380 = vadd.f32 %v378, %v379
    %v381 = vrot.slane %v380, 2
    %v382 = vadd.f32 %v380, %v381
    %v383 = vrot.slane %v382, 1
    %v384 = vadd.f32 %v382, %v383
    %v385 = vsel %vm342, %v336, 0.0
    %v386 = vrot.slane %v385, 4
    %v387 = vadd.f32 %v385, %v386
    %v388 = vrot.slane %v387, 2
    %v389 = vadd.f32 %v387, %v388
    %v390 = vrot.slane %v389, 1
    %v391 = vadd.f32 %v389, %v390
    %v392 = vsel %vm342, %v338, 0.0
    %v393 = vrot.slane %v392, 4
    %v394 = vadd.f32 %v392, %v393
    %v395 = vrot.slane %v394, 2
    %v396 = vadd.f32 %v394, %v395
    %v397 = vrot.slane %v396, 1
    %v398 = vadd.f32 %v396, %v397
    %v399 = vadd.f32 %v349, 0.0
    %401 = vrot.lane.b32.xlu0 %v349, 64
    %v402 = vpop.permute.xlu0 %401
    %v404 = vadd.f32 %v399, %v402
    %v405 = vadd.f32 %v404, %v356
    %407 = vrot.lane.b32.xlu0 %v356, 64
    %v408 = vpop.permute.xlu0 %407
    %v410 = vadd.f32 %v405, %v408
    %v411 = vadd.f32 %v410, %v363
    %413 = vrot.lane.b32.xlu0 %v363, 64
    %v414 = vpop.permute.xlu0 %413
    %v416 = vadd.f32 %v411, %v414
    %v417 = vadd.f32 %v416, %v370
    %419 = vrot.lane.b32.xlu0 %v370, 64
    %v420 = vpop.permute.xlu0 %419
    %v422 = vadd.f32 %v417, %v420
    %v423 = vadd.f32 %v422, %v377
    %425 = vrot.lane.b32.xlu0 %v377, 64
    %v426 = vpop.permute.xlu0 %425
    %v428 = vadd.f32 %v423, %v426
    %v429 = vadd.f32 %v428, %v384
    %431 = vrot.lane.b32.xlu0 %v384, 64
    %v432 = vpop.permute.xlu0 %431
    %v434 = vadd.f32 %v429, %v432
    %v435 = vadd.f32 %v434, %v391
    %437 = vrot.lane.b32.xlu0 %v391, 64
    %v438 = vpop.permute.xlu0 %437
    %v440 = vadd.f32 %v435, %v438
    %v441 = vadd.f32 %v440, %v398
    %443 = vrot.lane.b32.xlu0 %v398, 64
    %v444 = vpop.permute.xlu0 %443
    %v446 = vadd.f32 %v441, %v444
    %v447 = vmul.f32 %v446, 0.03125
    %449 = vrot.lane.b32.xlu0 %v447, 64
    %v450 = vpop.permute.xlu0 %449
    %vm452 = vcmask 523264
    %v453 = vsel %vm452, %v447, %v450
    %v454 = vlaneseq
    %v455 = vshrl.u32 %v454, 7
    %v456 = vsub.s32 0, %v455
    %v457 = vrot.slane %v453, %v456
    %v458 = vsub.f32 %v213, %v457
    %v459 = vsub.f32 %v215, %v457
    %v460 = vsub.f32 %v254, %v457
    %v461 = vsub.f32 %v256, %v457
    %v462 = vsub.f32 %v295, %v457
    %v463 = vsub.f32 %v297, %v457
    %v464 = vsub.f32 %v336, %v457
    %v465 = vsub.f32 %v338, %v457
    %v466 = vmul.f32 %v458, %v458
    %v467 = vmul.f32 %v459, %v459
    %v468 = vmul.f32 %v460, %v460
    %v469 = vmul.f32 %v461, %v461
    %v470 = vmul.f32 %v462, %v462
    %v471 = vmul.f32 %v463, %v463
    %v472 = vmul.f32 %v464, %v464
    %v473 = vmul.f32 %v465, %v465
    %v474 = vsel %vm342, %v466, 0.0
    %v475 = vrot.slane %v474, 4
    %v476 = vadd.f32 %v474, %v475
    %v477 = vrot.slane %v476, 2
    %v478 = vadd.f32 %v476, %v477
    %v479 = vrot.slane %v478, 1
    %v480 = vadd.f32 %v478, %v479
    %v481 = vsel %vm342, %v467, 0.0
    %v482 = vrot.slane %v481, 4
    %v483 = vadd.f32 %v481, %v482
    %v484 = vrot.slane %v483, 2
    %v485 = vadd.f32 %v483, %v484
    %v486 = vrot.slane %v485, 1
    %v487 = vadd.f32 %v485, %v486
    %v488 = vsel %vm342, %v468, 0.0
    %v489 = vrot.slane %v488, 4
    %v490 = vadd.f32 %v488, %v489
    %v491 = vrot.slane %v490, 2
    %v492 = vadd.f32 %v490, %v491
    %v493 = vrot.slane %v492, 1
    %v494 = vadd.f32 %v492, %v493
    %v495 = vsel %vm342, %v469, 0.0
    %v496 = vrot.slane %v495, 4
    %v497 = vadd.f32 %v495, %v496
    %v498 = vrot.slane %v497, 2
    %v499 = vadd.f32 %v497, %v498
    %v500 = vrot.slane %v499, 1
    %v501 = vadd.f32 %v499, %v500
    %v502 = vsel %vm342, %v470, 0.0
    %v503 = vrot.slane %v502, 4
    %v504 = vadd.f32 %v502, %v503
    %v505 = vrot.slane %v504, 2
    %v506 = vadd.f32 %v504, %v505
    %v507 = vrot.slane %v506, 1
    %v508 = vadd.f32 %v506, %v507
    %v509 = vsel %vm342, %v471, 0.0
    %v510 = vrot.slane %v509, 4
    %v511 = vadd.f32 %v509, %v510
    %v512 = vrot.slane %v511, 2
    %v513 = vadd.f32 %v511, %v512
    %v514 = vrot.slane %v513, 1
    %v515 = vadd.f32 %v513, %v514
    %v516 = vsel %vm342, %v472, 0.0
    %v517 = vrot.slane %v516, 4
    %v518 = vadd.f32 %v516, %v517
    %v519 = vrot.slane %v518, 2
    %v520 = vadd.f32 %v518, %v519
    %v521 = vrot.slane %v520, 1
    %v522 = vadd.f32 %v520, %v521
    %v523 = vsel %vm342, %v473, 0.0
    %v524 = vrot.slane %v523, 4
    %v525 = vadd.f32 %v523, %v524
    %v526 = vrot.slane %v525, 2
    %v527 = vadd.f32 %v525, %v526
    %v528 = vrot.slane %v527, 1
    %v529 = vadd.f32 %v527, %v528
    %v530 = vadd.f32 %v480, 0.0
    %532 = vrot.lane.b32.xlu0 %v480, 64
    %v533 = vpop.permute.xlu0 %532
    %v535 = vadd.f32 %v530, %v533
    %v536 = vadd.f32 %v535, %v487
    %538 = vrot.lane.b32.xlu0 %v487, 64
    %v539 = vpop.permute.xlu0 %538
    %v541 = vadd.f32 %v536, %v539
    %v542 = vadd.f32 %v541, %v494
    %544 = vrot.lane.b32.xlu0 %v494, 64
    %v545 = vpop.permute.xlu0 %544
    %v547 = vadd.f32 %v542, %v545
    %v548 = vadd.f32 %v547, %v501
    %550 = vrot.lane.b32.xlu0 %v501, 64
    %v551 = vpop.permute.xlu0 %550
    %v553 = vadd.f32 %v548, %v551
    %v554 = vadd.f32 %v553, %v508
    %556 = vrot.lane.b32.xlu0 %v508, 64
    %v557 = vpop.permute.xlu0 %556
    %v559 = vadd.f32 %v554, %v557
    %v560 = vadd.f32 %v559, %v515
    %562 = vrot.lane.b32.xlu0 %v515, 64
    %v563 = vpop.permute.xlu0 %562
    %v565 = vadd.f32 %v560, %v563
    %v566 = vadd.f32 %v565, %v522
    %568 = vrot.lane.b32.xlu0 %v522, 64
    %v569 = vpop.permute.xlu0 %568
    %v571 = vadd.f32 %v566, %v569
    %v572 = vadd.f32 %v571, %v529
    %574 = vrot.lane.b32.xlu0 %v529, 64
    %v575 = vpop.permute.xlu0 %574
    %v577 = vadd.f32 %v572, %v575
    %v578 = vmul.f32 %v577, 0.03125
    %v579 = vld [vmem:[%s3] sm:$0x1]
    %v580 = vadd.f32 %v578, 1e-05
    %v581 = vrsqrt.pop %v580
    %v582 = vmul.f32 %v579, %v581
    %v583 = vld [vmem:[%s4] sm:$0x1]
    %v584 = vmul.f32 %v447, %v582
    %v585 = vsub.f32 %v583, %v584
    %v587 = vlaneseq
    %v588 = vshrl.u32 %v587, 7
    %v589 = vsub.s32 0, %v588
    %v590 = vrot.slane %v582, %v589
    %591 = vrot.lane.b32.xlu0 %v590, 64
    %v592 = vpop.permute.xlu0 %591
    %v594 = vsel %vm452, %v582, %v592
    %v595 = vlaneseq
    %v596 = vshrl.u32 %v595, 7
    %v597 = vsub.s32 0, %v596
    %v598 = vrot.slane %v594, %v597
    %v599 = vmul.f32 %v213, %v598
    %v600 = vmul.f32 %v215, %v598
    %v601 = vmul.f32 %v254, %v598
    %v602 = vmul.f32 %v256, %v598
    %v603 = vmul.f32 %v295, %v598
    %v604 = vmul.f32 %v297, %v598
    %v605 = vmul.f32 %v336, %v598
    %v606 = vmul.f32 %v338, %v598
    %v608 = vlaneseq
    %v609 = vshrl.u32 %v608, 7
    %v610 = vsub.s32 0, %v609
    %v611 = vrot.slane %v585, %v610
    %612 = vrot.lane.b32.xlu0 %v611, 64
    %v613 = vpop.permute.xlu0 %612
    %v615 = vsel %vm452, %v585, %v613
    %v616 = vlaneseq
    %v617 = vshrl.u32 %v616, 7
    %v618 = vsub.s32 0, %v617
    %v619 = vrot.slane %v615, %v618
    %v620 = vadd.f32 %v599, %v619
    %v621 = vadd.f32 %v600, %v619
    %v622 = vadd.f32 %v601, %v619
    %v623 = vadd.f32 %v602, %v619
    %v624 = vadd.f32 %v603, %v619
    %v625 = vadd.f32 %v604, %v619
    %v626 = vadd.f32 %v605, %v619
    %v627 = vadd.f32 %v606, %v619
    %v628 = vmax.f32 %v620, 0.0
    %v629 = vmax.f32 %v621, 0.0
    %v630 = vmax.f32 %v622, 0.0
    %v631 = vmax.f32 %v623, 0.0
    %v632 = vmax.f32 %v624, 0.0
    %v633 = vmax.f32 %v625, 0.0
    %v634 = vmax.f32 %v626, 0.0
    %v635 = vmax.f32 %v627, 0.0
    %v636 = vpack.c.bf16 %v628, %v628
    %v637 = vpack.c.bf16 %v629, %v629
    %v638 = vpack.c.bf16 %v630, %v630
    %v639 = vpack.c.bf16 %v631, %v631
    %v640 = vpack.c.bf16 %v632, %v632
    %v641 = vpack.c.bf16 %v633, %v633
    %v642 = vpack.c.bf16 %v634, %v634
    %v643 = vpack.c.bf16 %v635, %v635
    %v652 = vcombine.low %v636, %v637
    %v653 = vcombine.low %v638, %v639
    %v654 = vcombine.low %v640, %v641
    %v655 = vcombine.low %v642, %v643
    %v657 = vunpack.c.l.s4 1966171168
    %v658 = vunpack.c.0.s8 %v657
    %v659 = vlaneseq
    %v660 = vshrl.u32 %v659, 7
    %v661 = vsub.s32 %v658, %v660
    %v662 = vrot.slane %v652, %v661
    %v664 = vunpack.c.l.s4 1966171168
    %v665 = vunpack.c.0.s8 %v664
    %v666 = vlaneseq
    %v667 = vshrl.u32 %v666, 7
    %v668 = vsub.s32 %v665, %v667
    %v669 = vrot.slane %v653, %v668
    %v671 = vunpack.c.l.s4 1966171168
    %v672 = vunpack.c.0.s8 %v671
    %v673 = vlaneseq
    %v674 = vshrl.u32 %v673, 7
    %v675 = vsub.s32 %v672, %v674
    %v676 = vrot.slane %v654, %v675
    %v678 = vunpack.c.l.s4 1966171168
    %v679 = vunpack.c.0.s8 %v678
    %v680 = vlaneseq
    %v681 = vshrl.u32 %v680, 7
    %v682 = vsub.s32 %v679, %v681
    %v683 = vrot.slane %v655, %v682
    %v684 = vcombine.low %v662, %v669
    %v685 = vcombine.low %v676, %v683
    %v687 = vunpack.c.l.s4 1966171168
    %v688 = vunpack.c.0.s8 %v687
    %v689 = vlaneseq
    %v690 = vshrl.u32 %v689, 7
    %v691 = vsub.s32 %v688, %v690
    %v692 = vrot.slane %v684, %v691
    %v694 = vunpack.c.l.s4 1966171168
    %v695 = vunpack.c.0.s8 %v694
    %v696 = vlaneseq
    %v697 = vshrl.u32 %v696, 7
    %v698 = vsub.s32 %v695, %v697
    %v699 = vrot.slane %v685, %v698
    %v700 = vcombine.low %v692, %v699
    %702 = vst [vmem:[%s5] sm:$0xff] %v700
    // Predicated region
    $region26: #{_lambda_.4} parent=1 // pred_check
      _
    $region27: #{_lambda_.4} parent=1 // pred_check_branch
      %704 = sbr.rel (0) target = $region29
    $region28: #{_lambda_.4} parent=1 // pred_region
      _
    $region29: #{_lambda_.4} parent=1 // pred_fallthru
      _
    // Predicated region
    $region30: #{_lambda_.4} parent=1 // pred_check
      _
    $region31: #{_lambda_.4} parent=1 // pred_check_branch
      %706 = sbr.rel (0) target = $region33
    $region32: #{_lambda_.4} parent=1 // pred_region
      _
    $region33: #{_lambda_.4} parent=1 // pred_fallthru
      _
    %707 = vsyncpa [#allocation3], 1

// kernel: _lambda_.5
$region0: #{_lambda_.5}
  #allocation0 [shape = 'u32[]', space=smem, size = 0x4, offset = 0x4, fixed_abs, tag = 'smem constant byte address 0x4 - core index']
  #allocation1 [shape = 'u32[144,128]{1,0:T(1,128)}', space=vmem, size = 0x12000, scoped, tag = 'internal scratch']
  %s0 = inlined_call_operand.vmem [shape: bf16[88,192], index: 0, kind: input, shape index: {}]
  %s1 = inlined_call_operand.vmem [shape: bf16[576,128], index: 1, kind: input, shape index: {}]
  %s2 = inlined_call_operand.vmem [shape: f32[1,128], index: 2, kind: input, shape index: {}]
  %s3 = inlined_call_operand.vmem [shape: f32[1,32], index: 3, kind: input, shape index: {}]
  %s4 = inlined_call_operand.vmem [shape: f32[1,32], index: 4, kind: input, shape index: {}]
  %s5 = inlined_call_operand.vmem [shape: f32[64,1], index: 5, kind: input, shape index: {}]
  %s6 = inlined_call_operand.vmem [shape: bf16[64,128], index: 6, kind: output, shape index: {}]
  %s7 = sld [smem:[#allocation0]]
  $region34: #{_lambda_.5} parent=0
    _
  %s9 = ssub.s32 1, %s7
  %s10 = scalar_select 0, %s9, %s7
  // Predicated region
  $region2: #{_lambda_.5} parent=0 // pred_check
    _
  $region3: #{_lambda_.5} parent=0 // pred_check_branch
    %12 = sbr.rel (0) target = $region5
  $region4: #{_lambda_.5} parent=0 // pred_region
    _
  $region5: #{_lambda_.5} parent=0 // pred_fallthru
    _
  // Predicated region
  $region6: #{_lambda_.5} parent=0 // pred_check
    _
  $region7: #{_lambda_.5} parent=0 // pred_check_branch
    %14 = sbr.rel (0) target = $region9
  $region8: #{_lambda_.5} parent=0 // pred_region
    _
  $region9: #{_lambda_.5} parent=0 // pred_fallthru
    _
  // Predicated region
  $region10: #{_lambda_.5} parent=0 // pred_check
    _
  $region11: #{_lambda_.5} parent=0 // pred_check_branch
    %16 = sbr.rel (0) target = $region13
  $region12: #{_lambda_.5} parent=0 // pred_region
    _
  $region13: #{_lambda_.5} parent=0 // pred_fallthru
    _
  // Predicated region
  $region14: #{_lambda_.5} parent=0 // pred_check
    _
  $region15: #{_lambda_.5} parent=0 // pred_check_branch
    %18 = sbr.rel (0) target = $region17
  $region16: #{_lambda_.5} parent=0 // pred_region
    _
  $region17: #{_lambda_.5} parent=0 // pred_fallthru
    _
  // Predicated region
  $region18: #{_lambda_.5} parent=0 // pred_check
    _
  $region19: #{_lambda_.5} parent=0 // pred_check_branch
    %20 = sbr.rel (0) target = $region21
  $region20: #{_lambda_.5} parent=0 // pred_region
    _
  $region21: #{_lambda_.5} parent=0 // pred_fallthru
    _
  // Predicated region
  $region22: #{_lambda_.5} parent=0 // pred_check
    _
  $region23: #{_lambda_.5} parent=0 // pred_check_branch
    %22 = sbr.rel (0) target = $region25
  $region24: #{_lambda_.5} parent=0 // pred_region
    _
  $region25: #{_lambda_.5} parent=0 // pred_fallthru
    _
  %v24 = vld [vmem:[%s0] sm:$0xff]
  %v25 = vld [vmem:[%s0 + $0x8] sm:$0xff]
  %v26 = vld [vmem:[%s0 + $0x10] sm:$0xff]
  %v27 = vld [vmem:[%s0 + $0x18] sm:$0xff]
  %v28 = vld [vmem:[%s0 + $0x20] sm:$0xff]
  %v29 = vld [vmem:[%s0 + $0x28] sm:$0xff]
  %v30 = vld [vmem:[%s0 + $0x30] sm:$0xff]
  %v31 = vld [vmem:[%s0 + $0x38] sm:$0xff]
  %v32 = vld [vmem:[%s0 + $0x40] sm:$0xff]
  %v33 = vld [vmem:[%s0 + $0x48] sm:$0xff]
  %v42 = vunpack.c.l.b16 %v24
  %v43 = vunpack.c.h.b16 %v24
  %v44 = vunpack.c.l.b16 %v25
  %v45 = vunpack.c.h.b16 %v25
  %v46 = vunpack.c.l.b16 %v26
  %v47 = vunpack.c.h.b16 %v26
  %v48 = vunpack.c.l.b16 %v27
  %v49 = vunpack.c.h.b16 %v27
  %v50 = vunpack.c.l.b16 %v28
  %v51 = vunpack.c.h.b16 %v28
  %v52 = vunpack.c.l.b16 %v29
  %v53 = vunpack.c.h.b16 %v29
  %v54 = vunpack.c.l.b16 %v30
  %v55 = vunpack.c.h.b16 %v30
  %v56 = vunpack.c.l.b16 %v31
  %v57 = vunpack.c.h.b16 %v31
  %v58 = vpack.c.b16 %v44, %v42
  %v59 = vpack.c.b16 %v45, %v43
  %v60 = vpack.c.b16 %v48, %v46
  %v61 = vpack.c.b16 %v49, %v47
  %v62 = vpack.c.b16 %v52, %v50
  %v63 = vpack.c.b16 %v53, %v51
  %v64 = vpack.c.b16 %v56, %v54
  %v65 = vpack.c.b16 %v57, %v55
  %v71 = vunpack.c.l.b16 %v32
  %v72 = vunpack.c.h.b16 %v32
  %v73 = vpack.c.b16 %v71, %v71
  %v74 = vpack.c.b16 %v72, %v72
  %vm75 = vcmask 1044480
  %v76 = vrot.slane %v58, 3
  %v77 = vrot.slane %v60, 3
  %v78 = vsel %vm75, %v76, %v77
  %v79 = vrot.slane %v59, 3
  %v80 = vrot.slane %v61, 3
  %v81 = vsel %vm75, %v79, %v80
  %v82 = vrot.slane %v62, 3
  %v83 = vsel %vm75, %v77, %v82
  %v84 = vrot.slane %v63, 3
  %v85 = vsel %vm75, %v80, %v84
  %v86 = vrot.slane %v64, 3
  %v87 = vsel %vm75, %v82, %v86
  %v88 = vrot.slane %v65, 3
  %v89 = vsel %vm75, %v84, %v88
  %v90 = vrot.slane %v73, 3
  %v91 = vsel %vm75, %v86, %v90
  %v92 = vrot.slane %v74, 3
  %v93 = vsel %vm75, %v88, %v92
  %94 = vrot.lane.b32.xlu0 %v78, 64
  %v95 = vpop.permute.xlu0 %94
  %96 = vrot.lane.b32.xlu0 %v81, 64
  %v97 = vpop.permute.xlu0 %96
  %98 = vrot.lane.b32.xlu0 %v83, 64
  %v99 = vpop.permute.xlu0 %98
  %100 = vrot.lane.b32.xlu0 %v85, 64
  %v101 = vpop.permute.xlu0 %100
  %102 = vrot.lane.b32.xlu0 %v87, 64
  %v103 = vpop.permute.xlu0 %102
  %104 = vrot.lane.b32.xlu0 %v89, 64
  %v105 = vpop.permute.xlu0 %104
  %106 = vrot.lane.b32.xlu0 %v91, 64
  %v107 = vpop.permute.xlu0 %106
  %108 = vrot.lane.b32.xlu0 %v93, 64
  %v109 = vpop.permute.xlu0 %108
  %vm110 = vcmask 523264
  %v111 = vsel %vm110, %v95, %v97
  %v112 = vsel %vm110, %v99, %v101
  %v113 = vsel %vm110, %v103, %v105
  %v114 = vsel %vm110, %v107, %v109
  %v120 = vunpack.c.l.b16 %v33
  %v121 = vunpack.c.h.b16 %v33
  %v122 = vpack.c.b16 %v46, %v44
  %v123 = vpack.c.b16 %v47, %v45
  %v124 = vpack.c.b16 %v50, %v48
  %v125 = vpack.c.b16 %v51, %v49
  %v126 = vpack.c.b16 %v54, %v52
  %v127 = vpack.c.b16 %v55, %v53
  %v128 = vpack.c.b16 %v71, %v56
  %v129 = vpack.c.b16 %v72, %v57
  %v130 = vpack.c.b16 %v120, %v120
  %v131 = vpack.c.b16 %v121, %v121
  %vm132 = vcmask 1045504
  %v133 = vrot.slane %v122, 2
  %v134 = vrot.slane %v124, 2
  %v135 = vsel %vm132, %v133, %v134
  %v136 = vrot.slane %v123, 2
  %v137 = vrot.slane %v125, 2
  %v138 = vsel %vm132, %v136, %v137
  %v139 = vrot.slane %v126, 2
  %v140 = vsel %vm132, %v134, %v139
  %v141 = vrot.slane %v127, 2
  %v142 = vsel %vm132, %v137, %v141
  %v143 = vrot.slane %v128, 2
  %v144 = vsel %vm132, %v139, %v143
  %v145 = vrot.slane %v129, 2
  %v146 = vsel %vm132, %v141, %v145
  %v147 = vrot.slane %v130, 2
  %v148 = vsel %vm132, %v143, %v147
  %v149 = vrot.slane %v131, 2
  %v150 = vsel %vm132, %v145, %v149
  %vm155 = vcmask 523264
  %v158 = vsel %vm155, %v59, %v95
  %v162 = vsel %vm155, %v61, %v99
  %v166 = vsel %vm155, %v63, %v103
  %v170 = vsel %vm155, %v65, %v107
  %v172 = vld [vmem:[%s1] sm:$0xf]
  %v173 = vld [vmem:[%s1 + $0x4] sm:$0xf]
  %v174 = vld [vmem:[%s1 + $0x8] sm:$0xf]
  %v175 = vld [vmem:[%s1 + $0xc] sm:$0xf]
  %v176 = vld [vmem:[%s1 + $0x10] sm:$0xf]
  %v177 = vld [vmem:[%s1 + $0x14] sm:$0xf]
  %v178 = vld [vmem:[%s1 + $0x18] sm:$0xf]
  %v179 = vld [vmem:[%s1 + $0x1c] sm:$0xf]
  %v180 = vld [vmem:[%s1 + $0x20] sm:$0xf]
  %v181 = vld [vmem:[%s1 + $0x24] sm:$0xf]
  %v182 = vld [vmem:[%s1 + $0x28] sm:$0xf]
  %v183 = vld [vmem:[%s1 + $0x2c] sm:$0xf]
  %v184 = vld [vmem:[%s1 + $0x30] sm:$0xf]
  %v185 = vld [vmem:[%s1 + $0x34] sm:$0xf]
  %v186 = vld [vmem:[%s1 + $0x38] sm:$0xf]
  %v187 = vld [vmem:[%s1 + $0x3c] sm:$0xf]
  %v188 = vld [vmem:[%s1 + $0x40] sm:$0xf]
  %v189 = vld [vmem:[%s1 + $0x44] sm:$0xf]
  %v190 = vld [vmem:[%s1 + $0x48] sm:$0xf]
  %v191 = vld [vmem:[%s1 + $0x4c] sm:$0xf]
  %v192 = vld [vmem:[%s1 + $0x50] sm:$0xf]
  %v193 = vld [vmem:[%s1 + $0x54] sm:$0xf]
  %v194 = vld [vmem:[%s1 + $0x58] sm:$0xf]
  %v195 = vld [vmem:[%s1 + $0x5c] sm:$0xf]
  %v196 = vld [vmem:[%s1 + $0x60] sm:$0xf]
  %v197 = vld [vmem:[%s1 + $0x64] sm:$0xf]
  %v198 = vld [vmem:[%s1 + $0x68] sm:$0xf]
  %v199 = vld [vmem:[%s1 + $0x6c] sm:$0xf]
  %v200 = vld [vmem:[%s1 + $0x70] sm:$0xf]
  %v201 = vld [vmem:[%s1 + $0x74] sm:$0xf]
  %v202 = vld [vmem:[%s1 + $0x78] sm:$0xf]
  %v203 = vld [vmem:[%s1 + $0x7c] sm:$0xf]
  %v204 = vld [vmem:[%s1 + $0x80] sm:$0xf]
  %v205 = vld [vmem:[%s1 + $0x84] sm:$0xf]
  %v206 = vld [vmem:[%s1 + $0x88] sm:$0xf]
  %v207 = vld [vmem:[%s1 + $0x8c] sm:$0xf]
  %v208 = vld [vmem:[%s1 + $0x90] sm:$0xf]
  %v209 = vld [vmem:[%s1 + $0x94] sm:$0xf]
  %v210 = vld [vmem:[%s1 + $0x98] sm:$0xf]
  %v211 = vld [vmem:[%s1 + $0x9c] sm:$0xf]
  %v212 = vld [vmem:[%s1 + $0xa0] sm:$0xf]
  %v213 = vld [vmem:[%s1 + $0xa4] sm:$0xf]
  %v214 = vld [vmem:[%s1 + $0xa8] sm:$0xf]
  %v215 = vld [vmem:[%s1 + $0xac] sm:$0xf]
  %v216 = vld [vmem:[%s1 + $0xb0] sm:$0xf]
  %v217 = vld [vmem:[%s1 + $0xb4] sm:$0xf]
  %v218 = vld [vmem:[%s1 + $0xb8] sm:$0xf]
  %v219 = vld [vmem:[%s1 + $0xbc] sm:$0xf]
  %v220 = vld [vmem:[%s1 + $0xc0] sm:$0xf]
  %v221 = vld [vmem:[%s1 + $0xc4] sm:$0xf]
  %v222 = vld [vmem:[%s1 + $0xc8] sm:$0xf]
  %v223 = vld [vmem:[%s1 + $0xcc] sm:$0xf]
  %v224 = vld [vmem:[%s1 + $0xd0] sm:$0xf]
  %v225 = vld [vmem:[%s1 + $0xd4] sm:$0xf]
  %v226 = vld [vmem:[%s1 + $0xd8] sm:$0xf]
  %v227 = vld [vmem:[%s1 + $0xdc] sm:$0xf]
  %v228 = vld [vmem:[%s1 + $0xe0] sm:$0xf]
  %v229 = vld [vmem:[%s1 + $0xe4] sm:$0xf]
  %v230 = vld [vmem:[%s1 + $0xe8] sm:$0xf]
  %v231 = vld [vmem:[%s1 + $0xec] sm:$0xf]
  %v232 = vld [vmem:[%s1 + $0xf0] sm:$0xf]
  %v233 = vld [vmem:[%s1 + $0xf4] sm:$0xf]
  %v234 = vld [vmem:[%s1 + $0xf8] sm:$0xf]
  %v235 = vld [vmem:[%s1 + $0xfc] sm:$0xf]
  %v236 = vld [vmem:[%s1 + $0x100] sm:$0xf]
  %v237 = vld [vmem:[%s1 + $0x104] sm:$0xf]
  %v238 = vld [vmem:[%s1 + $0x108] sm:$0xf]
  %v239 = vld [vmem:[%s1 + $0x10c] sm:$0xf]
  %v240 = vld [vmem:[%s1 + $0x110] sm:$0xf]
  %v241 = vld [vmem:[%s1 + $0x114] sm:$0xf]
  %v242 = vld [vmem:[%s1 + $0x118] sm:$0xf]
  %v243 = vld [vmem:[%s1 + $0x11c] sm:$0xf]
  %v244 = vld [vmem:[%s2] sm:$0x1]
  %v246 = vlaneseq
  %v247 = vshrl.u32 %v246, 7
  %v248 = vsub.s32 0, %v247
  %v249 = vrot.slane %v244, %v248
  %v323 = vunpack.c.l.b16 %v172
  %v324 = vunpack.c.l.b16 %v173
  %v325 = vunpack.c.l.b16 %v174
  %v326 = vunpack.c.l.b16 %v175
  %v327 = vunpack.c.l.b16 %v176
  %v328 = vunpack.c.l.b16 %v177
  %v329 = vunpack.c.l.b16 %v178
  %v330 = vunpack.c.l.b16 %v179
  %v331 = vunpack.c.l.b16 %v180
  %v332 = vunpack.c.l.b16 %v181
  %v333 = vunpack.c.l.b16 %v182
  %v334 = vunpack.c.l.b16 %v183
  %v335 = vunpack.c.l.b16 %v184
  %v336 = vunpack.c.l.b16 %v185
  %v337 = vunpack.c.l.b16 %v186
  %v338 = vunpack.c.l.b16 %v187
  %v339 = vunpack.c.l.b16 %v188
  %v340 = vunpack.c.l.b16 %v189
  %v341 = vunpack.c.l.b16 %v190
  %v342 = vunpack.c.l.b16 %v191
  %v343 = vunpack.c.l.b16 %v192
  %v344 = vunpack.c.l.b16 %v193
  %v345 = vunpack.c.l.b16 %v194
  %v346 = vunpack.c.l.b16 %v195
  %v347 = vunpack.c.l.b16 %v196
  %v348 = vunpack.c.l.b16 %v197
  %v349 = vunpack.c.l.b16 %v198
  %v350 = vunpack.c.l.b16 %v199
  %v351 = vunpack.c.l.b16 %v200
  %v352 = vunpack.c.l.b16 %v201
  %v353 = vunpack.c.l.b16 %v202
  %v354 = vunpack.c.l.b16 %v203
  %v355 = vunpack.c.l.b16 %v204
  %v356 = vunpack.c.l.b16 %v205
  %v357 = vunpack.c.l.b16 %v206
  %v358 = vunpack.c.l.b16 %v207
  %v359 = vunpack.c.l.b16 %v208
  %v360 = vunpack.c.l.b16 %v209
  %v361 = vunpack.c.l.b16 %v210
  %v362 = vunpack.c.l.b16 %v211
  %v363 = vunpack.c.l.b16 %v212
  %v364 = vunpack.c.l.b16 %v213
  %v365 = vunpack.c.l.b16 %v214
  %v366 = vunpack.c.l.b16 %v215
  %v367 = vunpack.c.l.b16 %v216
  %v368 = vunpack.c.l.b16 %v217
  %v369 = vunpack.c.l.b16 %v218
  %v370 = vunpack.c.l.b16 %v219
  %v371 = vunpack.c.l.b16 %v220
  %v372 = vunpack.c.l.b16 %v221
  %v373 = vunpack.c.l.b16 %v222
  %v374 = vunpack.c.l.b16 %v223
  %v375 = vunpack.c.l.b16 %v224
  %v376 = vunpack.c.l.b16 %v225
  %v377 = vunpack.c.l.b16 %v226
  %v378 = vunpack.c.l.b16 %v227
  %v379 = vunpack.c.l.b16 %v228
  %v380 = vunpack.c.l.b16 %v229
  %v381 = vunpack.c.l.b16 %v230
  %v382 = vunpack.c.l.b16 %v231
  %v383 = vunpack.c.l.b16 %v232
  %v384 = vunpack.c.l.b16 %v233
  %v385 = vunpack.c.l.b16 %v234
  %v386 = vunpack.c.l.b16 %v235
  %v387 = vunpack.c.l.b16 %v236
  %v388 = vunpack.c.l.b16 %v237
  %v389 = vunpack.c.l.b16 %v238
  %v390 = vunpack.c.l.b16 %v239
  %v391 = vunpack.c.l.b16 %v240
  %v392 = vunpack.c.l.b16 %v241
  %v393 = vunpack.c.l.b16 %v242
  %v394 = vunpack.c.l.b16 %v243
  %v395 = vpack.c.b16 %v324, %v323
  %v396 = vpack.c.b16 %v326, %v325
  %v397 = vpack.c.b16 %v328, %v327
  %v398 = vpack.c.b16 %v330, %v329
  %v399 = vpack.c.b16 %v332, %v331
  %v400 = vpack.c.b16 %v334, %v333
  %v401 = vpack.c.b16 %v336, %v335
  %v402 = vpack.c.b16 %v338, %v337
  %v403 = vpack.c.b16 %v340, %v339
  %v404 = vpack.c.b16 %v342, %v341
  %v405 = vpack.c.b16 %v344, %v343
  %v406 = vpack.c.b16 %v346, %v345
  %v407 = vpack.c.b16 %v348, %v347
  %v408 = vpack.c.b16 %v350, %v349
  %v409 = vpack.c.b16 %v352, %v351
  %v410 = vpack.c.b16 %v354, %v353
  %v411 = vpack.c.b16 %v356, %v355
  %v412 = vpack.c.b16 %v358, %v357
  %v413 = vpack.c.b16 %v360, %v359
  %v414 = vpack.c.b16 %v362, %v361
  %v415 = vpack.c.b16 %v364, %v363
  %v416 = vpack.c.b16 %v366, %v365
  %v417 = vpack.c.b16 %v368, %v367
  %v418 = vpack.c.b16 %v370, %v369
  %v419 = vpack.c.b16 %v372, %v371
  %v420 = vpack.c.b16 %v374, %v373
  %v421 = vpack.c.b16 %v376, %v375
  %v422 = vpack.c.b16 %v378, %v377
  %v423 = vpack.c.b16 %v380, %v379
  %v424 = vpack.c.b16 %v382, %v381
  %v425 = vpack.c.b16 %v384, %v383
  %v426 = vpack.c.b16 %v386, %v385
  %v427 = vpack.c.b16 %v388, %v387
  %v428 = vpack.c.b16 %v390, %v389
  %v429 = vpack.c.b16 %v392, %v391
  %v430 = vpack.c.b16 %v394, %v393
  %v468 = vsel %vm155, %v138, 0
  %v471 = vsel %vm155, %v142, 0
  %v474 = vsel %vm155, %v146, 0
  %v477 = vsel %vm155, %v150, 0
  %479 = vmatprep.subr.bf16.mxu0 0
  %480 = vmatpush1.bf16.msra.mxu0 %v402
  %481 = vmatprep.subr.bf16.mxu0 0
  %482 = vmatpush1.bf16.msra.mxu0 %v401
  %483 = vmatprep.subr.bf16.mxu0 0
  %484 = vmatpush1.bf16.msra.mxu0 %v400
  %485 = vmatprep.subr.bf16.mxu0 0
  %486 = vmatpush1.bf16.msra.mxu0 %v399
  %487 = vmatprep.subr.bf16.mxu0 0
  %488 = vmatpush1.bf16.msra.mxu0 %v398
  %489 = vmatprep.subr.bf16.mxu0 0
  %490 = vmatpush1.bf16.msra.mxu0 %v397
  %491 = vmatprep.subr.bf16.mxu0 0
  %492 = vmatpush1.bf16.msra.mxu0 %v396
  %493 = vmatprep.subr.bf16.mxu0 0
  %494 = vmatpush1.bf16.msra.mxu0 %v395
  %495 = vmatprep.subr.bf16.mxu0 0
  %496 = vmatpush2.bf16.msra.mxu0 %v410
  %497 = vmatprep.subr.bf16.mxu0 0
  %498 = vmatpush2.bf16.msra.mxu0 %v409
  %499 = vmatprep.subr.bf16.mxu0 0
  %500 = vmatpush2.bf16.msra.mxu0 %v408
  %501 = vmatprep.subr.bf16.mxu0 0
  %502 = vmatpush2.bf16.msra.mxu0 %v407
  %503 = vmatprep.subr.bf16.mxu0 0
  %504 = vmatpush2.bf16.msra.mxu0 %v406
  %505 = vmatprep.subr.bf16.mxu0 0
  %506 = vmatpush2.bf16.msra.mxu0 %v405
  %507 = vmatprep.subr.bf16.mxu0 0
  %508 = vmatpush2.bf16.msra.mxu0 %v404
  %509 = vmatprep.subr.bf16.mxu0 0
  %510 = vmatpush2.bf16.msra.mxu0 %v403
  %511 = vmatprep.mubr.bf16.mxu0 %v158
  %512 = vmatmul.mubr.bf16.gmra.mxu0 %v58
  %v513 = vpop.f32.mrf.mxu0
  %v514 = vadd.f32 %v249, %v513
  %v515 = vpop.f32.mrf.mxu0
  %v516 = vpop.f32.mrf.mxu0
  %v517 = vadd.f32 %v249, %v516
  %v518 = vpop.f32.mrf.mxu0
  %519 = vmatprep.mubr.bf16.mxu0 %v162
  %520 = vmatmul.mubr.bf16.gmra.mxu0 %v60
  %v521 = vpop.f32.mrf.mxu0
  %v522 = vadd.f32 %v249, %v521
  %v523 = vpop.f32.mrf.mxu0
  %v524 = vpop.f32.mrf.mxu0
  %v525 = vadd.f32 %v249, %v524
  %v526 = vpop.f32.mrf.mxu0
  %527 = vmatprep.mubr.bf16.mxu0 %v166
  %528 = vmatmul.mubr.bf16.gmra.mxu0 %v62
  %v529 = vpop.f32.mrf.mxu0
  %v530 = vadd.f32 %v249, %v529
  %v531 = vpop.f32.mrf.mxu0
  %v532 = vpop.f32.mrf.mxu0
  %v533 = vadd.f32 %v249, %v532
  %v534 = vpop.f32.mrf.mxu0
  %535 = vmatprep.mubr.bf16.mxu0 %v170
  %536 = vmatmul.mubr.bf16.gmra.mxu0 %v64
  %v537 = vpop.f32.mrf.mxu0
  %v538 = vadd.f32 %v249, %v537
  %v539 = vpop.f32.mrf.mxu0
  %v540 = vpop.f32.mrf.mxu0
  %v541 = vadd.f32 %v249, %v540
  %v542 = vpop.f32.mrf.mxu0
  %543 = vdwg.mxu0
  %544 = vmatprep.subr.bf16.mxu0 0
  %545 = vmatpush1.bf16.msra.mxu0 %v418
  %546 = vmatprep.subr.bf16.mxu0 0
  %547 = vmatpush1.bf16.msra.mxu0 %v417
  %548 = vmatprep.subr.bf16.mxu0 0
  %549 = vmatpush1.bf16.msra.mxu0 %v416
  %550 = vmatprep.subr.bf16.mxu0 0
  %551 = vmatpush1.bf16.msra.mxu0 %v415
  %552 = vmatprep.subr.bf16.mxu0 0
  %553 = vmatpush1.bf16.msra.mxu0 %v414
  %554 = vmatprep.subr.bf16.mxu0 0
  %555 = vmatpush1.bf16.msra.mxu0 %v413
  %556 = vmatprep.subr.bf16.mxu0 0
  %557 = vmatpush1.bf16.msra.mxu0 %v412
  %558 = vmatprep.subr.bf16.mxu0 0
  %559 = vmatpush1.bf16.msra.mxu0 %v411
  %560 = vmatprep.subr.bf16.mxu0 0
  %561 = vmatpush2.bf16.msra.mxu0 %v426
  %562 = vmatprep.subr.bf16.mxu0 0
  %563 = vmatpush2.bf16.msra.mxu0 %v425
  %564 = vmatprep.subr.bf16.mxu0 0
  %565 = vmatpush2.bf16.msra.mxu0 %v424
  %566 = vmatprep.subr.bf16.mxu0 0
  %567 = vmatpush2.bf16.msra.mxu0 %v423
  %568 = vmatprep.subr.bf16.mxu0 0
  %569 = vmatpush2.bf16.msra.mxu0 %v422
  %570 = vmatprep.subr.bf16.mxu0 0
  %571 = vmatpush2.bf16.msra.mxu0 %v421
  %572 = vmatprep.subr.bf16.mxu0 0
  %573 = vmatpush2.bf16.msra.mxu0 %v420
  %574 = vmatprep.subr.bf16.mxu0 0
  %575 = vmatpush2.bf16.msra.mxu0 %v419
  %576 = vmatprep.mubr.bf16.mxu0 %v135
  %577 = vmatmul.mubr.bf16.gmra.mxu0 %v111
  %v578 = vpop.f32.mrf.mxu0
  %v579 = vadd.f32 %v514, %v578
  %v580 = vpop.f32.mrf.mxu0
  %v581 = vpop.f32.mrf.mxu0
  %v582 = vadd.f32 %v517, %v581
  %v583 = vpop.f32.mrf.mxu0
  %584 = vmatprep.mubr.bf16.mxu0 %v140
  %585 = vmatmul.mubr.bf16.gmra.mxu0 %v112
  %v586 = vpop.f32.mrf.mxu0
  %v587 = vadd.f32 %v522, %v586
  %v588 = vpop.f32.mrf.mxu0
  %v589 = vpop.f32.mrf.mxu0
  %v590 = vadd.f32 %v525, %v589
  %v591 = vpop.f32.mrf.mxu0
  %592 = vmatprep.mubr.bf16.mxu0 %v144
  %593 = vmatmul.mubr.bf16.gmra.mxu0 %v113
  %v594 = vpop.f32.mrf.mxu0
  %v595 = vadd.f32 %v530, %v594
  %v596 = vpop.f32.mrf.mxu0
  %v597 = vpop.f32.mrf.mxu0
  %v598 = vadd.f32 %v533, %v597
  %v599 = vpop.f32.mrf.mxu0
  %600 = vmatprep.mubr.bf16.mxu0 %v148
  %601 = vmatmul.mubr.bf16.gmra.mxu0 %v114
  %v602 = vpop.f32.mrf.mxu0
  %v603 = vadd.f32 %v538, %v602
  %v604 = vpop.f32.mrf.mxu0
  %v605 = vpop.f32.mrf.mxu0
  %v606 = vadd.f32 %v541, %v605
  %v607 = vpop.f32.mrf.mxu0
  %608 = vdwg.mxu0
  %609 = vmatprep.subr.bf16.mxu0 0
  %610 = vmatpush1.bf16.msra.mxu0 0
  %611 = vmatprep.subr.bf16.mxu0 0
  %612 = vmatpush1.bf16.msra.mxu0 0
  %613 = vmatprep.subr.bf16.mxu0 0
  %614 = vmatpush1.bf16.msra.mxu0 0
  %615 = vmatprep.subr.bf16.mxu0 0
  %616 = vmatpush1.bf16.msra.mxu0 0
  %617 = vmatprep.subr.bf16.mxu0 0
  %618 = vmatpush1.bf16.msra.mxu0 %v430
  %619 = vmatprep.subr.bf16.mxu0 0
  %620 = vmatpush1.bf16.msra.mxu0 %v429
  %621 = vmatprep.subr.bf16.mxu0 0
  %622 = vmatpush1.bf16.msra.mxu0 %v428
  %623 = vmatprep.subr.bf16.mxu0 0
  %624 = vmatpush1.bf16.msra.mxu0 %v427
  %625 = vmatprep.subr.bf16.mxu0 0
  %626 = vmatpush2.bf16.msra.mxu0 0
  %627 = vmatprep.subr.bf16.mxu0 0
  %628 = vmatpush2.bf16.msra.mxu0 0
  %629 = vmatprep.subr.bf16.mxu0 0
  %630 = vmatpush2.bf16.msra.mxu0 0
  %631 = vmatprep.subr.bf16.mxu0 0
  %632 = vmatpush2.bf16.msra.mxu0 0
  %633 = vmatprep.subr.bf16.mxu0 0
  %634 = vmatpush2.bf16.msra.mxu0 0
  %635 = vmatprep.subr.bf16.mxu0 0
  %636 = vmatpush2.bf16.msra.mxu0 0
  %637 = vmatprep.subr.bf16.mxu0 0
  %638 = vmatpush2.bf16.msra.mxu0 0
  %639 = vmatprep.subr.bf16.mxu0 0
  %640 = vmatpush2.bf16.msra.mxu0 0
  %641 = vmatprep.mubr.bf16.mxu0 0
  %642 = vmatmul.mubr.bf16.gmra.mxu0 %v468
  %v643 = vpop.f32.mrf.mxu0
  %v644 = vadd.f32 %v579, %v643
  %v645 = vpop.f32.mrf.mxu0
  %v646 = vpop.f32.mrf.mxu0
  %v647 = vadd.f32 %v582, %v646
  %v648 = vpop.f32.mrf.mxu0
  %649 = vmatprep.mubr.bf16.mxu0 0
  %650 = vmatmul.mubr.bf16.gmra.mxu0 %v471
  %v651 = vpop.f32.mrf.mxu0
  %v652 = vadd.f32 %v587, %v651
  %v653 = vpop.f32.mrf.mxu0
  %v654 = vpop.f32.mrf.mxu0
  %v655 = vadd.f32 %v590, %v654
  %v656 = vpop.f32.mrf.mxu0
  %657 = vmatprep.mubr.bf16.mxu0 0
  %658 = vmatmul.mubr.bf16.gmra.mxu0 %v474
  %v659 = vpop.f32.mrf.mxu0
  %v660 = vadd.f32 %v595, %v659
  %v661 = vpop.f32.mrf.mxu0
  %v662 = vpop.f32.mrf.mxu0
  %v663 = vadd.f32 %v598, %v662
  %v664 = vpop.f32.mrf.mxu0
  %665 = vmatprep.mubr.bf16.mxu0 0
  %666 = vmatmul.mubr.bf16.gmra.mxu0 %v477
  %v667 = vpop.f32.mrf.mxu0
  %v668 = vadd.f32 %v603, %v667
  %v669 = vpop.f32.mrf.mxu0
  %v670 = vpop.f32.mrf.mxu0
  %v671 = vadd.f32 %v606, %v670
  %v672 = vpop.f32.mrf.mxu0
  %673 = vdwg.mxu0
  %v674 = vld [vmem:[%s5] sm:$0xff]
  %v675 = vld [vmem:[%s5 + $0x8] sm:$0xff]
  %v676 = vld [vmem:[%s5 + $0x10] sm:$0xff]
  %v677 = vld [vmem:[%s5 + $0x18] sm:$0xff]
  %v678 = vld [vmem:[%s5 + $0x20] sm:$0xff]
  %v679 = vld [vmem:[%s5 + $0x28] sm:$0xff]
  %v680 = vld [vmem:[%s5 + $0x30] sm:$0xff]
  %v681 = vld [vmem:[%s5 + $0x38] sm:$0xff]
  %683 = vset.pattern.permute.xlu0 0
  %684 = vperm.xlu0 %683, %v674
  %v685 = vpop.permute.xlu0 %684
  %688 = vset.pattern.permute.xlu0 0
  %689 = vperm.xlu0 %688, %v675
  %v690 = vpop.permute.xlu0 %689
  %693 = vset.pattern.permute.xlu0 0
  %694 = vperm.xlu0 %693, %v676
  %v695 = vpop.permute.xlu0 %694
  %698 = vset.pattern.permute.xlu0 0
  %699 = vperm.xlu0 %698, %v677
  %v700 = vpop.permute.xlu0 %699
  %703 = vset.pattern.permute.xlu0 0
  %704 = vperm.xlu0 %703, %v678
  %v705 = vpop.permute.xlu0 %704
  %708 = vset.pattern.permute.xlu0 0
  %709 = vperm.xlu0 %708, %v679
  %v710 = vpop.permute.xlu0 %709
  %713 = vset.pattern.permute.xlu0 0
  %714 = vperm.xlu0 %713, %v680
  %v715 = vpop.permute.xlu0 %714
  %718 = vset.pattern.permute.xlu0 0
  %719 = vperm.xlu0 %718, %v681
  %v720 = vpop.permute.xlu0 %719
  %v722 = vmul.f32 %v644, %v685
  %v723 = vmul.f32 %v647, %v690
  %v724 = vmul.f32 %v652, %v695
  %v725 = vmul.f32 %v655, %v700
  %v726 = vmul.f32 %v660, %v705
  %v727 = vmul.f32 %v663, %v710
  %v728 = vmul.f32 %v668, %v715
  %v729 = vmul.f32 %v671, %v720
  %v730 = vadd.f32 %v722, %v723
  %v731 = vadd.f32 %v730, %v724
  %v732 = vadd.f32 %v731, %v725
  %v733 = vadd.f32 %v732, %v726
  %v734 = vadd.f32 %v733, %v727
  %v735 = vadd.f32 %v734, %v728
  %v736 = vadd.f32 %v735, %v729
  %v737 = vrot.slane %v736, 4
  %v738 = vadd.f32 %v736, %v737
  %v739 = vrot.slane %v738, 2
  %v740 = vadd.f32 %v738, %v739
  %v741 = vrot.slane %v740, 1
  %v742 = vadd.f32 %v740, %v741
  %v743 = vadd.f32 %v742, 0.0
  %745 = vrot.lane.b32.xlu0 %v742, 96
  %v746 = vpop.permute.xlu0 %745
  %v748 = vadd.f32 %v743, %v746
  %749 = vrot.lane.b32.xlu0 %v742, 64
  %v750 = vpop.permute.xlu0 %749
  %v752 = vadd.f32 %v748, %v750
  %753 = vrot.lane.b32.xlu0 %v742, 32
  %v754 = vpop.permute.xlu0 %753
  %v756 = vadd.f32 %v752, %v754
  %v757 = vmul.f32 %v756, 0.0078125
  %759 = vrot.lane.b32.xlu0 %v757, 32
  %v760 = vpop.permute.xlu0 %759
  %762 = vrot.lane.b32.xlu0 %v757, 64
  %v763 = vpop.permute.xlu0 %762
  %765 = vrot.lane.b32.xlu0 %v757, 96
  %v766 = vpop.permute.xlu0 %765
  %vm768 = vcmask 261120
  %v769 = vsel %vm768, %v757, %v760
  %v770 = vsel %vm155, %v769, %v763
  %vm771 = vcmask 785408
  %v772 = vsel %vm771, %v770, %v766
  %v773 = vlaneseq
  %v774 = vshrl.u32 %v773, 7
  %v775 = vsub.s32 0, %v774
  %v776 = vrot.slane %v772, %v775
  %v777 = vsub.f32 %v644, %v776
  %v778 = vsub.f32 %v647, %v776
  %v779 = vsub.f32 %v652, %v776
  %v780 = vsub.f32 %v655, %v776
  %v781 = vsub.f32 %v660, %v776
  %v782 = vsub.f32 %v663, %v776
  %v783 = vsub.f32 %v668, %v776
  %v784 = vsub.f32 %v671, %v776
  %v785 = vmul.f32 %v777, %v777
  %v786 = vmul.f32 %v778, %v778
  %v787 = vmul.f32 %v779, %v779
  %v788 = vmul.f32 %v780, %v780
  %v789 = vmul.f32 %v781, %v781
  %v790 = vmul.f32 %v782, %v782
  %v791 = vmul.f32 %v783, %v783
  %v792 = vmul.f32 %v784, %v784
  %v793 = vmul.f32 %v785, %v685
  %v794 = vmul.f32 %v786, %v690
  %v795 = vmul.f32 %v787, %v695
  %v796 = vmul.f32 %v788, %v700
  %v797 = vmul.f32 %v789, %v705
  %v798 = vmul.f32 %v790, %v710
  %v799 = vmul.f32 %v791, %v715
  %v800 = vmul.f32 %v792, %v720
  %v801 = vadd.f32 %v793, %v794
  %v802 = vadd.f32 %v801, %v795
  %v803 = vadd.f32 %v802, %v796
  %v804 = vadd.f32 %v803, %v797
  %v805 = vadd.f32 %v804, %v798
  %v806 = vadd.f32 %v805, %v799
  %v807 = vadd.f32 %v806, %v800
  %v808 = vrot.slane %v807, 4
  %v809 = vadd.f32 %v807, %v808
  %v810 = vrot.slane %v809, 2
  %v811 = vadd.f32 %v809, %v810
  %v812 = vrot.slane %v811, 1
  %v813 = vadd.f32 %v811, %v812
  %v814 = vadd.f32 %v813, 0.0
  %816 = vrot.lane.b32.xlu0 %v813, 96
  %v817 = vpop.permute.xlu0 %816
  %v819 = vadd.f32 %v814, %v817
  %820 = vrot.lane.b32.xlu0 %v813, 64
  %v821 = vpop.permute.xlu0 %820
  %v823 = vadd.f32 %v819, %v821
  %824 = vrot.lane.b32.xlu0 %v813, 32
  %v825 = vpop.permute.xlu0 %824
  %v827 = vadd.f32 %v823, %v825
  %v828 = vmul.f32 %v827, 0.0078125
  %v829 = vld [vmem:[%s3] sm:$0x1]
  %v830 = vadd.f32 %v828, 1e-05
  %v831 = vrsqrt.pop %v830
  %v832 = vmul.f32 %v829, %v831
  %v833 = vld [vmem:[%s4] sm:$0x1]
  %v834 = vmul.f32 %v757, %v832
  %v835 = vsub.f32 %v833, %v834
  %v837 = vlaneseq
  %v838 = vshrl.u32 %v837, 7
  %v839 = vsub.s32 0, %v838
  %v840 = vrot.slane %v832, %v839
  %841 = vrot.lane.b32.xlu0 %v840, 32
  %v842 = vpop.permute.xlu0 %841
  %844 = vrot.lane.b32.xlu0 %v840, 64
  %v845 = vpop.permute.xlu0 %844
  %847 = vrot.lane.b32.xlu0 %v840, 96
  %v848 = vpop.permute.xlu0 %847
  %v850 = vsel %vm768, %v832, %v842
  %v851 = vsel %vm155, %v850, %v845
  %v852 = vsel %vm771, %v851, %v848
  %v853 = vlaneseq
  %v854 = vshrl.u32 %v853, 7
  %v855 = vsub.s32 0, %v854
  %v856 = vrot.slane %v852, %v855
  %v857 = vmul.f32 %v644, %v856
  %v858 = vmul.f32 %v647, %v856
  %v859 = vmul.f32 %v652, %v856
  %v860 = vmul.f32 %v655, %v856
  %v861 = vmul.f32 %v660, %v856
  %v862 = vmul.f32 %v663, %v856
  %v863 = vmul.f32 %v668, %v856
  %v864 = vmul.f32 %v671, %v856
  %v866 = vlaneseq
  %v867 = vshrl.u32 %v866, 7
  %v868 = vsub.s32 0, %v867
  %v869 = vrot.slane %v835, %v868
  %870 = vrot.lane.b32.xlu0 %v869, 32
  %v871 = vpop.permute.xlu0 %870
  %873 = vrot.lane.b32.xlu0 %v869, 64
  %v874 = vpop.permute.xlu0 %873
  %876 = vrot.lane.b32.xlu0 %v869, 96
  %v877 = vpop.permute.xlu0 %876
  %v879 = vsel %vm768, %v835, %v871
  %v880 = vsel %vm155, %v879, %v874
  %v881 = vsel %vm771, %v880, %v877
  %v882 = vlaneseq
  %v883 = vshrl.u32 %v882, 7
  %v884 = vsub.s32 0, %v883
  %v885 = vrot.slane %v881, %v884
  %v886 = vadd.f32 %v857, %v885
  %v887 = vadd.f32 %v858, %v885
  %v888 = vadd.f32 %v859, %v885
  %v889 = vadd.f32 %v860, %v885
  %v890 = vadd.f32 %v861, %v885
  %v891 = vadd.f32 %v862, %v885
  %v892 = vadd.f32 %v863, %v885
  %v893 = vadd.f32 %v864, %v885
  %v894 = vmax.f32 %v886, 0.0
  %v895 = vmax.f32 %v887, 0.0
  %v896 = vmax.f32 %v888, 0.0
  %v897 = vmax.f32 %v889, 0.0
  %v898 = vmax.f32 %v890, 0.0
  %v899 = vmax.f32 %v891, 0.0
  %v900 = vmax.f32 %v892, 0.0
  %v901 = vmax.f32 %v893, 0.0
  %v902 = vpack.c.bf16 %v895, %v894
  %v903 = vpack.c.bf16 %v897, %v896
  %v904 = vpack.c.bf16 %v899, %v898
  %v905 = vpack.c.bf16 %v901, %v900
  %v910 = vunpack.c.l.b16 %v902
  %v911 = vunpack.c.h.b16 %v902
  %v912 = vunpack.c.l.b16 %v903
  %v913 = vunpack.c.h.b16 %v903
  %v914 = vunpack.c.l.b16 %v904
  %v915 = vunpack.c.h.b16 %v904
  %v916 = vunpack.c.l.b16 %v905
  %v917 = vunpack.c.h.b16 %v905
  %v918 = vpack.c.b16 %v910, %v910
  %v919 = vpack.c.b16 %v911, %v911
  %v920 = vpack.c.b16 %v912, %v912
  %v921 = vpack.c.b16 %v913, %v913
  %v922 = vpack.c.b16 %v914, %v914
  %v923 = vpack.c.b16 %v915, %v915
  %v924 = vpack.c.b16 %v916, %v916
  %v925 = vpack.c.b16 %v917, %v917
  %934 = vst [vmem:[%s6] sm:$0xf] %v918
  %935 = vst [vmem:[%s6 + $0x4] sm:$0xf] %v919
  %936 = vst [vmem:[%s6 + $0x8] sm:$0xf] %v920
  %937 = vst [vmem:[%s6 + $0xc] sm:$0xf] %v921
  %938 = vst [vmem:[%s6 + $0x10] sm:$0xf] %v922
  %939 = vst [vmem:[%s6 + $0x14] sm:$0xf] %v923
  %940 = vst [vmem:[%s6 + $0x18] sm:$0xf] %v924
  %941 = vst [vmem:[%s6 + $0x1c] sm:$0xf] %v925
  // Predicated region
  $region26: #{_lambda_.5} parent=0 // pred_check
    _
  $region27: #{_lambda_.5} parent=0 // pred_check_branch
    %943 = sbr.rel (0) target = $region29
  $region28: #{_lambda_.5} parent=0 // pred_region
    _
  $region29: #{_lambda_.5} parent=0 // pred_fallthru
    _
  // Predicated region
  $region30: #{_lambda_.5} parent=0 // pred_check
    _
  $region31: #{_lambda_.5} parent=0 // pred_check_branch
    %945 = sbr.rel (0) target = $region33
  $region32: #{_lambda_.5} parent=0 // pred_region
    _
  $region33: #{_lambda_.5} parent=0 // pred_fallthru
    _

// kernel: _lambda_.6
$region0: #{_lambda_.6}
  #allocation0 [shape = 'u32[]', space=smem, size = 0x4, offset = 0x4, fixed_abs, tag = 'smem constant byte address 0x4 - core index']
  #allocation1 [shape = 'u32[144,128]{1,0:T(1,128)}', space=vmem, size = 0x12000, scoped, tag = 'internal scratch']
  %s0 = inlined_call_operand.vmem [shape: bf16[224,96], index: 0, kind: input, shape index: {}]
  %s1 = inlined_call_operand.vmem [shape: bf16[288,128], index: 1, kind: input, shape index: {}]
  %s2 = inlined_call_operand.vmem [shape: f32[1,128], index: 2, kind: input, shape index: {}]
  %s3 = inlined_call_operand.vmem [shape: f32[1,32], index: 3, kind: input, shape index: {}]
  %s4 = inlined_call_operand.vmem [shape: f32[1,32], index: 4, kind: input, shape index: {}]
  %s5 = inlined_call_operand.vmem [shape: f32[192,1], index: 5, kind: input, shape index: {}]
  %s6 = inlined_call_operand.vmem [shape: bf16[192,128], index: 6, kind: output, shape index: {}]
  %s7 = sld [smem:[#allocation0]]
  $region34: #{_lambda_.6} parent=0
    _
  %s9 = ssub.s32 1, %s7
  %s10 = scalar_select 0, %s9, %s7
  // Predicated region
  $region2: #{_lambda_.6} parent=0 // pred_check
    _
  $region3: #{_lambda_.6} parent=0 // pred_check_branch
    %12 = sbr.rel (0) target = $region5
  $region4: #{_lambda_.6} parent=0 // pred_region
    _
  $region5: #{_lambda_.6} parent=0 // pred_fallthru
    _
  // Predicated region
  $region6: #{_lambda_.6} parent=0 // pred_check
    _
  $region7: #{_lambda_.6} parent=0 // pred_check_branch
    %14 = sbr.rel (0) target = $region9
  $region8: #{_lambda_.6} parent=0 // pred_region
    _
  $region9: #{_lambda_.6} parent=0 // pred_fallthru
    _
  // Predicated region
  $region10: #{_lambda_.6} parent=0 // pred_check
    _
  $region11: #{_lambda_.6} parent=0 // pred_check_branch
    %16 = sbr.rel (0) target = $region13
  $region12: #{_lambda_.6} parent=0 // pred_region
    _
  $region13: #{_lambda_.6} parent=0 // pred_fallthru
    _
  // Predicated region
  $region14: #{_lambda_.6} parent=0 // pred_check
    _
  $region15: #{_lambda_.6} parent=0 // pred_check_branch
    %18 = sbr.rel (0) target = $region17
  $region16: #{_lambda_.6} parent=0 // pred_region
    _
  $region17: #{_lambda_.6} parent=0 // pred_fallthru
    _
  // Predicated region
  $region18: #{_lambda_.6} parent=0 // pred_check
    _
  $region19: #{_lambda_.6} parent=0 // pred_check_branch
    %20 = sbr.rel (0) target = $region21
  $region20: #{_lambda_.6} parent=0 // pred_region
    _
  $region21: #{_lambda_.6} parent=0 // pred_fallthru
    _
  // Predicated region
  $region22: #{_lambda_.6} parent=0 // pred_check
    _
  $region23: #{_lambda_.6} parent=0 // pred_check_branch
    %22 = sbr.rel (0) target = $region25
  $region24: #{_lambda_.6} parent=0 // pred_region
    _
  $region25: #{_lambda_.6} parent=0 // pred_fallthru
    _
  %v24 = vld [vmem:[%s0] sm:$0xf]
  %v25 = vld [vmem:[%s0 + $0x4] sm:$0xf]
  %v26 = vld [vmem:[%s0 + $0x8] sm:$0xf]
  %v27 = vld [vmem:[%s0 + $0xc] sm:$0xf]
  %v28 = vld [vmem:[%s0 + $0x10] sm:$0xf]
  %v29 = vld [vmem:[%s0 + $0x14] sm:$0xf]
  %v30 = vld [vmem:[%s0 + $0x18] sm:$0xf]
  %v31 = vld [vmem:[%s0 + $0x1c] sm:$0xf]
  %v32 = vld [vmem:[%s0 + $0x20] sm:$0xf]
  %v33 = vld [vmem:[%s0 + $0x24] sm:$0xf]
  %v34 = vld [vmem:[%s0 + $0x28] sm:$0xf]
  %v35 = vld [vmem:[%s0 + $0x2c] sm:$0xf]
  %v36 = vld [vmem:[%s0 + $0x30] sm:$0xf]
  %v37 = vld [vmem:[%s0 + $0x34] sm:$0xf]
  %v38 = vld [vmem:[%s0 + $0x38] sm:$0xf]
  %v39 = vld [vmem:[%s0 + $0x3c] sm:$0xf]
  %v40 = vld [vmem:[%s0 + $0x40] sm:$0xf]
  %v41 = vld [vmem:[%s0 + $0x44] sm:$0xf]
  %v42 = vld [vmem:[%s0 + $0x48] sm:$0xf]
  %v43 = vld [vmem:[%s0 + $0x4c] sm:$0xf]
  %v44 = vld [vmem:[%s0 + $0x50] sm:$0xf]
  %v45 = vld [vmem:[%s0 + $0x54] sm:$0xf]
  %v46 = vld [vmem:[%s0 + $0x58] sm:$0xf]
  %v47 = vld [vmem:[%s0 + $0x5c] sm:$0xf]
  %v48 = vld [vmem:[%s0 + $0x60] sm:$0xf]
  %v49 = vld [vmem:[%s0 + $0x64] sm:$0xf]
  %v50 = vld [vmem:[%s0 + $0x68] sm:$0xf]
  %v75 = vunpack.c.l.b16 %v24
  %v76 = vunpack.c.l.b16 %v25
  %v77 = vunpack.c.l.b16 %v26
  %v78 = vunpack.c.l.b16 %v27
  %v79 = vunpack.c.l.b16 %v28
  %v80 = vunpack.c.l.b16 %v29
  %v81 = vunpack.c.l.b16 %v30
  %v82 = vunpack.c.l.b16 %v31
  %v83 = vunpack.c.l.b16 %v32
  %v84 = vunpack.c.l.b16 %v33
  %v85 = vunpack.c.l.b16 %v34
  %v86 = vunpack.c.l.b16 %v35
  %v87 = vunpack.c.l.b16 %v36
  %v88 = vunpack.c.l.b16 %v37
  %v89 = vunpack.c.l.b16 %v38
  %v90 = vunpack.c.l.b16 %v39
  %v91 = vunpack.c.l.b16 %v40
  %v92 = vunpack.c.l.b16 %v41
  %v93 = vunpack.c.l.b16 %v42
  %v94 = vunpack.c.l.b16 %v43
  %v95 = vunpack.c.l.b16 %v44
  %v96 = vunpack.c.l.b16 %v45
  %v97 = vunpack.c.l.b16 %v46
  %v98 = vunpack.c.l.b16 %v47
  %v99 = vpack.c.b16 %v76, %v75
  %v100 = vpack.c.b16 %v78, %v77
  %v101 = vpack.c.b16 %v80, %v79
  %v102 = vpack.c.b16 %v82, %v81
  %v103 = vpack.c.b16 %v84, %v83
  %v104 = vpack.c.b16 %v86, %v85
  %v105 = vpack.c.b16 %v88, %v87
  %v106 = vpack.c.b16 %v90, %v89
  %v107 = vpack.c.b16 %v92, %v91
  %v108 = vpack.c.b16 %v94, %v93
  %v109 = vpack.c.b16 %v96, %v95
  %v110 = vpack.c.b16 %v98, %v97
  %v113 = vunpack.c.l.b16 %v48
  %v114 = vunpack.c.l.b16 %v49
  %v115 = vpack.c.b16 %v77, %v76
  %v116 = vpack.c.b16 %v79, %v78
  %v117 = vpack.c.b16 %v81, %v80
  %v118 = vpack.c.b16 %v83, %v82
  %v119 = vpack.c.b16 %v85, %v84
  %v120 = vpack.c.b16 %v87, %v86
  %v121 = vpack.c.b16 %v89, %v88
  %v122 = vpack.c.b16 %v91, %v90
  %v123 = vpack.c.b16 %v93, %v92
  %v124 = vpack.c.b16 %v95, %v94
  %v125 = vpack.c.b16 %v97, %v96
  %v126 = vpack.c.b16 %v113, %v98
  %v127 = vpack.c.b16 %v114, %v114
  %vm128 = vcmask 1046528
  %v129 = vrot.slane %v115, 1
  %v130 = vrot.slane %v116, 1
  %v131 = vsel %vm128, %v129, %v130
  %v132 = vrot.slane %v117, 1
  %v133 = vsel %vm128, %v130, %v132
  %v134 = vrot.slane %v118, 1
  %v135 = vsel %vm128, %v132, %v134
  %v136 = vrot.slane %v119, 1
  %v137 = vsel %vm128, %v134, %v136
  %v138 = vrot.slane %v120, 1
  %v139 = vsel %vm128, %v136, %v138
  %v140 = vrot.slane %v121, 1
  %v141 = vsel %vm128, %v138, %v140
  %v142 = vrot.slane %v122, 1
  %v143 = vsel %vm128, %v140, %v142
  %v144 = vrot.slane %v123, 1
  %v145 = vsel %vm128, %v142, %v144
  %v146 = vrot.slane %v124, 1
  %v147 = vsel %vm128, %v144, %v146
  %v148 = vrot.slane %v125, 1
  %v149 = vsel %vm128, %v146, %v148
  %v150 = vrot.slane %v126, 1
  %v151 = vsel %vm128, %v148, %v150
  %v152 = vrot.slane %v127, 1
  %v153 = vsel %vm128, %v150, %v152
  %154 = vrot.lane.b32.xlu0 %v131, 96
  %v155 = vpop.permute.xlu0 %154
  %156 = vrot.lane.b32.xlu0 %v133, 96
  %v157 = vpop.permute.xlu0 %156
  %158 = vrot.lane.b32.xlu0 %v135, 96
  %v159 = vpop.permute.xlu0 %158
  %160 = vrot.lane.b32.xlu0 %v137, 96
  %v161 = vpop.permute.xlu0 %160
  %162 = vrot.lane.b32.xlu0 %v139, 96
  %v163 = vpop.permute.xlu0 %162
  %164 = vrot.lane.b32.xlu0 %v141, 96
  %v165 = vpop.permute.xlu0 %164
  %166 = vrot.lane.b32.xlu0 %v143, 96
  %v167 = vpop.permute.xlu0 %166
  %168 = vrot.lane.b32.xlu0 %v145, 96
  %v169 = vpop.permute.xlu0 %168
  %170 = vrot.lane.b32.xlu0 %v147, 96
  %v171 = vpop.permute.xlu0 %170
  %172 = vrot.lane.b32.xlu0 %v149, 96
  %v173 = vpop.permute.xlu0 %172
  %174 = vrot.lane.b32.xlu0 %v151, 96
  %v175 = vpop.permute.xlu0 %174
  %176 = vrot.lane.b32.xlu0 %v153, 96
  %v177 = vpop.permute.xlu0 %176
  %v179 = vunpack.c.l.b16 %v50
  %v180 = vpack.c.b16 %v114, %v113
  %v181 = vpack.c.b16 %v179, %v179
  %vm182 = vcmask 1045504
  %v183 = vrot.slane %v100, 2
  %v184 = vrot.slane %v101, 2
  %v185 = vsel %vm182, %v183, %v184
  %v186 = vrot.slane %v102, 2
  %v187 = vsel %vm182, %v184, %v186
  %v188 = vrot.slane %v103, 2
  %v189 = vsel %vm182, %v186, %v188
  %v190 = vrot.slane %v104, 2
  %v191 = vsel %vm182, %v188, %v190
  %v192 = vrot.slane %v105, 2
  %v193 = vsel %vm182, %v190, %v192
  %v194 = vrot.slane %v106, 2
  %v195 = vsel %vm182, %v192, %v194
  %v196 = vrot.slane %v107, 2
  %v197 = vsel %vm182, %v194, %v196
  %v198 = vrot.slane %v108, 2
  %v199 = vsel %vm182, %v196, %v198
  %v200 = vrot.slane %v109, 2
  %v201 = vsel %vm182, %v198, %v200
  %v202 = vrot.slane %v110, 2
  %v203 = vsel %vm182, %v200, %v202
  %v204 = vrot.slane %v180, 2
  %v205 = vsel %vm182, %v202, %v204
  %v206 = vrot.slane %v181, 2
  %v207 = vsel %vm182, %v204, %v206
  %208 = vrot.lane.b32.xlu0 %v185, 64
  %v209 = vpop.permute.xlu0 %208
  %210 = vrot.lane.b32.xlu0 %v187, 64
  %v211 = vpop.permute.xlu0 %210
  %212 = vrot.lane.b32.xlu0 %v189, 64
  %v213 = vpop.permute.xlu0 %212
  %214 = vrot.lane.b32.xlu0 %v191, 64
  %v215 = vpop.permute.xlu0 %214
  %216 = vrot.lane.b32.xlu0 %v193, 64
  %v217 = vpop.permute.xlu0 %216
  %218 = vrot.lane.b32.xlu0 %v195, 64
  %v219 = vpop.permute.xlu0 %218
  %220 = vrot.lane.b32.xlu0 %v197, 64
  %v221 = vpop.permute.xlu0 %220
  %222 = vrot.lane.b32.xlu0 %v199, 64
  %v223 = vpop.permute.xlu0 %222
  %224 = vrot.lane.b32.xlu0 %v201, 64
  %v225 = vpop.permute.xlu0 %224
  %226 = vrot.lane.b32.xlu0 %v203, 64
  %v227 = vpop.permute.xlu0 %226
  %228 = vrot.lane.b32.xlu0 %v205, 64
  %v229 = vpop.permute.xlu0 %228
  %230 = vrot.lane.b32.xlu0 %v207, 64
  %v231 = vpop.permute.xlu0 %230
  %vm232 = vcmask 785408
  %v235 = vsel %vm232, %v99, %v155
  %v239 = vsel %vm232, %v100, %v157
  %v243 = vsel %vm232, %v101, %v159
  %v247 = vsel %vm232, %v102, %v161
  %v251 = vsel %vm232, %v103, %v163
  %v255 = vsel %vm232, %v104, %v165
  %v259 = vsel %vm232, %v105, %v167
  %v263 = vsel %vm232, %v106, %v169
  %v267 = vsel %vm232, %v107, %v171
  %v271 = vsel %vm232, %v108, %v173
  %v275 = vsel %vm232, %v109, %v175
  %v279 = vsel %vm232, %v110, %v177
  %vm281 = vcmask 523264
  %v283 = vsel %vm281, %v155, %v209
  %v286 = vsel %vm281, %v157, %v211
  %v289 = vsel %vm281, %v159, %v213
  %v292 = vsel %vm281, %v161, %v215
  %v295 = vsel %vm281, %v163, %v217
  %v298 = vsel %vm281, %v165, %v219
  %v301 = vsel %vm281, %v167, %v221
  %v304 = vsel %vm281, %v169, %v223
  %v307 = vsel %vm281, %v171, %v225
  %v310 = vsel %vm281, %v173, %v227
  %v313 = vsel %vm281, %v175, %v229
  %v316 = vsel %vm281, %v177, %v231
  %v318 = vld [vmem:[%s1] sm:$0xf]
  %v319 = vld [vmem:[%s1 + $0x4] sm:$0xf]
  %v320 = vld [vmem:[%s1 + $0x8] sm:$0xf]
  %v321 = vld [vmem:[%s1 + $0xc] sm:$0xf]
  %v322 = vld [vmem:[%s1 + $0x10] sm:$0xf]
  %v323 = vld [vmem:[%s1 + $0x14] sm:$0xf]
  %v324 = vld [vmem:[%s1 + $0x18] sm:$0xf]
  %v325 = vld [vmem:[%s1 + $0x1c] sm:$0xf]
  %v326 = vld [vmem:[%s1 + $0x20] sm:$0xf]
  %v327 = vld [vmem:[%s1 + $0x24] sm:$0xf]
  %v328 = vld [vmem:[%s1 + $0x28] sm:$0xf]
  %v329 = vld [vmem:[%s1 + $0x2c] sm:$0xf]
  %v330 = vld [vmem:[%s1 + $0x30] sm:$0xf]
  %v331 = vld [vmem:[%s1 + $0x34] sm:$0xf]
  %v332 = vld [vmem:[%s1 + $0x38] sm:$0xf]
  %v333 = vld [vmem:[%s1 + $0x3c] sm:$0xf]
  %v334 = vld [vmem:[%s1 + $0x40] sm:$0xf]
  %v335 = vld [vmem:[%s1 + $0x44] sm:$0xf]
  %v336 = vld [vmem:[%s1 + $0x48] sm:$0xf]
  %v337 = vld [vmem:[%s1 + $0x4c] sm:$0xf]
  %v338 = vld [vmem:[%s1 + $0x50] sm:$0xf]
  %v339 = vld [vmem:[%s1 + $0x54] sm:$0xf]
  %v340 = vld [vmem:[%s1 + $0x58] sm:$0xf]
  %v341 = vld [vmem:[%s1 + $0x5c] sm:$0xf]
  %v342 = vld [vmem:[%s1 + $0x60] sm:$0xf]
  %v343 = vld [vmem:[%s1 + $0x64] sm:$0xf]
  %v344 = vld [vmem:[%s1 + $0x68] sm:$0xf]
  %v345 = vld [vmem:[%s1 + $0x6c] sm:$0xf]
  %v346 = vld [vmem:[%s1 + $0x70] sm:$0xf]
  %v347 = vld [vmem:[%s1 + $0x74] sm:$0xf]
  %v348 = vld [vmem:[%s1 + $0x78] sm:$0xf]
  %v349 = vld [vmem:[%s1 + $0x7c] sm:$0xf]
  %v350 = vld [vmem:[%s1 + $0x80] sm:$0xf]
  %v351 = vld [vmem:[%s1 + $0x84] sm:$0xf]
  %v352 = vld [vmem:[%s1 + $0x88] sm:$0xf]
  %v353 = vld [vmem:[%s1 + $0x8c] sm:$0xf]
  %v354 = vld [vmem:[%s2] sm:$0x1]
  %v356 = vlaneseq
  %v357 = vshrl.u32 %v356, 7
  %v358 = vsub.s32 0, %v357
  %v359 = vrot.slane %v354, %v358
  %v397 = vunpack.c.l.b16 %v318
  %v398 = vunpack.c.l.b16 %v319
  %v399 = vunpack.c.l.b16 %v320
  %v400 = vunpack.c.l.b16 %v321
  %v401 = vunpack.c.l.b16 %v322
  %v402 = vunpack.c.l.b16 %v323
  %v403 = vunpack.c.l.b16 %v324
  %v404 = vunpack.c.l.b16 %v325
  %v405 = vunpack.c.l.b16 %v326
  %v406 = vunpack.c.l.b16 %v327
  %v407 = vunpack.c.l.b16 %v328
  %v408 = vunpack.c.l.b16 %v329
  %v409 = vunpack.c.l.b16 %v330
  %v410 = vunpack.c.l.b16 %v331
  %v411 = vunpack.c.l.b16 %v332
  %v412 = vunpack.c.l.b16 %v333
  %v413 = vunpack.c.l.b16 %v334
  %v414 = vunpack.c.l.b16 %v335
  %v415 = vunpack.c.l.b16 %v336
  %v416 = vunpack.c.l.b16 %v337
  %v417 = vunpack.c.l.b16 %v338
  %v418 = vunpack.c.l.b16 %v339
  %v419 = vunpack.c.l.b16 %v340
  %v420 = vunpack.c.l.b16 %v341
  %v421 = vunpack.c.l.b16 %v342
  %v422 = vunpack.c.l.b16 %v343
  %v423 = vunpack.c.l.b16 %v344
  %v424 = vunpack.c.l.b16 %v345
  %v425 = vunpack.c.l.b16 %v346
  %v426 = vunpack.c.l.b16 %v347
  %v427 = vunpack.c.l.b16 %v348
  %v428 = vunpack.c.l.b16 %v349
  %v429 = vunpack.c.l.b16 %v350
  %v430 = vunpack.c.l.b16 %v351
  %v431 = vunpack.c.l.b16 %v352
  %v432 = vunpack.c.l.b16 %v353
  %v433 = vpack.c.b16 %v398, %v397
  %v434 = vpack.c.b16 %v400, %v399
  %v435 = vpack.c.b16 %v402, %v401
  %v436 = vpack.c.b16 %v404, %v403
  %v437 = vpack.c.b16 %v406, %v405
  %v438 = vpack.c.b16 %v408, %v407
  %v439 = vpack.c.b16 %v410, %v409
  %v440 = vpack.c.b16 %v412, %v411
  %v441 = vpack.c.b16 %v414, %v413
  %v442 = vpack.c.b16 %v416, %v415
  %v443 = vpack.c.b16 %v418, %v417
  %v444 = vpack.c.b16 %v420, %v419
  %v445 = vpack.c.b16 %v422, %v421
  %v446 = vpack.c.b16 %v424, %v423
  %v447 = vpack.c.b16 %v426, %v425
  %v448 = vpack.c.b16 %v428, %v427
  %v449 = vpack.c.b16 %v430, %v429
  %v450 = vpack.c.b16 %v432, %v431
  %vm469 = vcmask 261120
  %v470 = vsel %vm469, %v209, 0
  %v472 = vsel %vm469, %v211, 0
  %v474 = vsel %vm469, %v213, 0
  %v476 = vsel %vm469, %v215, 0
  %v478 = vsel %vm469, %v217, 0
  %v480 = vsel %vm469, %v219, 0
  %v482 = vsel %vm469, %v221, 0
  %v484 = vsel %vm469, %v223, 0
  %v486 = vsel %vm469, %v225, 0
  %v488 = vsel %vm469, %v227, 0
  %v490 = vsel %vm469, %v229, 0
  %v492 = vsel %vm469, %v231, 0
  %494 = vmatprep.subr.bf16.mxu0 0
  %495 = vmatpush1.bf16.msra.mxu0 %v440
  %496 = vmatprep.subr.bf16.mxu0 0
  %497 = vmatpush1.bf16.msra.mxu0 %v439
  %498 = vmatprep.subr.bf16.mxu0 0
  %499 = vmatpush1.bf16.msra.mxu0 %v438
  %500 = vmatprep.subr.bf16.mxu0 0
  %501 = vmatpush1.bf16.msra.mxu0 %v437
  %502 = vmatprep.subr.bf16.mxu0 0
  %503 = vmatpush1.bf16.msra.mxu0 %v436
  %504 = vmatprep.subr.bf16.mxu0 0
  %505 = vmatpush1.bf16.msra.mxu0 %v435
  %506 = vmatprep.subr.bf16.mxu0 0
  %507 = vmatpush1.bf16.msra.mxu0 %v434
  %508 = vmatprep.subr.bf16.mxu0 0
  %509 = vmatpush1.bf16.msra.mxu0 %v433
  %510 = vmatprep.subr.bf16.mxu0 0
  %511 = vmatpush2.bf16.msra.mxu0 %v448
  %512 = vmatprep.subr.bf16.mxu0 0
  %513 = vmatpush2.bf16.msra.mxu0 %v447
  %514 = vmatprep.subr.bf16.mxu0 0
  %515 = vmatpush2.bf16.msra.mxu0 %v446
  %516 = vmatprep.subr.bf16.mxu0 0
  %517 = vmatpush2.bf16.msra.mxu0 %v445
  %518 = vmatprep.subr.bf16.mxu0 0
  %519 = vmatpush2.bf16.msra.mxu0 %v444
  %520 = vmatprep.subr.bf16.mxu0 0
  %521 = vmatpush2.bf16.msra.mxu0 %v443
  %522 = vmatprep.subr.bf16.mxu0 0
  %523 = vmatpush2.bf16.msra.mxu0 %v442
  %524 = vmatprep.subr.bf16.mxu0 0
  %525 = vmatpush2.bf16.msra.mxu0 %v441
  %526 = vmatprep.mubr.bf16.mxu0 %v283
  %527 = vmatmul.mubr.bf16.gmra.mxu0 %v235
  %v528 = vpop.f32.mrf.mxu0
  %v529 = vadd.f32 %v359, %v528
  %v530 = vpop.f32.mrf.mxu0
  %v531 = vpop.f32.mrf.mxu0
  %v532 = vadd.f32 %v359, %v531
  %v533 = vpop.f32.mrf.mxu0
  %534 = vmatprep.mubr.bf16.mxu0 %v286
  %535 = vmatmul.mubr.bf16.gmra.mxu0 %v239
  %v536 = vpop.f32.mrf.mxu0
  %v537 = vadd.f32 %v359, %v536
  %v538 = vpop.f32.mrf.mxu0
  %v539 = vpop.f32.mrf.mxu0
  %v540 = vadd.f32 %v359, %v539
  %v541 = vpop.f32.mrf.mxu0
  %542 = vmatprep.mubr.bf16.mxu0 %v289
  %543 = vmatmul.mubr.bf16.gmra.mxu0 %v243
  %v544 = vpop.f32.mrf.mxu0
  %v545 = vadd.f32 %v359, %v544
  %v546 = vpop.f32.mrf.mxu0
  %v547 = vpop.f32.mrf.mxu0
  %v548 = vadd.f32 %v359, %v547
  %v549 = vpop.f32.mrf.mxu0
  %550 = vmatprep.mubr.bf16.mxu0 %v292
  %551 = vmatmul.mubr.bf16.gmra.mxu0 %v247
  %v552 = vpop.f32.mrf.mxu0
  %v553 = vadd.f32 %v359, %v552
  %v554 = vpop.f32.mrf.mxu0
  %v555 = vpop.f32.mrf.mxu0
  %v556 = vadd.f32 %v359, %v555
  %v557 = vpop.f32.mrf.mxu0
  %558 = vmatprep.mubr.bf16.mxu0 %v295
  %559 = vmatmul.mubr.bf16.gmra.mxu0 %v251
  %v560 = vpop.f32.mrf.mxu0
  %v561 = vadd.f32 %v359, %v560
  %v562 = vpop.f32.mrf.mxu0
  %v563 = vpop.f32.mrf.mxu0
  %v564 = vadd.f32 %v359, %v563
  %v565 = vpop.f32.mrf.mxu0
  %566 = vmatprep.mubr.bf16.mxu0 %v298
  %567 = vmatmul.mubr.bf16.gmra.mxu0 %v255
  %v568 = vpop.f32.mrf.mxu0
  %v569 = vadd.f32 %v359, %v568
  %v570 = vpop.f32.mrf.mxu0
  %v571 = vpop.f32.mrf.mxu0
  %v572 = vadd.f32 %v359, %v571
  %v573 = vpop.f32.mrf.mxu0
  %574 = vmatprep.mubr.bf16.mxu0 %v301
  %575 = vmatmul.mubr.bf16.gmra.mxu0 %v259
  %v576 = vpop.f32.mrf.mxu0
  %v577 = vadd.f32 %v359, %v576
  %v578 = vpop.f32.mrf.mxu0
  %v579 = vpop.f32.mrf.mxu0
  %v580 = vadd.f32 %v359, %v579
  %v581 = vpop.f32.mrf.mxu0
  %582 = vmatprep.mubr.bf16.mxu0 %v304
  %583 = vmatmul.mubr.bf16.gmra.mxu0 %v263
  %v584 = vpop.f32.mrf.mxu0
  %v585 = vadd.f32 %v359, %v584
  %v586 = vpop.f32.mrf.mxu0
  %v587 = vpop.f32.mrf.mxu0
  %v588 = vadd.f32 %v359, %v587
  %v589 = vpop.f32.mrf.mxu0
  %590 = vmatprep.mubr.bf16.mxu0 %v307
  %591 = vmatmul.mubr.bf16.gmra.mxu0 %v267
  %v592 = vpop.f32.mrf.mxu0
  %v593 = vadd.f32 %v359, %v592
  %v594 = vpop.f32.mrf.mxu0
  %v595 = vpop.f32.mrf.mxu0
  %v596 = vadd.f32 %v359, %v595
  %v597 = vpop.f32.mrf.mxu0
  %598 = vmatprep.mubr.bf16.mxu0 %v310
  %599 = vmatmul.mubr.bf16.gmra.mxu0 %v271
  %v600 = vpop.f32.mrf.mxu0
  %v601 = vadd.f32 %v359, %v600
  %v602 = vpop.f32.mrf.mxu0
  %v603 = vpop.f32.mrf.mxu0
  %v604 = vadd.f32 %v359, %v603
  %v605 = vpop.f32.mrf.mxu0
  %606 = vmatprep.mubr.bf16.mxu0 %v313
  %607 = vmatmul.mubr.bf16.gmra.mxu0 %v275
  %v608 = vpop.f32.mrf.mxu0
  %v609 = vadd.f32 %v359, %v608
  %v610 = vpop.f32.mrf.mxu0
  %v611 = vpop.f32.mrf.mxu0
  %v612 = vadd.f32 %v359, %v611
  %v613 = vpop.f32.mrf.mxu0
  %614 = vmatprep.mubr.bf16.mxu0 %v316
  %615 = vmatmul.mubr.bf16.gmra.mxu0 %v279
  %v616 = vpop.f32.mrf.mxu0
  %v617 = vadd.f32 %v359, %v616
  %v618 = vpop.f32.mrf.mxu0
  %v619 = vpop.f32.mrf.mxu0
  %v620 = vadd.f32 %v359, %v619
  %v621 = vpop.f32.mrf.mxu0
  %622 = vdwg.mxu0
  %623 = vmatprep.subr.bf16.mxu0 0
  %624 = vmatpush1.bf16.msra.mxu0 0
  %625 = vmatprep.subr.bf16.mxu0 0
  %626 = vmatpush1.bf16.msra.mxu0 0
  %627 = vmatprep.subr.bf16.mxu0 0
  %628 = vmatpush1.bf16.msra.mxu0 0
  %629 = vmatprep.subr.bf16.mxu0 0
  %630 = vmatpush1.bf16.msra.mxu0 0
  %631 = vmatprep.subr.bf16.mxu0 0
  %632 = vmatpush1.bf16.msra.mxu0 0
  %633 = vmatprep.subr.bf16.mxu0 0
  %634 = vmatpush1.bf16.msra.mxu0 0
  %635 = vmatprep.subr.bf16.mxu0 0
  %636 = vmatpush1.bf16.msra.mxu0 %v450
  %637 = vmatprep.subr.bf16.mxu0 0
  %638 = vmatpush1.bf16.msra.mxu0 %v449
  %639 = vmatprep.subr.bf16.mxu0 0
  %640 = vmatpush2.bf16.msra.mxu0 0
  %641 = vmatprep.subr.bf16.mxu0 0
  %642 = vmatpush2.bf16.msra.mxu0 0
  %643 = vmatprep.subr.bf16.mxu0 0
  %644 = vmatpush2.bf16.msra.mxu0 0
  %645 = vmatprep.subr.bf16.mxu0 0
  %646 = vmatpush2.bf16.msra.mxu0 0
  %647 = vmatprep.subr.bf16.mxu0 0
  %648 = vmatpush2.bf16.msra.mxu0 0
  %649 = vmatprep.subr.bf16.mxu0 0
  %650 = vmatpush2.bf16.msra.mxu0 0
  %651 = vmatprep.subr.bf16.mxu0 0
  %652 = vmatpush2.bf16.msra.mxu0 0
  %653 = vmatprep.subr.bf16.mxu0 0
  %654 = vmatpush2.bf16.msra.mxu0 0
  %655 = vmatprep.mubr.bf16.mxu0 0
  %656 = vmatmul.mubr.bf16.gmra.mxu0 %v470
  %v657 = vpop.f32.mrf.mxu0
  %v658 = vadd.f32 %v529, %v657
  %v659 = vpop.f32.mrf.mxu0
  %v660 = vpop.f32.mrf.mxu0
  %v661 = vadd.f32 %v532, %v660
  %v662 = vpop.f32.mrf.mxu0
  %663 = vmatprep.mubr.bf16.mxu0 0
  %664 = vmatmul.mubr.bf16.gmra.mxu0 %v472
  %v665 = vpop.f32.mrf.mxu0
  %v666 = vadd.f32 %v537, %v665
  %v667 = vpop.f32.mrf.mxu0
  %v668 = vpop.f32.mrf.mxu0
  %v669 = vadd.f32 %v540, %v668
  %v670 = vpop.f32.mrf.mxu0
  %671 = vmatprep.mubr.bf16.mxu0 0
  %672 = vmatmul.mubr.bf16.gmra.mxu0 %v474
  %v673 = vpop.f32.mrf.mxu0
  %v674 = vadd.f32 %v545, %v673
  %v675 = vpop.f32.mrf.mxu0
  %v676 = vpop.f32.mrf.mxu0
  %v677 = vadd.f32 %v548, %v676
  %v678 = vpop.f32.mrf.mxu0
  %679 = vmatprep.mubr.bf16.mxu0 0
  %680 = vmatmul.mubr.bf16.gmra.mxu0 %v476
  %v681 = vpop.f32.mrf.mxu0
  %v682 = vadd.f32 %v553, %v681
  %v683 = vpop.f32.mrf.mxu0
  %v684 = vpop.f32.mrf.mxu0
  %v685 = vadd.f32 %v556, %v684
  %v686 = vpop.f32.mrf.mxu0
  %687 = vmatprep.mubr.bf16.mxu0 0
  %688 = vmatmul.mubr.bf16.gmra.mxu0 %v478
  %v689 = vpop.f32.mrf.mxu0
  %v690 = vadd.f32 %v561, %v689
  %v691 = vpop.f32.mrf.mxu0
  %v692 = vpop.f32.mrf.mxu0
  %v693 = vadd.f32 %v564, %v692
  %v694 = vpop.f32.mrf.mxu0
  %695 = vmatprep.mubr.bf16.mxu0 0
  %696 = vmatmul.mubr.bf16.gmra.mxu0 %v480
  %v697 = vpop.f32.mrf.mxu0
  %v698 = vadd.f32 %v569, %v697
  %v699 = vpop.f32.mrf.mxu0
  %v700 = vpop.f32.mrf.mxu0
  %v701 = vadd.f32 %v572, %v700
  %v702 = vpop.f32.mrf.mxu0
  %703 = vmatprep.mubr.bf16.mxu0 0
  %704 = vmatmul.mubr.bf16.gmra.mxu0 %v482
  %v705 = vpop.f32.mrf.mxu0
  %v706 = vadd.f32 %v577, %v705
  %v707 = vpop.f32.mrf.mxu0
  %v708 = vpop.f32.mrf.mxu0
  %v709 = vadd.f32 %v580, %v708
  %v710 = vpop.f32.mrf.mxu0
  %711 = vmatprep.mubr.bf16.mxu0 0
  %712 = vmatmul.mubr.bf16.gmra.mxu0 %v484
  %v713 = vpop.f32.mrf.mxu0
  %v714 = vadd.f32 %v585, %v713
  %v715 = vpop.f32.mrf.mxu0
  %v716 = vpop.f32.mrf.mxu0
  %v717 = vadd.f32 %v588, %v716
  %v718 = vpop.f32.mrf.mxu0
  %719 = vmatprep.mubr.bf16.mxu0 0
  %720 = vmatmul.mubr.bf16.gmra.mxu0 %v486
  %v721 = vpop.f32.mrf.mxu0
  %v722 = vadd.f32 %v593, %v721
  %v723 = vpop.f32.mrf.mxu0
  %v724 = vpop.f32.mrf.mxu0
  %v725 = vadd.f32 %v596, %v724
  %v726 = vpop.f32.mrf.mxu0
  %727 = vmatprep.mubr.bf16.mxu0 0
  %728 = vmatmul.mubr.bf16.gmra.mxu0 %v488
  %v729 = vpop.f32.mrf.mxu0
  %v730 = vadd.f32 %v601, %v729
  %v731 = vpop.f32.mrf.mxu0
  %v732 = vpop.f32.mrf.mxu0
  %v733 = vadd.f32 %v604, %v732
  %v734 = vpop.f32.mrf.mxu0
  %735 = vmatprep.mubr.bf16.mxu0 0
  %736 = vmatmul.mubr.bf16.gmra.mxu0 %v490
  %v737 = vpop.f32.mrf.mxu0
  %v738 = vadd.f32 %v609, %v737
  %v739 = vpop.f32.mrf.mxu0
  %v740 = vpop.f32.mrf.mxu0
  %v741 = vadd.f32 %v612, %v740
  %v742 = vpop.f32.mrf.mxu0
  %743 = vmatprep.mubr.bf16.mxu0 0
  %744 = vmatmul.mubr.bf16.gmra.mxu0 %v492
  %v745 = vpop.f32.mrf.mxu0
  %v746 = vadd.f32 %v617, %v745
  %v747 = vpop.f32.mrf.mxu0
  %v748 = vpop.f32.mrf.mxu0
  %v749 = vadd.f32 %v620, %v748
  %v750 = vpop.f32.mrf.mxu0
  %751 = vdwg.mxu0
  %v752 = vld [vmem:[%s5] sm:$0xff]
  %v753 = vld [vmem:[%s5 + $0x8] sm:$0xff]
  %v754 = vld [vmem:[%s5 + $0x10] sm:$0xff]
  %v755 = vld [vmem:[%s5 + $0x18] sm:$0xff]
  %v756 = vld [vmem:[%s5 + $0x20] sm:$0xff]
  %v757 = vld [vmem:[%s5 + $0x28] sm:$0xff]
  %v758 = vld [vmem:[%s5 + $0x30] sm:$0xff]
  %v759 = vld [vmem:[%s5 + $0x38] sm:$0xff]
  %v760 = vld [vmem:[%s5 + $0x40] sm:$0xff]
  %v761 = vld [vmem:[%s5 + $0x48] sm:$0xff]
  %v762 = vld [vmem:[%s5 + $0x50] sm:$0xff]
  %v763 = vld [vmem:[%s5 + $0x58] sm:$0xff]
  %v764 = vld [vmem:[%s5 + $0x60] sm:$0xff]
  %v765 = vld [vmem:[%s5 + $0x68] sm:$0xff]
  %v766 = vld [vmem:[%s5 + $0x70] sm:$0xff]
  %v767 = vld [vmem:[%s5 + $0x78] sm:$0xff]
  %v768 = vld [vmem:[%s5 + $0x80] sm:$0xff]
  %v769 = vld [vmem:[%s5 + $0x88] sm:$0xff]
  %v770 = vld [vmem:[%s5 + $0x90] sm:$0xff]
  %v771 = vld [vmem:[%s5 + $0x98] sm:$0xff]
  %v772 = vld [vmem:[%s5 + $0xa0] sm:$0xff]
  %v773 = vld [vmem:[%s5 + $0xa8] sm:$0xff]
  %v774 = vld [vmem:[%s5 + $0xb0] sm:$0xff]
  %v775 = vld [vmem:[%s5 + $0xb8] sm:$0xff]
  %777 = vset.pattern.permute.xlu0 0
  %778 = vperm.xlu0 %777, %v752
  %v779 = vpop.permute.xlu0 %778
  %782 = vset.pattern.permute.xlu0 0
  %783 = vperm.xlu0 %782, %v753
  %v784 = vpop.permute.xlu0 %783
  %787 = vset.pattern.permute.xlu0 0
  %788 = vperm.xlu0 %787, %v754
  %v789 = vpop.permute.xlu0 %788
  %792 = vset.pattern.permute.xlu0 0
  %793 = vperm.xlu0 %792, %v755
  %v794 = vpop.permute.xlu0 %793
  %797 = vset.pattern.permute.xlu0 0
  %798 = vperm.xlu0 %797, %v756
  %v799 = vpop.permute.xlu0 %798
  %802 = vset.pattern.permute.xlu0 0
  %803 = vperm.xlu0 %802, %v757
  %v804 = vpop.permute.xlu0 %803
  %807 = vset.pattern.permute.xlu0 0
  %808 = vperm.xlu0 %807, %v758
  %v809 = vpop.permute.xlu0 %808
  %812 = vset.pattern.permute.xlu0 0
  %813 = vperm.xlu0 %812, %v759
  %v814 = vpop.permute.xlu0 %813
  %817 = vset.pattern.permute.xlu0 0
  %818 = vperm.xlu0 %817, %v760
  %v819 = vpop.permute.xlu0 %818
  %822 = vset.pattern.permute.xlu0 0
  %823 = vperm.xlu0 %822, %v761
  %v824 = vpop.permute.xlu0 %823
  %827 = vset.pattern.permute.xlu0 0
  %828 = vperm.xlu0 %827, %v762
  %v829 = vpop.permute.xlu0 %828
  %832 = vset.pattern.permute.xlu0 0
  %833 = vperm.xlu0 %832, %v763
  %v834 = vpop.permute.xlu0 %833
  %837 = vset.pattern.permute.xlu0 0
  %838 = vperm.xlu0 %837, %v764
  %v839 = vpop.permute.xlu0 %838
  %842 = vset.pattern.permute.xlu0 0
  %843 = vperm.xlu0 %842, %v765
  %v844 = vpop.permute.xlu0 %843
  %847 = vset.pattern.permute.xlu0 0
  %848 = vperm.xlu0 %847, %v766
  %v849 = vpop.permute.xlu0 %848
  %852 = vset.pattern.permute.xlu0 0
  %853 = vperm.xlu0 %852, %v767
  %v854 = vpop.permute.xlu0 %853
  %857 = vset.pattern.permute.xlu0 0
  %858 = vperm.xlu0 %857, %v768
  %v859 = vpop.permute.xlu0 %858
  %862 = vset.pattern.permute.xlu0 0
  %863 = vperm.xlu0 %862, %v769
  %v864 = vpop.permute.xlu0 %863
  %867 = vset.pattern.permute.xlu0 0
  %868 = vperm.xlu0 %867, %v770
  %v869 = vpop.permute.xlu0 %868
  %872 = vset.pattern.permute.xlu0 0
  %873 = vperm.xlu0 %872, %v771
  %v874 = vpop.permute.xlu0 %873
  %877 = vset.pattern.permute.xlu0 0
  %878 = vperm.xlu0 %877, %v772
  %v879 = vpop.permute.xlu0 %878
  %882 = vset.pattern.permute.xlu0 0
  %883 = vperm.xlu0 %882, %v773
  %v884 = vpop.permute.xlu0 %883
  %887 = vset.pattern.permute.xlu0 0
  %888 = vperm.xlu0 %887, %v774
  %v889 = vpop.permute.xlu0 %888
  %892 = vset.pattern.permute.xlu0 0
  %893 = vperm.xlu0 %892, %v775
  %v894 = vpop.permute.xlu0 %893
  %v896 = vmul.f32 %v658, %v779
  %v897 = vmul.f32 %v661, %v784
  %v898 = vmul.f32 %v666, %v789
  %v899 = vmul.f32 %v669, %v794
  %v900 = vmul.f32 %v674, %v799
  %v901 = vmul.f32 %v677, %v804
  %v902 = vmul.f32 %v682, %v809
  %v903 = vmul.f32 %v685, %v814
  %v904 = vmul.f32 %v690, %v819
  %v905 = vmul.f32 %v693, %v824
  %v906 = vmul.f32 %v698, %v829
  %v907 = vmul.f32 %v701, %v834
  %v908 = vmul.f32 %v706, %v839
  %v909 = vmul.f32 %v709, %v844
  %v910 = vmul.f32 %v714, %v849
  %v911 = vmul.f32 %v717, %v854
  %v912 = vmul.f32 %v722, %v859
  %v913 = vmul.f32 %v725, %v864
  %v914 = vmul.f32 %v730, %v869
  %v915 = vmul.f32 %v733, %v874
  %v916 = vmul.f32 %v738, %v879
  %v917 = vmul.f32 %v741, %v884
  %v918 = vmul.f32 %v746, %v889
  %v919 = vmul.f32 %v749, %v894
  %v920 = vadd.f32 %v896, %v897
  %v921 = vadd.f32 %v920, %v898
  %v922 = vadd.f32 %v921, %v899
  %v923 = vadd.f32 %v922, %v900
  %v924 = vadd.f32 %v923, %v901
  %v925 = vadd.f32 %v924, %v902
  %v926 = vadd.f32 %v925, %v903
  %v927 = vadd.f32 %v926, %v904
  %v928 = vadd.f32 %v927, %v905
  %v929 = vadd.f32 %v928, %v906
  %v930 = vadd.f32 %v929, %v907
  %v931 = vadd.f32 %v930, %v908
  %v932 = vadd.f32 %v931, %v909
  %v933 = vadd.f32 %v932, %v910
  %v934 = vadd.f32 %v933, %v911
  %v935 = vadd.f32 %v934, %v912
  %v936 = vadd.f32 %v935, %v913
  %v937 = vadd.f32 %v936, %v914
  %v938 = vadd.f32 %v937, %v915
  %v939 = vadd.f32 %v938, %v916
  %v940 = vadd.f32 %v939, %v917
  %v941 = vadd.f32 %v940, %v918
  %v942 = vadd.f32 %v941, %v919
  %v943 = vrot.slane %v942, 4
  %v944 = vadd.f32 %v942, %v943
  %v945 = vrot.slane %v944, 2
  %v946 = vadd.f32 %v944, %v945
  %v947 = vrot.slane %v946, 1
  %v948 = vadd.f32 %v946, %v947
  %v949 = vadd.f32 %v948, 0.0
  %951 = vrot.lane.b32.xlu0 %v948, 96
  %v952 = vpop.permute.xlu0 %951
  %v954 = vadd.f32 %v949, %v952
  %955 = vrot.lane.b32.xlu0 %v948, 64
  %v956 = vpop.permute.xlu0 %955
  %v958 = vadd.f32 %v954, %v956
  %959 = vrot.lane.b32.xlu0 %v948, 32
  %v960 = vpop.permute.xlu0 %959
  %v962 = vadd.f32 %v958, %v960
  %v963 = vmul.f32 %v962, 0.001953125
  %965 = vrot.lane.b32.xlu0 %v963, 32
  %v966 = vpop.permute.xlu0 %965
  %968 = vrot.lane.b32.xlu0 %v963, 64
  %v969 = vpop.permute.xlu0 %968
  %971 = vrot.lane.b32.xlu0 %v963, 96
  %v972 = vpop.permute.xlu0 %971
  %v974 = vsel %vm469, %v963, %v966
  %v975 = vsel %vm281, %v974, %v969
  %v976 = vsel %vm232, %v975, %v972
  %v977 = vlaneseq
  %v978 = vshrl.u32 %v977, 7
  %v979 = vsub.s32 0, %v978
  %v980 = vrot.slane %v976, %v979
  %v981 = vsub.f32 %v658, %v980
  %v982 = vsub.f32 %v661, %v980
  %v983 = vsub.f32 %v666, %v980
  %v984 = vsub.f32 %v669, %v980
  %v985 = vsub.f32 %v674, %v980
  %v986 = vsub.f32 %v677, %v980
  %v987 = vsub.f32 %v682, %v980
  %v988 = vsub.f32 %v685, %v980
  %v989 = vsub.f32 %v690, %v980
  %v990 = vsub.f32 %v693, %v980
  %v991 = vsub.f32 %v698, %v980
  %v992 = vsub.f32 %v701, %v980
  %v993 = vsub.f32 %v706, %v980
  %v994 = vsub.f32 %v709, %v980
  %v995 = vsub.f32 %v714, %v980
  %v996 = vsub.f32 %v717, %v980
  %v997 = vsub.f32 %v722, %v980
  %v998 = vsub.f32 %v725, %v980
  %v999 = vsub.f32 %v730, %v980
  %v1000 = vsub.f32 %v733, %v980
  %v1001 = vsub.f32 %v738, %v980
  %v1002 = vsub.f32 %v741, %v980
  %v1003 = vsub.f32 %v746, %v980
  %v1004 = vsub.f32 %v749, %v980
  %v1005 = vmul.f32 %v981, %v981
  %v1006 = vmul.f32 %v982, %v982
  %v1007 = vmul.f32 %v983, %v983
  %v1008 = vmul.f32 %v984, %v984
  %v1009 = vmul.f32 %v985, %v985
  %v1010 = vmul.f32 %v986, %v986
  %v1011 = vmul.f32 %v987, %v987
  %v1012 = vmul.f32 %v988, %v988
  %v1013 = vmul.f32 %v989, %v989
  %v1014 = vmul.f32 %v990, %v990
  %v1015 = vmul.f32 %v991, %v991
  %v1016 = vmul.f32 %v992, %v992
  %v1017 = vmul.f32 %v993, %v993
  %v1018 = vmul.f32 %v994, %v994
  %v1019 = vmul.f32 %v995, %v995
  %v1020 = vmul.f32 %v996, %v996
  %v1021 = vmul.f32 %v997, %v997
  %v1022 = vmul.f32 %v998, %v998
  %v1023 = vmul.f32 %v999, %v999
  %v1024 = vmul.f32 %v1000, %v1000
  %v1025 = vmul.f32 %v1001, %v1001
  %v1026 = vmul.f32 %v1002, %v1002
  %v1027 = vmul.f32 %v1003, %v1003
  %v1028 = vmul.f32 %v1004, %v1004
  %v1029 = vmul.f32 %v1005, %v779
  %v1030 = vmul.f32 %v1006, %v784
  %v1031 = vmul.f32 %v1007, %v789
  %v1032 = vmul.f32 %v1008, %v794
  %v1033 = vmul.f32 %v1009, %v799
  %v1034 = vmul.f32 %v1010, %v804
  %v1035 = vmul.f32 %v1011, %v809
  %v1036 = vmul.f32 %v1012, %v814
  %v1037 = vmul.f32 %v1013, %v819
  %v1038 = vmul.f32 %v1014, %v824
  %v1039 = vmul.f32 %v1015, %v829
  %v1040 = vmul.f32 %v1016, %v834
  %v1041 = vmul.f32 %v1017, %v839
  %v1042 = vmul.f32 %v1018, %v844
  %v1043 = vmul.f32 %v1019, %v849
  %v1044 = vmul.f32 %v1020, %v854
  %v1045 = vmul.f32 %v1021, %v859
  %v1046 = vmul.f32 %v1022, %v864
  %v1047 = vmul.f32 %v1023, %v869
  %v1048 = vmul.f32 %v1024, %v874
  %v1049 = vmul.f32 %v1025, %v879
  %v1050 = vmul.f32 %v1026, %v884
  %v1051 = vmul.f32 %v1027, %v889
  %v1052 = vmul.f32 %v1028, %v894
  %v1053 = vadd.f32 %v1029, %v1030
  %v1054 = vadd.f32 %v1053, %v1031
  %v1055 = vadd.f32 %v1054, %v1032
  %v1056 = vadd.f32 %v1055, %v1033
  %v1057 = vadd.f32 %v1056, %v1034
  %v1058 = vadd.f32 %v1057, %v1035
  %v1059 = vadd.f32 %v1058, %v1036
  %v1060 = vadd.f32 %v1059, %v1037
  %v1061 = vadd.f32 %v1060, %v1038
  %v1062 = vadd.f32 %v1061, %v1039
  %v1063 = vadd.f32 %v1062, %v1040
  %v1064 = vadd.f32 %v1063, %v1041
  %v1065 = vadd.f32 %v1064, %v1042
  %v1066 = vadd.f32 %v1065, %v1043
  %v1067 = vadd.f32 %v1066, %v1044
  %v1068 = vadd.f32 %v1067, %v1045
  %v1069 = vadd.f32 %v1068, %v1046
  %v1070 = vadd.f32 %v1069, %v1047
  %v1071 = vadd.f32 %v1070, %v1048
  %v1072 = vadd.f32 %v1071, %v1049
  %v1073 = vadd.f32 %v1072, %v1050
  %v1074 = vadd.f32 %v1073, %v1051
  %v1075 = vadd.f32 %v1074, %v1052
  %v1076 = vrot.slane %v1075, 4
  %v1077 = vadd.f32 %v1075, %v1076
  %v1078 = vrot.slane %v1077, 2
  %v1079 = vadd.f32 %v1077, %v1078
  %v1080 = vrot.slane %v1079, 1
  %v1081 = vadd.f32 %v1079, %v1080
  %v1082 = vadd.f32 %v1081, 0.0
  %1084 = vrot.lane.b32.xlu0 %v1081, 96
  %v1085 = vpop.permute.xlu0 %1084
  %v1087 = vadd.f32 %v1082, %v1085
  %1088 = vrot.lane.b32.xlu0 %v1081, 64
  %v1089 = vpop.permute.xlu0 %1088
  %v1091 = vadd.f32 %v1087, %v1089
  %1092 = vrot.lane.b32.xlu0 %v1081, 32
  %v1093 = vpop.permute.xlu0 %1092
  %v1095 = vadd.f32 %v1091, %v1093
  %v1096 = vmul.f32 %v1095, 0.001953125
  %v1097 = vld [vmem:[%s3] sm:$0x1]
  %v1098 = vadd.f32 %v1096, 1e-05
  %v1099 = vrsqrt.pop %v1098
  %v1100 = vmul.f32 %v1097, %v1099
  %v1101 = vld [vmem:[%s4] sm:$0x1]
  %v1102 = vmul.f32 %v963, %v1100
  %v1103 = vsub.f32 %v1101, %v1102
  %v1105 = vlaneseq
  %v1106 = vshrl.u32 %v1105, 7
  %v1107 = vsub.s32 0, %v1106
  %v1108 = vrot.slane %v1100, %v1107
  %1109 = vrot.lane.b32.xlu0 %v1108, 32
  %v1110 = vpop.permute.xlu0 %1109
  %1112 = vrot.lane.b32.xlu0 %v1108, 64
  %v1113 = vpop.permute.xlu0 %1112
  %1115 = vrot.lane.b32.xlu0 %v1108, 96
  %v1116 = vpop.permute.xlu0 %1115
  %v1118 = vsel %vm469, %v1100, %v1110
  %v1119 = vsel %vm281, %v1118, %v1113
  %v1120 = vsel %vm232, %v1119, %v1116
  %v1121 = vlaneseq
  %v1122 = vshrl.u32 %v1121, 7
  %v1123 = vsub.s32 0, %v1122
  %v1124 = vrot.slane %v1120, %v1123
  %v1125 = vmul.f32 %v658, %v1124
  %v1126 = vmul.f32 %v661, %v1124
  %v1127 = vmul.f32 %v666, %v1124
  %v1128 = vmul.f32 %v669, %v1124
  %v1129 = vmul.f32 %v674, %v1124
  %v1130 = vmul.f32 %v677, %v1124
  %v1131 = vmul.f32 %v682, %v1124
  %v1132 = vmul.f32 %v685, %v1124
  %v1133 = vmul.f32 %v690, %v1124
  %v1134 = vmul.f32 %v693, %v1124
  %v1135 = vmul.f32 %v698, %v1124
  %v1136 = vmul.f32 %v701, %v1124
  %v1137 = vmul.f32 %v706, %v1124
  %v1138 = vmul.f32 %v709, %v1124
  %v1139 = vmul.f32 %v714, %v1124
  %v1140 = vmul.f32 %v717, %v1124
  %v1141 = vmul.f32 %v722, %v1124
  %v1142 = vmul.f32 %v725, %v1124
  %v1143 = vmul.f32 %v730, %v1124
  %v1144 = vmul.f32 %v733, %v1124
  %v1145 = vmul.f32 %v738, %v1124
  %v1146 = vmul.f32 %v741, %v1124
  %v1147 = vmul.f32 %v746, %v1124
  %v1148 = vmul.f32 %v749, %v1124
  %v1150 = vlaneseq
  %v1151 = vshrl.u32 %v1150, 7
  %v1152 = vsub.s32 0, %v1151
  %v1153 = vrot.slane %v1103, %v1152
  %1154 = vrot.lane.b32.xlu0 %v1153, 32
  %v1155 = vpop.permute.xlu0 %1154
  %1157 = vrot.lane.b32.xlu0 %v1153, 64
  %v1158 = vpop.permute.xlu0 %1157
  %1160 = vrot.lane.b32.xlu0 %v1153, 96
  %v1161 = vpop.permute.xlu0 %1160
  %v1163 = vsel %vm469, %v1103, %v1155
  %v1164 = vsel %vm281, %v1163, %v1158
  %v1165 = vsel %vm232, %v1164, %v1161
  %v1166 = vlaneseq
  %v1167 = vshrl.u32 %v1166, 7
  %v1168 = vsub.s32 0, %v1167
  %v1169 = vrot.slane %v1165, %v1168
  %v1170 = vadd.f32 %v1125, %v1169
  %v1171 = vadd.f32 %v1126, %v1169
  %v1172 = vadd.f32 %v1127, %v1169
  %v1173 = vadd.f32 %v1128, %v1169
  %v1174 = vadd.f32 %v1129, %v1169
  %v1175 = vadd.f32 %v1130, %v1169
  %v1176 = vadd.f32 %v1131, %v1169
  %v1177 = vadd.f32 %v1132, %v1169
  %v1178 = vadd.f32 %v1133, %v1169
  %v1179 = vadd.f32 %v1134, %v1169
  %v1180 = vadd.f32 %v1135, %v1169
  %v1181 = vadd.f32 %v1136, %v1169
  %v1182 = vadd.f32 %v1137, %v1169
  %v1183 = vadd.f32 %v1138, %v1169
  %v1184 = vadd.f32 %v1139, %v1169
  %v1185 = vadd.f32 %v1140, %v1169
  %v1186 = vadd.f32 %v1141, %v1169
  %v1187 = vadd.f32 %v1142, %v1169
  %v1188 = vadd.f32 %v1143, %v1169
  %v1189 = vadd.f32 %v1144, %v1169
  %v1190 = vadd.f32 %v1145, %v1169
  %v1191 = vadd.f32 %v1146, %v1169
  %v1192 = vadd.f32 %v1147, %v1169
  %v1193 = vadd.f32 %v1148, %v1169
  %v1194 = vmax.f32 %v1170, 0.0
  %v1195 = vmax.f32 %v1171, 0.0
  %v1196 = vmax.f32 %v1172, 0.0
  %v1197 = vmax.f32 %v1173, 0.0
  %v1198 = vmax.f32 %v1174, 0.0
  %v1199 = vmax.f32 %v1175, 0.0
  %v1200 = vmax.f32 %v1176, 0.0
  %v1201 = vmax.f32 %v1177, 0.0
  %v1202 = vmax.f32 %v1178, 0.0
  %v1203 = vmax.f32 %v1179, 0.0
  %v1204 = vmax.f32 %v1180, 0.0
  %v1205 = vmax.f32 %v1181, 0.0
  %v1206 = vmax.f32 %v1182, 0.0
  %v1207 = vmax.f32 %v1183, 0.0
  %v1208 = vmax.f32 %v1184, 0.0
  %v1209 = vmax.f32 %v1185, 0.0
  %v1210 = vmax.f32 %v1186, 0.0
  %v1211 = vmax.f32 %v1187, 0.0
  %v1212 = vmax.f32 %v1188, 0.0
  %v1213 = vmax.f32 %v1189, 0.0
  %v1214 = vmax.f32 %v1190, 0.0
  %v1215 = vmax.f32 %v1191, 0.0
  %v1216 = vmax.f32 %v1192, 0.0
  %v1217 = vmax.f32 %v1193, 0.0
  %v1218 = vpack.c.bf16 %v1195, %v1194
  %v1219 = vpack.c.bf16 %v1197, %v1196
  %v1220 = vpack.c.bf16 %v1199, %v1198
  %v1221 = vpack.c.bf16 %v1201, %v1200
  %v1222 = vpack.c.bf16 %v1203, %v1202
  %v1223 = vpack.c.bf16 %v1205, %v1204
  %v1224 = vpack.c.bf16 %v1207, %v1206
  %v1225 = vpack.c.bf16 %v1209, %v1208
  %v1226 = vpack.c.bf16 %v1211, %v1210
  %v1227 = vpack.c.bf16 %v1213, %v1212
  %v1228 = vpack.c.bf16 %v1215, %v1214
  %v1229 = vpack.c.bf16 %v1217, %v1216
  %v1242 = vunpack.c.l.b16 %v1218
  %v1243 = vunpack.c.h.b16 %v1218
  %v1244 = vunpack.c.l.b16 %v1219
  %v1245 = vunpack.c.h.b16 %v1219
  %v1246 = vunpack.c.l.b16 %v1220
  %v1247 = vunpack.c.h.b16 %v1220
  %v1248 = vunpack.c.l.b16 %v1221
  %v1249 = vunpack.c.h.b16 %v1221
  %v1250 = vunpack.c.l.b16 %v1222
  %v1251 = vunpack.c.h.b16 %v1222
  %v1252 = vunpack.c.l.b16 %v1223
  %v1253 = vunpack.c.h.b16 %v1223
  %v1254 = vunpack.c.l.b16 %v1224
  %v1255 = vunpack.c.h.b16 %v1224
  %v1256 = vunpack.c.l.b16 %v1225
  %v1257 = vunpack.c.h.b16 %v1225
  %v1258 = vunpack.c.l.b16 %v1226
  %v1259 = vunpack.c.h.b16 %v1226
  %v1260 = vunpack.c.l.b16 %v1227
  %v1261 = vunpack.c.h.b16 %v1227
  %v1262 = vunpack.c.l.b16 %v1228
  %v1263 = vunpack.c.h.b16 %v1228
  %v1264 = vunpack.c.l.b16 %v1229
  %v1265 = vunpack.c.h.b16 %v1229
  %v1266 = vpack.c.b16 %v1242, %v1242
  %v1267 = vpack.c.b16 %v1243, %v1243
  %v1268 = vpack.c.b16 %v1244, %v1244
  %v1269 = vpack.c.b16 %v1245, %v1245
  %v1270 = vpack.c.b16 %v1246, %v1246
  %v1271 = vpack.c.b16 %v1247, %v1247
  %v1272 = vpack.c.b16 %v1248, %v1248
  %v1273 = vpack.c.b16 %v1249, %v1249
  %v1274 = vpack.c.b16 %v1250, %v1250
  %v1275 = vpack.c.b16 %v1251, %v1251
  %v1276 = vpack.c.b16 %v1252, %v1252
  %v1277 = vpack.c.b16 %v1253, %v1253
  %v1278 = vpack.c.b16 %v1254, %v1254
  %v1279 = vpack.c.b16 %v1255, %v1255
  %v1280 = vpack.c.b16 %v1256, %v1256
  %v1281 = vpack.c.b16 %v1257, %v1257
  %v1282 = vpack.c.b16 %v1258, %v1258
  %v1283 = vpack.c.b16 %v1259, %v1259
  %v1284 = vpack.c.b16 %v1260, %v1260
  %v1285 = vpack.c.b16 %v1261, %v1261
  %v1286 = vpack.c.b16 %v1262, %v1262
  %v1287 = vpack.c.b16 %v1263, %v1263
  %v1288 = vpack.c.b16 %v1264, %v1264
  %v1289 = vpack.c.b16 %v1265, %v1265
  %1314 = vst [vmem:[%s6] sm:$0xf] %v1266
  %1315 = vst [vmem:[%s6 + $0x4] sm:$0xf] %v1267
  %1316 = vst [vmem:[%s6 + $0x8] sm:$0xf] %v1268
  %1317 = vst [vmem:[%s6 + $0xc] sm:$0xf] %v1269
  %1318 = vst [vmem:[%s6 + $0x10] sm:$0xf] %v1270
  %1319 = vst [vmem:[%s6 + $0x14] sm:$0xf] %v1271
  %1320 = vst [vmem:[%s6 + $0x18] sm:$0xf] %v1272
  %1321 = vst [vmem:[%s6 + $0x1c] sm:$0xf] %v1273
  %1322 = vst [vmem:[%s6 + $0x20] sm:$0xf] %v1274
  %1323 = vst [vmem:[%s6 + $0x24] sm:$0xf] %v1275
  %1324 = vst [vmem:[%s6 + $0x28] sm:$0xf] %v1276
  %1325 = vst [vmem:[%s6 + $0x2c] sm:$0xf] %v1277
  %1326 = vst [vmem:[%s6 + $0x30] sm:$0xf] %v1278
  %1327 = vst [vmem:[%s6 + $0x34] sm:$0xf] %v1279
  %1328 = vst [vmem:[%s6 + $0x38] sm:$0xf] %v1280
  %1329 = vst [vmem:[%s6 + $0x3c] sm:$0xf] %v1281
  %1330 = vst [vmem:[%s6 + $0x40] sm:$0xf] %v1282
  %1331 = vst [vmem:[%s6 + $0x44] sm:$0xf] %v1283
  %1332 = vst [vmem:[%s6 + $0x48] sm:$0xf] %v1284
  %1333 = vst [vmem:[%s6 + $0x4c] sm:$0xf] %v1285
  %1334 = vst [vmem:[%s6 + $0x50] sm:$0xf] %v1286
  %1335 = vst [vmem:[%s6 + $0x54] sm:$0xf] %v1287
  %1336 = vst [vmem:[%s6 + $0x58] sm:$0xf] %v1288
  %1337 = vst [vmem:[%s6 + $0x5c] sm:$0xf] %v1289
  // Predicated region
  $region26: #{_lambda_.6} parent=0 // pred_check
    _
  $region27: #{_lambda_.6} parent=0 // pred_check_branch
    %1339 = sbr.rel (0) target = $region29
  $region28: #{_lambda_.6} parent=0 // pred_region
    _
  $region29: #{_lambda_.6} parent=0 // pred_fallthru
    _
  // Predicated region
  $region30: #{_lambda_.6} parent=0 // pred_check
    _
  $region31: #{_lambda_.6} parent=0 // pred_check_branch
    %1341 = sbr.rel (0) target = $region33
  $region32: #{_lambda_.6} parent=0 // pred_region
    _
  $region33: #{_lambda_.6} parent=0 // pred_fallthru
    _

// kernel: _lambda_.7
$region0: #{_lambda_.7}
  #allocation0 [shape = 'u32[]', space=smem, size = 0x4, offset = 0x4, fixed_abs, tag = 'smem constant byte address 0x4 - core index']
  #allocation1 [shape = 'u32[144,128]{1,0:T(1,128)}', space=vmem, size = 0x12000, scoped, tag = 'internal scratch']
  %s0 = inlined_call_operand.vmem [shape: bf16[2,344,48], index: 0, kind: input, shape index: {}]
  %s1 = inlined_call_operand.vmem [shape: bf16[144,128], index: 1, kind: input, shape index: {}]
  %s2 = inlined_call_operand.vmem [shape: f32[1,128], index: 2, kind: input, shape index: {}]
  %s3 = inlined_call_operand.vmem [shape: bf16[2,288,128], index: 3, kind: output, shape index: {}]
  %s4 = sld [smem:[#allocation0]]
  $region45: #{_lambda_.7} parent=0
    _
  %s6 = ssub.s32 1, %s4
  %s7 = scalar_select 0, %s6, %s4
  loop: start=0, step=1, limit=4
  $region2: #{_lambda_.7} parent=0 // loop_pre_header
    _
  $region3: #{_lambda_.7} parent=0 // loop_header
    %s9 = sphi 0, %s13
    %p10 = scmp.ge.s32.totalorder %s9, 4
    %s19 = sphi 0, %s21
    %s22 = sphi 0, %s19
    %s23 = sphi 0, %s22
    %s39 = sphi 0, %s23
    %s43 = sphi 0, %s43
    %s45 = sphi 0, %s43
    %s46 = sphi 0, %s45
    %s60 = sphi 0, %s46
    %s64 = sphi 0, %s64
    %s66 = sphi 0, %s64
    %s67 = sphi 0, %s66
    %s81 = sphi 0, %s67
    %s87 = sphi 0, %s89
    %s90 = sphi 0, %s87
    %s91 = sphi 0, %s90
    %s107 = sphi 0, %s91
  $region4: #{_lambda_.7} parent=0 // loop_header_branch
    %12 = sbr.rel (%p10) target = $region8
  $region5: #{_lambda_.7} parent=0 // loop_body
    %s14 = ssub.s32 %s9, 1
    %s15 = ssub.s32 %s9, 2
    %s16 = sadd.s32 %s9, 1
    %s17 = ssub.s32 %s9, %s16
    %p18 = scmp.eq.s32.totalorder %s17, 0
    %s20 = sadd.s32 %s19, 1
    %s21 = scalar_select %p18, %s19, %s20
    %p24 = pneg %p18
    %p25 = scmp.eq.s32.totalorder %s9, 1
    %p26 = por %p24, %p25
    %p27 = scmp.ne.s32.totalorder %s19, %s22
    %p28 = scmp.eq.s32.totalorder %s9, 0
    %p29 = por %p27, %p28
    %p30 = scmp.ne.s32.totalorder %s19, %s22
    %p31 = scmp.eq.s32.totalorder %s14, 1
    %p32 = por %p30, %p31
    %p33 = scmp.ne.s32.totalorder %s22, %s23
    %p34 = scmp.eq.s32.totalorder %s14, 0
    %p35 = por %p33, %p34
    %p36 = scmp.ne.s32.totalorder %s22, %s23
    %p37 = scmp.eq.s32.totalorder %s15, 1
    %p38 = por %p36, %p37
    %p40 = scmp.ne.s32.totalorder %s23, %s39
    %p41 = scmp.eq.s32.totalorder %s15, 0
    %p42 = por %p40, %p41
    %s44 = sadd.s32 %s43, 1
    %p47 = scmp.eq.s32.totalorder %s9, 1
    %p48 = scmp.ne.s32.totalorder %s43, %s45
    %p49 = scmp.eq.s32.totalorder %s9, 0
    %p50 = por %p48, %p49
    %p51 = scmp.ne.s32.totalorder %s43, %s45
    %p52 = scmp.eq.s32.totalorder %s14, 1
    %p53 = por %p51, %p52
    %p54 = scmp.ne.s32.totalorder %s45, %s46
    %p55 = scmp.eq.s32.totalorder %s14, 0
    %p56 = por %p54, %p55
    %p57 = scmp.ne.s32.totalorder %s45, %s46
    %p58 = scmp.eq.s32.totalorder %s15, 1
    %p59 = por %p57, %p58
    %p61 = scmp.ne.s32.totalorder %s46, %s60
    %p62 = scmp.eq.s32.totalorder %s15, 0
    %p63 = por %p61, %p62
    %s65 = sadd.s32 %s64, 1
    %p68 = scmp.eq.s32.totalorder %s9, 1
    %p69 = scmp.ne.s32.totalorder %s64, %s66
    %p70 = scmp.eq.s32.totalorder %s9, 0
    %p71 = por %p69, %p70
    %p72 = scmp.ne.s32.totalorder %s64, %s66
    %p73 = scmp.eq.s32.totalorder %s14, 1
    %p74 = por %p72, %p73
    %p75 = scmp.ne.s32.totalorder %s66, %s67
    %p76 = scmp.eq.s32.totalorder %s14, 0
    %p77 = por %p75, %p76
    %p78 = scmp.ne.s32.totalorder %s66, %s67
    %p79 = scmp.eq.s32.totalorder %s15, 1
    %p80 = por %p78, %p79
    %p82 = scmp.ne.s32.totalorder %s67, %s81
    %p83 = scmp.eq.s32.totalorder %s15, 0
    %p84 = por %p82, %p83
    %s85 = ssub.s32 %s9, %s16
    %p86 = scmp.eq.s32.totalorder %s85, 0
    %s88 = sadd.s32 %s87, 1
    %s89 = scalar_select %p86, %s87, %s88
    %p92 = pneg %p86
    %p93 = scmp.eq.s32.totalorder %s9, 1
    %p94 = por %p92, %p93
    %p95 = scmp.ne.s32.totalorder %s87, %s90
    %p96 = scmp.eq.s32.totalorder %s9, 0
    %p97 = por %p95, %p96
    %p98 = scmp.ne.s32.totalorder %s87, %s90
    %p99 = scmp.eq.s32.totalorder %s14, 1
    %p100 = por %p98, %p99
    %p101 = scmp.ne.s32.totalorder %s90, %s91
    %p102 = scmp.eq.s32.totalorder %s14, 0
    %p103 = por %p101, %p102
    %p104 = scmp.ne.s32.totalorder %s90, %s91
    %p105 = scmp.eq.s32.totalorder %s15, 1
    %p106 = por %p104, %p105
    %p108 = scmp.ne.s32.totalorder %s91, %s107
    %p109 = scmp.eq.s32.totalorder %s15, 0
    %p110 = por %p108, %p109
    %p111 = scmp.le.s32.totalorder 1, %s9
    %p112 = scmp.lt.s32.totalorder %s9, 3
    %p113 = pnand %p111, %p112
    %p114 = pneg %p113
    // Predicated region
    $region9: #{_lambda_.7} parent=5 // pred_check
      _
    $region10: #{_lambda_.7} parent=5 // pred_check_branch
      %116 = sbr.rel (%p113) target = $region12
    $region11: #{_lambda_.7} parent=5 // pred_region
      %s117 = ssub.s32 %s9, 1
      // Predicated region
      $region13: #{_lambda_.7} parent=11 // pred_check
        %p118 = pneg %p56
      $region14: #{_lambda_.7} parent=11 // pred_check_branch
        %120 = sbr.rel (%p118) target = $region16
      $region15: #{_lambda_.7} parent=11 // pred_region
        _
      $region16: #{_lambda_.7} parent=11 // pred_fallthru
        _
      // Predicated region
      $region17: #{_lambda_.7} parent=11 // pred_check
        %p121 = pneg %p77
      $region18: #{_lambda_.7} parent=11 // pred_check_branch
        %123 = sbr.rel (%p121) target = $region20
      $region19: #{_lambda_.7} parent=11 // pred_region
        _
      $region20: #{_lambda_.7} parent=11 // pred_fallthru
        _
    $region12: #{_lambda_.7} parent=5 // pred_fallthru
      _
    %p124 = scmp.lt.s32.totalorder %s9, 2
    // Predicated region
    $region21: #{_lambda_.7} parent=5 // pred_check
      %p125 = pneg %p124
    $region22: #{_lambda_.7} parent=5 // pred_check_branch
      %127 = sbr.rel (%p125) target = $region24
    $region23: #{_lambda_.7} parent=5 // pred_region
      // Predicated region
      $region25: #{_lambda_.7} parent=23 // pred_check
        %p128 = pneg %p29
      $region26: #{_lambda_.7} parent=23 // pred_check_branch
        %130 = sbr.rel (%p128) target = $region28
      $region27: #{_lambda_.7} parent=23 // pred_region
        %p131 = scmp.lt.s32.totalorder %s9, 1
        %s132 = scalar_select %p131, %s9, 1
        %s133 = smul.addr %s132, 43
        %s134 = smul.addr %s133, 4
        %s135 = scalar_lea.vmem %s0, %s134
      $region28: #{_lambda_.7} parent=23 // pred_fallthru
        _
    $region24: #{_lambda_.7} parent=5 // pred_fallthru
      _
    %p136 = scmp.le.s32.totalorder 1, %s9
    %p137 = scmp.lt.s32.totalorder %s9, 3
    %p138 = pnand %p136, %p137
    %p139 = pneg %p138
    // Predicated region
    $region29: #{_lambda_.7} parent=5 // pred_check
      _
    $region30: #{_lambda_.7} parent=5 // pred_check_branch
      %141 = sbr.rel (%p138) target = $region32
    $region31: #{_lambda_.7} parent=5 // pred_region
      %s142 = ssub.s32 %s9, 1
      %p143 = scmp.lt.s32.totalorder %s14, 1
      %s144 = scalar_select %p143, %s14, 1
      %s145 = smul.addr %s144, 43
      %s146 = smul.addr %s145, 4
      %s147 = scalar_lea.vmem %s0, %s146
      %p148 = pneg %p35
      %p149 = pneg %p32
      %p150 = pneg %p56
      %p151 = pneg %p53
      %p152 = pneg %p77
      %p153 = pneg %p74
      %p154 = pneg %p103
      %p155 = pneg %p100
      %p156 = scmp.lt.s32.totalorder %s14, 1
      %s157 = scalar_select %p156, %s14, 1
      %s158 = smul.addr %s157, 36
      %s159 = smul.addr %s158, 4
      %s160 = scalar_lea.vmem %s3, %s159
      %p161 = scmp.lt.s32.totalorder %s14, 1
      %s162 = scalar_select %p161, %s14, 1
      %s163 = smul.addr %s162, 43
      %s164 = smul.addr %s163, 4
      %s165 = scalar_lea.vmem %s0, %s164
      %p166 = scmp.lt.s32.totalorder %s14, 1
      %s167 = scalar_select %p166, %s14, 1
      %s168 = smul.addr %s167, 36
      %s169 = smul.addr %s168, 4
      %s170 = scalar_lea.vmem %s3, %s169
      %v172 = vld [vmem:[%s165] sm:$0xf]
      %v173 = vld [vmem:[%s165 + $0x4] sm:$0xf]
      %v174 = vld [vmem:[%s165 + $0x8] sm:$0xf]
      %v175 = vld [vmem:[%s165 + $0xc] sm:$0xf]
      %v176 = vld [vmem:[%s165 + $0x10] sm:$0xf]
      %v177 = vld [vmem:[%s165 + $0x14] sm:$0xf]
      %v178 = vld [vmem:[%s165 + $0x18] sm:$0xf]
      %v179 = vld [vmem:[%s165 + $0x1c] sm:$0xf]
      %v180 = vld [vmem:[%s165 + $0x20] sm:$0xf]
      %v181 = vld [vmem:[%s165 + $0x24] sm:$0xf]
      %v182 = vld [vmem:[%s165 + $0x28] sm:$0xf]
      %v183 = vld [vmem:[%s165 + $0x2c] sm:$0xf]
      %v184 = vld [vmem:[%s165 + $0x30] sm:$0xf]
      %v185 = vld [vmem:[%s165 + $0x34] sm:$0xf]
      %v186 = vld [vmem:[%s165 + $0x38] sm:$0xf]
      %v187 = vld [vmem:[%s165 + $0x3c] sm:$0xf]
      %v188 = vld [vmem:[%s165 + $0x40] sm:$0xf]
      %v189 = vld [vmem:[%s165 + $0x44] sm:$0xf]
      %v190 = vld [vmem:[%s165 + $0x48] sm:$0xf]
      %v191 = vld [vmem:[%s165 + $0x4c] sm:$0xf]
      %v192 = vld [vmem:[%s165 + $0x50] sm:$0xf]
      %v193 = vld [vmem:[%s165 + $0x54] sm:$0xf]
      %v194 = vld [vmem:[%s165 + $0x58] sm:$0xf]
      %v195 = vld [vmem:[%s165 + $0x5c] sm:$0xf]
      %v196 = vld [vmem:[%s165 + $0x60] sm:$0xf]
      %v197 = vld [vmem:[%s165 + $0x64] sm:$0xf]
      %v198 = vld [vmem:[%s165 + $0x68] sm:$0xf]
      %v199 = vld [vmem:[%s165 + $0x6c] sm:$0xf]
      %v200 = vld [vmem:[%s165 + $0x70] sm:$0xf]
      %v201 = vld [vmem:[%s165 + $0x74] sm:$0xf]
      %v202 = vld [vmem:[%s165 + $0x78] sm:$0xf]
      %v203 = vld [vmem:[%s165 + $0x7c] sm:$0xf]
      %v204 = vld [vmem:[%s165 + $0x80] sm:$0xf]
      %v205 = vld [vmem:[%s165 + $0x84] sm:$0xf]
      %v206 = vld [vmem:[%s165 + $0x88] sm:$0xf]
      %v207 = vld [vmem:[%s165 + $0x8c] sm:$0xf]
      %v208 = vld [vmem:[%s165 + $0x90] sm:$0xf]
      %v209 = vld [vmem:[%s165 + $0x94] sm:$0xf]
      %v210 = vld [vmem:[%s165 + $0x98] sm:$0xf]
      %v211 = vld [vmem:[%s165 + $0x9c] sm:$0xf]
      %v212 = vld [vmem:[%s165 + $0xa0] sm:$0xf]
      %v249 = vunpack.c.l.b16 %v172
      %v250 = vunpack.c.l.b16 %v173
      %v251 = vunpack.c.l.b16 %v174
      %v252 = vunpack.c.l.b16 %v175
      %v253 = vunpack.c.l.b16 %v176
      %v254 = vunpack.c.l.b16 %v177
      %v255 = vunpack.c.l.b16 %v178
      %v256 = vunpack.c.l.b16 %v179
      %v257 = vunpack.c.l.b16 %v180
      %v258 = vunpack.c.l.b16 %v181
      %v259 = vunpack.c.l.b16 %v182
      %v260 = vunpack.c.l.b16 %v183
      %v261 = vunpack.c.l.b16 %v184
      %v262 = vunpack.c.l.b16 %v185
      %v263 = vunpack.c.l.b16 %v186
      %v264 = vunpack.c.l.b16 %v187
      %v265 = vunpack.c.l.b16 %v188
      %v266 = vunpack.c.l.b16 %v189
      %v267 = vunpack.c.l.b16 %v190
      %v268 = vunpack.c.l.b16 %v191
      %v269 = vunpack.c.l.b16 %v192
      %v270 = vunpack.c.l.b16 %v193
      %v271 = vunpack.c.l.b16 %v194
      %v272 = vunpack.c.l.b16 %v195
      %v273 = vunpack.c.l.b16 %v196
      %v274 = vunpack.c.l.b16 %v197
      %v275 = vunpack.c.l.b16 %v198
      %v276 = vunpack.c.l.b16 %v199
      %v277 = vunpack.c.l.b16 %v200
      %v278 = vunpack.c.l.b16 %v201
      %v279 = vunpack.c.l.b16 %v202
      %v280 = vunpack.c.l.b16 %v203
      %v281 = vunpack.c.l.b16 %v204
      %v282 = vunpack.c.l.b16 %v205
      %v283 = vunpack.c.l.b16 %v206
      %v284 = vunpack.c.l.b16 %v207
      %v285 = vpack.c.b16 %v250, %v249
      %v286 = vpack.c.b16 %v252, %v251
      %v287 = vpack.c.b16 %v254, %v253
      %v288 = vpack.c.b16 %v256, %v255
      %v289 = vpack.c.b16 %v258, %v257
      %v290 = vpack.c.b16 %v260, %v259
      %v291 = vpack.c.b16 %v262, %v261
      %v292 = vpack.c.b16 %v264, %v263
      %v293 = vpack.c.b16 %v266, %v265
      %v294 = vpack.c.b16 %v268, %v267
      %v295 = vpack.c.b16 %v270, %v269
      %v296 = vpack.c.b16 %v272, %v271
      %v297 = vpack.c.b16 %v274, %v273
      %v298 = vpack.c.b16 %v276, %v275
      %v299 = vpack.c.b16 %v278, %v277
      %v300 = vpack.c.b16 %v280, %v279
      %v301 = vpack.c.b16 %v282, %v281
      %v302 = vpack.c.b16 %v284, %v283
      %v306 = vunpack.c.l.b16 %v208
      %v307 = vunpack.c.l.b16 %v209
      %v308 = vunpack.c.l.b16 %v210
      %v309 = vpack.c.b16 %v307, %v306
      %v310 = vpack.c.b16 %v308, %v308
      %vm311 = vcmask 1046528
      %v312 = vrot.slane %v286, 1
      %v313 = vrot.slane %v287, 1
      %v314 = vsel %vm311, %v312, %v313
      %v315 = vrot.slane %v288, 1
      %v316 = vsel %vm311, %v313, %v315
      %v317 = vrot.slane %v289, 1
      %v318 = vsel %vm311, %v315, %v317
      %v319 = vrot.slane %v290, 1
      %v320 = vsel %vm311, %v317, %v319
      %v321 = vrot.slane %v291, 1
      %v322 = vsel %vm311, %v319, %v321
      %v323 = vrot.slane %v292, 1
      %v324 = vsel %vm311, %v321, %v323
      %v325 = vrot.slane %v293, 1
      %v326 = vsel %vm311, %v323, %v325
      %v327 = vrot.slane %v294, 1
      %v328 = vsel %vm311, %v325, %v327
      %v329 = vrot.slane %v295, 1
      %v330 = vsel %vm311, %v327, %v329
      %v331 = vrot.slane %v296, 1
      %v332 = vsel %vm311, %v329, %v331
      %v333 = vrot.slane %v297, 1
      %v334 = vsel %vm311, %v331, %v333
      %v335 = vrot.slane %v298, 1
      %v336 = vsel %vm311, %v333, %v335
      %v337 = vrot.slane %v299, 1
      %v338 = vsel %vm311, %v335, %v337
      %v339 = vrot.slane %v300, 1
      %v340 = vsel %vm311, %v337, %v339
      %v341 = vrot.slane %v301, 1
      %v342 = vsel %vm311, %v339, %v341
      %v343 = vrot.slane %v302, 1
      %v344 = vsel %vm311, %v341, %v343
      %v345 = vrot.slane %v309, 1
      %v346 = vsel %vm311, %v343, %v345
      %v347 = vrot.slane %v310, 1
      %v348 = vsel %vm311, %v345, %v347
      %349 = vrot.lane.b32.xlu0 %v314, 48
      %v350 = vpop.permute.xlu0 %349
      %351 = vrot.lane.b32.xlu0 %v316, 48
      %v352 = vpop.permute.xlu0 %351
      %353 = vrot.lane.b32.xlu0 %v318, 48
      %v354 = vpop.permute.xlu0 %353
      %355 = vrot.lane.b32.xlu0 %v320, 48
      %v356 = vpop.permute.xlu0 %355
      %357 = vrot.lane.b32.xlu0 %v322, 48
      %v358 = vpop.permute.xlu0 %357
      %359 = vrot.lane.b32.xlu0 %v324, 48
      %v360 = vpop.permute.xlu0 %359
      %361 = vrot.lane.b32.xlu0 %v326, 48
      %v362 = vpop.permute.xlu0 %361
      %363 = vrot.lane.b32.xlu0 %v328, 48
      %v364 = vpop.permute.xlu0 %363
      %365 = vrot.lane.b32.xlu0 %v330, 48
      %v366 = vpop.permute.xlu0 %365
      %367 = vrot.lane.b32.xlu0 %v332, 48
      %v368 = vpop.permute.xlu0 %367
      %369 = vrot.lane.b32.xlu0 %v334, 48
      %v370 = vpop.permute.xlu0 %369
      %371 = vrot.lane.b32.xlu0 %v336, 48
      %v372 = vpop.permute.xlu0 %371
      %373 = vrot.lane.b32.xlu0 %v338, 48
      %v374 = vpop.permute.xlu0 %373
      %375 = vrot.lane.b32.xlu0 %v340, 48
      %v376 = vpop.permute.xlu0 %375
      %377 = vrot.lane.b32.xlu0 %v342, 48
      %v378 = vpop.permute.xlu0 %377
      %379 = vrot.lane.b32.xlu0 %v344, 48
      %v380 = vpop.permute.xlu0 %379
      %381 = vrot.lane.b32.xlu0 %v346, 48
      %v382 = vpop.permute.xlu0 %381
      %383 = vrot.lane.b32.xlu0 %v348, 48
      %v384 = vpop.permute.xlu0 %383
      %v387 = vunpack.c.l.b16 %v211
      %v388 = vunpack.c.l.b16 %v212
      %v389 = vpack.c.b16 %v387, %v308
      %v390 = vpack.c.b16 %v388, %v388
      %vm391 = vcmask 1045504
      %v392 = vrot.slane %v287, 2
      %v393 = vrot.slane %v288, 2
      %v394 = vsel %vm391, %v392, %v393
      %v395 = vrot.slane %v289, 2
      %v396 = vsel %vm391, %v393, %v395
      %v397 = vrot.slane %v290, 2
      %v398 = vsel %vm391, %v395, %v397
      %v399 = vrot.slane %v291, 2
      %v400 = vsel %vm391, %v397, %v399
      %v401 = vrot.slane %v292, 2
      %v402 = vsel %vm391, %v399, %v401
      %v403 = vrot.slane %v293, 2
      %v404 = vsel %vm391, %v401, %v403
      %v405 = vrot.slane %v294, 2
      %v406 = vsel %vm391, %v403, %v405
      %v407 = vrot.slane %v295, 2
      %v408 = vsel %vm391, %v405, %v407
      %v409 = vrot.slane %v296, 2
      %v410 = vsel %vm391, %v407, %v409
      %v411 = vrot.slane %v297, 2
      %v412 = vsel %vm391, %v409, %v411
      %v413 = vrot.slane %v298, 2
      %v414 = vsel %vm391, %v411, %v413
      %v415 = vrot.slane %v299, 2
      %v416 = vsel %vm391, %v413, %v415
      %v417 = vrot.slane %v300, 2
      %v418 = vsel %vm391, %v415, %v417
      %v419 = vrot.slane %v301, 2
      %v420 = vsel %vm391, %v417, %v419
      %v421 = vrot.slane %v302, 2
      %v422 = vsel %vm391, %v419, %v421
      %v423 = vrot.slane %v309, 2
      %v424 = vsel %vm391, %v421, %v423
      %v425 = vrot.slane %v389, 2
      %v426 = vsel %vm391, %v423, %v425
      %v427 = vrot.slane %v390, 2
      %v428 = vsel %vm391, %v425, %v427
      %429 = vrot.lane.b32.xlu0 %v394, 96
      %v430 = vpop.permute.xlu0 %429
      %431 = vrot.lane.b32.xlu0 %v396, 96
      %v432 = vpop.permute.xlu0 %431
      %433 = vrot.lane.b32.xlu0 %v398, 96
      %v434 = vpop.permute.xlu0 %433
      %435 = vrot.lane.b32.xlu0 %v400, 96
      %v436 = vpop.permute.xlu0 %435
      %437 = vrot.lane.b32.xlu0 %v402, 96
      %v438 = vpop.permute.xlu0 %437
      %439 = vrot.lane.b32.xlu0 %v404, 96
      %v440 = vpop.permute.xlu0 %439
      %441 = vrot.lane.b32.xlu0 %v406, 96
      %v442 = vpop.permute.xlu0 %441
      %443 = vrot.lane.b32.xlu0 %v408, 96
      %v444 = vpop.permute.xlu0 %443
      %445 = vrot.lane.b32.xlu0 %v410, 96
      %v446 = vpop.permute.xlu0 %445
      %447 = vrot.lane.b32.xlu0 %v412, 96
      %v448 = vpop.permute.xlu0 %447
      %449 = vrot.lane.b32.xlu0 %v414, 96
      %v450 = vpop.permute.xlu0 %449
      %451 = vrot.lane.b32.xlu0 %v416, 96
      %v452 = vpop.permute.xlu0 %451
      %453 = vrot.lane.b32.xlu0 %v418, 96
      %v454 = vpop.permute.xlu0 %453
      %455 = vrot.lane.b32.xlu0 %v420, 96
      %v456 = vpop.permute.xlu0 %455
      %457 = vrot.lane.b32.xlu0 %v422, 96
      %v458 = vpop.permute.xlu0 %457
      %459 = vrot.lane.b32.xlu0 %v424, 96
      %v460 = vpop.permute.xlu0 %459
      %461 = vrot.lane.b32.xlu0 %v426, 96
      %v462 = vpop.permute.xlu0 %461
      %463 = vrot.lane.b32.xlu0 %v428, 96
      %v464 = vpop.permute.xlu0 %463
      %vm465 = vcmask 392192
      %v468 = vsel %vm465, %v285, %v350
      %v471 = vsel %vm465, %v286, %v352
      %v474 = vsel %vm465, %v287, %v354
      %v477 = vsel %vm465, %v288, %v356
      %v480 = vsel %vm465, %v289, %v358
      %v483 = vsel %vm465, %v290, %v360
      %v486 = vsel %vm465, %v291, %v362
      %v489 = vsel %vm465, %v292, %v364
      %v492 = vsel %vm465, %v293, %v366
      %v495 = vsel %vm465, %v294, %v368
      %v498 = vsel %vm465, %v295, %v370
      %v501 = vsel %vm465, %v296, %v372
      %v504 = vsel %vm465, %v297, %v374
      %v507 = vsel %vm465, %v298, %v376
      %v510 = vsel %vm465, %v299, %v378
      %v513 = vsel %vm465, %v300, %v380
      %v516 = vsel %vm465, %v301, %v382
      %v519 = vsel %vm465, %v302, %v384
      %vm520 = vcmask 785408
      %v522 = vsel %vm520, %v468, %v430
      %v525 = vsel %vm520, %v471, %v432
      %v528 = vsel %vm520, %v474, %v434
      %v531 = vsel %vm520, %v477, %v436
      %v534 = vsel %vm520, %v480, %v438
      %v537 = vsel %vm520, %v483, %v440
      %v540 = vsel %vm520, %v486, %v442
      %v543 = vsel %vm520, %v489, %v444
      %v546 = vsel %vm520, %v492, %v446
      %v549 = vsel %vm520, %v495, %v448
      %v552 = vsel %vm520, %v498, %v450
      %v555 = vsel %vm520, %v501, %v452
      %v558 = vsel %vm520, %v504, %v454
      %v561 = vsel %vm520, %v507, %v456
      %v564 = vsel %vm520, %v510, %v458
      %v567 = vsel %vm520, %v513, %v460
      %v570 = vsel %vm520, %v516, %v462
      %v573 = vsel %vm520, %v519, %v464
      %v575 = vld [vmem:[%s1] sm:$0xf]
      %v576 = vld [vmem:[%s1 + $0x4] sm:$0xf]
      %v577 = vld [vmem:[%s1 + $0x8] sm:$0xf]
      %v578 = vld [vmem:[%s1 + $0xc] sm:$0xf]
      %v579 = vld [vmem:[%s1 + $0x10] sm:$0xf]
      %v580 = vld [vmem:[%s1 + $0x14] sm:$0xf]
      %v581 = vld [vmem:[%s1 + $0x18] sm:$0xf]
      %v582 = vld [vmem:[%s1 + $0x1c] sm:$0xf]
      %v583 = vld [vmem:[%s1 + $0x20] sm:$0xf]
      %v584 = vld [vmem:[%s1 + $0x24] sm:$0xf]
      %v585 = vld [vmem:[%s1 + $0x28] sm:$0xf]
      %v586 = vld [vmem:[%s1 + $0x2c] sm:$0xf]
      %v587 = vld [vmem:[%s1 + $0x30] sm:$0xf]
      %v588 = vld [vmem:[%s1 + $0x34] sm:$0xf]
      %v589 = vld [vmem:[%s1 + $0x38] sm:$0xf]
      %v590 = vld [vmem:[%s1 + $0x3c] sm:$0xf]
      %v591 = vld [vmem:[%s1 + $0x40] sm:$0xf]
      %v592 = vld [vmem:[%s1 + $0x44] sm:$0xf]
      %v593 = vld [vmem:[%s2] sm:$0x1]
      %v595 = vlaneseq
      %v596 = vshrl.u32 %v595, 7
      %v597 = vsub.s32 0, %v596
      %v598 = vrot.slane %v593, %v597
      %v618 = vunpack.c.l.b16 %v575
      %v619 = vunpack.c.l.b16 %v576
      %v620 = vunpack.c.l.b16 %v577
      %v621 = vunpack.c.l.b16 %v578
      %v622 = vunpack.c.l.b16 %v579
      %v623 = vunpack.c.l.b16 %v580
      %v624 = vunpack.c.l.b16 %v581
      %v625 = vunpack.c.l.b16 %v582
      %v626 = vunpack.c.l.b16 %v583
      %v627 = vunpack.c.l.b16 %v584
      %v628 = vunpack.c.l.b16 %v585
      %v629 = vunpack.c.l.b16 %v586
      %v630 = vunpack.c.l.b16 %v587
      %v631 = vunpack.c.l.b16 %v588
      %v632 = vunpack.c.l.b16 %v589
      %v633 = vunpack.c.l.b16 %v590
      %v634 = vunpack.c.l.b16 %v591
      %v635 = vunpack.c.l.b16 %v592
      %v636 = vpack.c.b16 %v619, %v618
      %v637 = vpack.c.b16 %v621, %v620
      %v638 = vpack.c.b16 %v623, %v622
      %v639 = vpack.c.b16 %v625, %v624
      %v640 = vpack.c.b16 %v627, %v626
      %v641 = vpack.c.b16 %v629, %v628
      %v642 = vpack.c.b16 %v631, %v630
      %v643 = vpack.c.b16 %v633, %v632
      %v644 = vpack.c.b16 %v635, %v634
      %vm654 = vcmask 130048
      %v655 = vsel %vm654, %v430, 0
      %v657 = vsel %vm654, %v432, 0
      %v659 = vsel %vm654, %v434, 0
      %v661 = vsel %vm654, %v436, 0
      %v663 = vsel %vm654, %v438, 0
      %v665 = vsel %vm654, %v440, 0
      %v667 = vsel %vm654, %v442, 0
      %v669 = vsel %vm654, %v444, 0
      %v671 = vsel %vm654, %v446, 0
      %v673 = vsel %vm654, %v448, 0
      %v675 = vsel %vm654, %v450, 0
      %v677 = vsel %vm654, %v452, 0
      %v679 = vsel %vm654, %v454, 0
      %v681 = vsel %vm654, %v456, 0
      %v683 = vsel %vm654, %v458, 0
      %v685 = vsel %vm654, %v460, 0
      %v687 = vsel %vm654, %v462, 0
      %v689 = vsel %vm654, %v464, 0
      %691 = vmatprep.subr.bf16.mxu0 0
      %692 = vmatpush1.bf16.msra.mxu0 %v643
      %693 = vmatprep.subr.bf16.mxu0 0
      %694 = vmatpush1.bf16.msra.mxu0 %v642
      %695 = vmatprep.subr.bf16.mxu0 0
      %696 = vmatpush1.bf16.msra.mxu0 %v641
      %697 = vmatprep.subr.bf16.mxu0 0
      %698 = vmatpush1.bf16.msra.mxu0 %v640
      %699 = vmatprep.subr.bf16.mxu0 0
      %700 = vmatpush1.bf16.msra.mxu0 %v639
      %701 = vmatprep.subr.bf16.mxu0 0
      %702 = vmatpush1.bf16.msra.mxu0 %v638
      %703 = vmatprep.subr.bf16.mxu0 0
      %704 = vmatpush1.bf16.msra.mxu0 %v637
      %705 = vmatprep.subr.bf16.mxu0 0
      %706 = vmatpush1.bf16.msra.mxu0 %v636
      %707 = vmatprep.subr.bf16.mxu0 0
      %708 = vmatpush2.bf16.msra.mxu0 0
      %709 = vmatprep.subr.bf16.mxu0 0
      %710 = vmatpush2.bf16.msra.mxu0 0
      %711 = vmatprep.subr.bf16.mxu0 0
      %712 = vmatpush2.bf16.msra.mxu0 0
      %713 = vmatprep.subr.bf16.mxu0 0
      %714 = vmatpush2.bf16.msra.mxu0 0
      %715 = vmatprep.subr.bf16.mxu0 0
      %716 = vmatpush2.bf16.msra.mxu0 0
      %717 = vmatprep.subr.bf16.mxu0 0
      %718 = vmatpush2.bf16.msra.mxu0 0
      %719 = vmatprep.subr.bf16.mxu0 0
      %720 = vmatpush2.bf16.msra.mxu0 0
      %721 = vmatprep.subr.bf16.mxu0 0
      %722 = vmatpush2.bf16.msra.mxu0 %v644
      %723 = vmatprep.mubr.bf16.mxu0 %v655
      %724 = vmatmul.mubr.bf16.gmra.mxu0 %v522
      %v725 = vpop.f32.mrf.mxu0
      %v726 = vadd.f32 %v598, %v725
      %v727 = vpop.f32.mrf.mxu0
      %v728 = vpop.f32.mrf.mxu0
      %v729 = vadd.f32 %v598, %v728
      %v730 = vpop.f32.mrf.mxu0
      %731 = vmatprep.mubr.bf16.mxu0 %v657
      %732 = vmatmul.mubr.bf16.gmra.mxu0 %v525
      %v733 = vpop.f32.mrf.mxu0
      %v734 = vadd.f32 %v598, %v733
      %v735 = vpop.f32.mrf.mxu0
      %v736 = vpop.f32.mrf.mxu0
      %v737 = vadd.f32 %v598, %v736
      %v738 = vpop.f32.mrf.mxu0
      %739 = vmatprep.mubr.bf16.mxu0 %v659
      %740 = vmatmul.mubr.bf16.gmra.mxu0 %v528
      %v741 = vpop.f32.mrf.mxu0
      %v742 = vadd.f32 %v598, %v741
      %v743 = vpop.f32.mrf.mxu0
      %v744 = vpop.f32.mrf.mxu0
      %v745 = vadd.f32 %v598, %v744
      %v746 = vpop.f32.mrf.mxu0
      %747 = vmatprep.mubr.bf16.mxu0 %v661
      %748 = vmatmul.mubr.bf16.gmra.mxu0 %v531
      %v749 = vpop.f32.mrf.mxu0
      %v750 = vadd.f32 %v598, %v749
      %v751 = vpop.f32.mrf.mxu0
      %v752 = vpop.f32.mrf.mxu0
      %v753 = vadd.f32 %v598, %v752
      %v754 = vpop.f32.mrf.mxu0
      %755 = vmatprep.mubr.bf16.mxu0 %v663
      %756 = vmatmul.mubr.bf16.gmra.mxu0 %v534
      %v757 = vpop.f32.mrf.mxu0
      %v758 = vadd.f32 %v598, %v757
      %v759 = vpop.f32.mrf.mxu0
      %v760 = vpop.f32.mrf.mxu0
      %v761 = vadd.f32 %v598, %v760
      %v762 = vpop.f32.mrf.mxu0
      %763 = vmatprep.mubr.bf16.mxu0 %v665
      %764 = vmatmul.mubr.bf16.gmra.mxu0 %v537
      %v765 = vpop.f32.mrf.mxu0
      %v766 = vadd.f32 %v598, %v765
      %v767 = vpop.f32.mrf.mxu0
      %v768 = vpop.f32.mrf.mxu0
      %v769 = vadd.f32 %v598, %v768
      %v770 = vpop.f32.mrf.mxu0
      %771 = vmatprep.mubr.bf16.mxu0 %v667
      %772 = vmatmul.mubr.bf16.gmra.mxu0 %v540
      %v773 = vpop.f32.mrf.mxu0
      %v774 = vadd.f32 %v598, %v773
      %v775 = vpop.f32.mrf.mxu0
      %v776 = vpop.f32.mrf.mxu0
      %v777 = vadd.f32 %v598, %v776
      %v778 = vpop.f32.mrf.mxu0
      %779 = vmatprep.mubr.bf16.mxu0 %v669
      %780 = vmatmul.mubr.bf16.gmra.mxu0 %v543
      %v781 = vpop.f32.mrf.mxu0
      %v782 = vadd.f32 %v598, %v781
      %v783 = vpop.f32.mrf.mxu0
      %v784 = vpop.f32.mrf.mxu0
      %v785 = vadd.f32 %v598, %v784
      %v786 = vpop.f32.mrf.mxu0
      %787 = vmatprep.mubr.bf16.mxu0 %v671
      %788 = vmatmul.mubr.bf16.gmra.mxu0 %v546
      %v789 = vpop.f32.mrf.mxu0
      %v790 = vadd.f32 %v598, %v789
      %v791 = vpop.f32.mrf.mxu0
      %v792 = vpop.f32.mrf.mxu0
      %v793 = vadd.f32 %v598, %v792
      %v794 = vpop.f32.mrf.mxu0
      %795 = vmatprep.mubr.bf16.mxu0 %v673
      %796 = vmatmul.mubr.bf16.gmra.mxu0 %v549
      %v797 = vpop.f32.mrf.mxu0
      %v798 = vadd.f32 %v598, %v797
      %v799 = vpop.f32.mrf.mxu0
      %v800 = vpop.f32.mrf.mxu0
      %v801 = vadd.f32 %v598, %v800
      %v802 = vpop.f32.mrf.mxu0
      %803 = vmatprep.mubr.bf16.mxu0 %v675
      %804 = vmatmul.mubr.bf16.gmra.mxu0 %v552
      %v805 = vpop.f32.mrf.mxu0
      %v806 = vadd.f32 %v598, %v805
      %v807 = vpop.f32.mrf.mxu0
      %v808 = vpop.f32.mrf.mxu0
      %v809 = vadd.f32 %v598, %v808
      %v810 = vpop.f32.mrf.mxu0
      %811 = vmatprep.mubr.bf16.mxu0 %v677
      %812 = vmatmul.mubr.bf16.gmra.mxu0 %v555
      %v813 = vpop.f32.mrf.mxu0
      %v814 = vadd.f32 %v598, %v813
      %v815 = vpop.f32.mrf.mxu0
      %v816 = vpop.f32.mrf.mxu0
      %v817 = vadd.f32 %v598, %v816
      %v818 = vpop.f32.mrf.mxu0
      %819 = vmatprep.mubr.bf16.mxu0 %v679
      %820 = vmatmul.mubr.bf16.gmra.mxu0 %v558
      %v821 = vpop.f32.mrf.mxu0
      %v822 = vadd.f32 %v598, %v821
      %v823 = vpop.f32.mrf.mxu0
      %v824 = vpop.f32.mrf.mxu0
      %v825 = vadd.f32 %v598, %v824
      %v826 = vpop.f32.mrf.mxu0
      %827 = vmatprep.mubr.bf16.mxu0 %v681
      %828 = vmatmul.mubr.bf16.gmra.mxu0 %v561
      %v829 = vpop.f32.mrf.mxu0
      %v830 = vadd.f32 %v598, %v829
      %v831 = vpop.f32.mrf.mxu0
      %v832 = vpop.f32.mrf.mxu0
      %v833 = vadd.f32 %v598, %v832
      %v834 = vpop.f32.mrf.mxu0
      %835 = vmatprep.mubr.bf16.mxu0 %v683
      %836 = vmatmul.mubr.bf16.gmra.mxu0 %v564
      %v837 = vpop.f32.mrf.mxu0
      %v838 = vadd.f32 %v598, %v837
      %v839 = vpop.f32.mrf.mxu0
      %v840 = vpop.f32.mrf.mxu0
      %v841 = vadd.f32 %v598, %v840
      %v842 = vpop.f32.mrf.mxu0
      %843 = vmatprep.mubr.bf16.mxu0 %v685
      %844 = vmatmul.mubr.bf16.gmra.mxu0 %v567
      %v845 = vpop.f32.mrf.mxu0
      %v846 = vadd.f32 %v598, %v845
      %v847 = vpop.f32.mrf.mxu0
      %v848 = vpop.f32.mrf.mxu0
      %v849 = vadd.f32 %v598, %v848
      %v850 = vpop.f32.mrf.mxu0
      %851 = vmatprep.mubr.bf16.mxu0 %v687
      %852 = vmatmul.mubr.bf16.gmra.mxu0 %v570
      %v853 = vpop.f32.mrf.mxu0
      %v854 = vadd.f32 %v598, %v853
      %v855 = vpop.f32.mrf.mxu0
      %v856 = vpop.f32.mrf.mxu0
      %v857 = vadd.f32 %v598, %v856
      %v858 = vpop.f32.mrf.mxu0
      %859 = vmatprep.mubr.bf16.mxu0 %v689
      %860 = vmatmul.mubr.bf16.gmra.mxu0 %v573
      %v861 = vpop.f32.mrf.mxu0
      %v862 = vadd.f32 %v598, %v861
      %v863 = vpop.f32.mrf.mxu0
      %v864 = vpop.f32.mrf.mxu0
      %v865 = vadd.f32 %v598, %v864
      %v866 = vpop.f32.mrf.mxu0
      %867 = vdwg.mxu0
      %v868 = vtanh.pop %v726
      %v869 = vtanh.pop %v729
      %v870 = vtanh.pop %v734
      %v871 = vtanh.pop %v737
      %v872 = vtanh.pop %v742
      %v873 = vtanh.pop %v745
      %v874 = vtanh.pop %v750
      %v875 = vtanh.pop %v753
      %v876 = vtanh.pop %v758
      %v877 = vtanh.pop %v761
      %v878 = vtanh.pop %v766
      %v879 = vtanh.pop %v769
      %v880 = vtanh.pop %v774
      %v881 = vtanh.pop %v777
      %v882 = vtanh.pop %v782
      %v883 = vtanh.pop %v785
      %v884 = vtanh.pop %v790
      %v885 = vtanh.pop %v793
      %v886 = vtanh.pop %v798
      %v887 = vtanh.pop %v801
      %v888 = vtanh.pop %v806
      %v889 = vtanh.pop %v809
      %v890 = vtanh.pop %v814
      %v891 = vtanh.pop %v817
      %v892 = vtanh.pop %v822
      %v893 = vtanh.pop %v825
      %v894 = vtanh.pop %v830
      %v895 = vtanh.pop %v833
      %v896 = vtanh.pop %v838
      %v897 = vtanh.pop %v841
      %v898 = vtanh.pop %v846
      %v899 = vtanh.pop %v849
      %v900 = vtanh.pop %v854
      %v901 = vtanh.pop %v857
      %v902 = vtanh.pop %v862
      %v903 = vtanh.pop %v865
      %v904 = vpack.c.bf16 %v869, %v868
      %v905 = vpack.c.bf16 %v871, %v870
      %v906 = vpack.c.bf16 %v873, %v872
      %v907 = vpack.c.bf16 %v875, %v874
      %v908 = vpack.c.bf16 %v877, %v876
      %v909 = vpack.c.bf16 %v879, %v878
      %v910 = vpack.c.bf16 %v881, %v880
      %v911 = vpack.c.bf16 %v883, %v882
      %v912 = vpack.c.bf16 %v885, %v884
      %v913 = vpack.c.bf16 %v887, %v886
      %v914 = vpack.c.bf16 %v889, %v888
      %v915 = vpack.c.bf16 %v891, %v890
      %v916 = vpack.c.bf16 %v893, %v892
      %v917 = vpack.c.bf16 %v895, %v894
      %v918 = vpack.c.bf16 %v897, %v896
      %v919 = vpack.c.bf16 %v899, %v898
      %v920 = vpack.c.bf16 %v901, %v900
      %v921 = vpack.c.bf16 %v903, %v902
      %v940 = vunpack.c.l.b16 %v904
      %v941 = vunpack.c.h.b16 %v904
      %v942 = vunpack.c.l.b16 %v905
      %v943 = vunpack.c.h.b16 %v905
      %v944 = vunpack.c.l.b16 %v906
      %v945 = vunpack.c.h.b16 %v906
      %v946 = vunpack.c.l.b16 %v907
      %v947 = vunpack.c.h.b16 %v907
      %v948 = vunpack.c.l.b16 %v908
      %v949 = vunpack.c.h.b16 %v908
      %v950 = vunpack.c.l.b16 %v909
      %v951 = vunpack.c.h.b16 %v909
      %v952 = vunpack.c.l.b16 %v910
      %v953 = vunpack.c.h.b16 %v910
      %v954 = vunpack.c.l.b16 %v911
      %v955 = vunpack.c.h.b16 %v911
      %v956 = vunpack.c.l.b16 %v912
      %v957 = vunpack.c.h.b16 %v912
      %v958 = vunpack.c.l.b16 %v913
      %v959 = vunpack.c.h.b16 %v913
      %v960 = vunpack.c.l.b16 %v914
      %v961 = vunpack.c.h.b16 %v914
      %v962 = vunpack.c.l.b16 %v915
      %v963 = vunpack.c.h.b16 %v915
      %v964 = vunpack.c.l.b16 %v916
      %v965 = vunpack.c.h.b16 %v916
      %v966 = vunpack.c.l.b16 %v917
      %v967 = vunpack.c.h.b16 %v917
      %v968 = vunpack.c.l.b16 %v918
      %v969 = vunpack.c.h.b16 %v918
      %v970 = vunpack.c.l.b16 %v919
      %v971 = vunpack.c.h.b16 %v919
      %v972 = vunpack.c.l.b16 %v920
      %v973 = vunpack.c.h.b16 %v920
      %v974 = vunpack.c.l.b16 %v921
      %v975 = vunpack.c.h.b16 %v921
      %v976 = vpack.c.b16 %v940, %v940
      %v977 = vpack.c.b16 %v941, %v941
      %v978 = vpack.c.b16 %v942, %v942
      %v979 = vpack.c.b16 %v943, %v943
      %v980 = vpack.c.b16 %v944, %v944
      %v981 = vpack.c.b16 %v945, %v945
      %v982 = vpack.c.b16 %v946, %v946
      %v983 = vpack.c.b16 %v947, %v947
      %v984 = vpack.c.b16 %v948, %v948
      %v985 = vpack.c.b16 %v949, %v949
      %v986 = vpack.c.b16 %v950, %v950
      %v987 = vpack.c.b16 %v951, %v951
      %v988 = vpack.c.b16 %v952, %v952
      %v989 = vpack.c.b16 %v953, %v953
      %v990 = vpack.c.b16 %v954, %v954
      %v991 = vpack.c.b16 %v955, %v955
      %v992 = vpack.c.b16 %v956, %v956
      %v993 = vpack.c.b16 %v957, %v957
      %v994 = vpack.c.b16 %v958, %v958
      %v995 = vpack.c.b16 %v959, %v959
      %v996 = vpack.c.b16 %v960, %v960
      %v997 = vpack.c.b16 %v961, %v961
      %v998 = vpack.c.b16 %v962, %v962
      %v999 = vpack.c.b16 %v963, %v963
      %v1000 = vpack.c.b16 %v964, %v964
      %v1001 = vpack.c.b16 %v965, %v965
      %v1002 = vpack.c.b16 %v966, %v966
      %v1003 = vpack.c.b16 %v967, %v967
      %v1004 = vpack.c.b16 %v968, %v968
      %v1005 = vpack.c.b16 %v969, %v969
      %v1006 = vpack.c.b16 %v970, %v970
      %v1007 = vpack.c.b16 %v971, %v971
      %v1008 = vpack.c.b16 %v972, %v972
      %v1009 = vpack.c.b16 %v973, %v973
      %v1010 = vpack.c.b16 %v974, %v974
      %v1011 = vpack.c.b16 %v975, %v975
      %1048 = vst [vmem:[%s170] sm:$0xf] %v976
      %1049 = vst [vmem:[%s170 + $0x4] sm:$0xf] %v977
      %1050 = vst [vmem:[%s170 + $0x8] sm:$0xf] %v978
      %1051 = vst [vmem:[%s170 + $0xc] sm:$0xf] %v979
      %1052 = vst [vmem:[%s170 + $0x10] sm:$0xf] %v980
      %1053 = vst [vmem:[%s170 + $0x14] sm:$0xf] %v981
      %1054 = vst [vmem:[%s170 + $0x18] sm:$0xf] %v982
      %1055 = vst [vmem:[%s170 + $0x1c] sm:$0xf] %v983
      %1056 = vst [vmem:[%s170 + $0x20] sm:$0xf] %v984
      %1057 = vst [vmem:[%s170 + $0x24] sm:$0xf] %v985
      %1058 = vst [vmem:[%s170 + $0x28] sm:$0xf] %v986
      %1059 = vst [vmem:[%s170 + $0x2c] sm:$0xf] %v987
      %1060 = vst [vmem:[%s170 + $0x30] sm:$0xf] %v988
      %1061 = vst [vmem:[%s170 + $0x34] sm:$0xf] %v989
      %1062 = vst [vmem:[%s170 + $0x38] sm:$0xf] %v990
      %1063 = vst [vmem:[%s170 + $0x3c] sm:$0xf] %v991
      %1064 = vst [vmem:[%s170 + $0x40] sm:$0xf] %v992
      %1065 = vst [vmem:[%s170 + $0x44] sm:$0xf] %v993
      %1066 = vst [vmem:[%s170 + $0x48] sm:$0xf] %v994
      %1067 = vst [vmem:[%s170 + $0x4c] sm:$0xf] %v995
      %1068 = vst [vmem:[%s170 + $0x50] sm:$0xf] %v996
      %1069 = vst [vmem:[%s170 + $0x54] sm:$0xf] %v997
      %1070 = vst [vmem:[%s170 + $0x58] sm:$0xf] %v998
      %1071 = vst [vmem:[%s170 + $0x5c] sm:$0xf] %v999
      %1072 = vst [vmem:[%s170 + $0x60] sm:$0xf] %v1000
      %1073 = vst [vmem:[%s170 + $0x64] sm:$0xf] %v1001
      %1074 = vst [vmem:[%s170 + $0x68] sm:$0xf] %v1002
      %1075 = vst [vmem:[%s170 + $0x6c] sm:$0xf] %v1003
      %1076 = vst [vmem:[%s170 + $0x70] sm:$0xf] %v1004
      %1077 = vst [vmem:[%s170 + $0x74] sm:$0xf] %v1005
      %1078 = vst [vmem:[%s170 + $0x78] sm:$0xf] %v1006
      %1079 = vst [vmem:[%s170 + $0x7c] sm:$0xf] %v1007
      %1080 = vst [vmem:[%s170 + $0x80] sm:$0xf] %v1008
      %1081 = vst [vmem:[%s170 + $0x84] sm:$0xf] %v1009
      %1082 = vst [vmem:[%s170 + $0x88] sm:$0xf] %v1010
      %1083 = vst [vmem:[%s170 + $0x8c] sm:$0xf] %v1011
      %p1084 = scmp.lt.s32.totalorder %s14, 1
      %s1085 = scalar_select %p1084, %s14, 1
      %s1086 = smul.addr %s1085, 36
      %s1087 = smul.addr %s1086, 4
      %s1088 = scalar_lea.vmem %s3, %s1087
      // Predicated region
      $region33: #{_lambda_.7} parent=31 // pred_check
        %p1089 = pneg %p100
      $region34: #{_lambda_.7} parent=31 // pred_check_branch
        %1091 = sbr.rel (%p1089) target = $region36
      $region35: #{_lambda_.7} parent=31 // pred_region
        _
      $region36: #{_lambda_.7} parent=31 // pred_fallthru
        _
    $region32: #{_lambda_.7} parent=5 // pred_fallthru
      _
    %p1092 = scmp.le.s32.totalorder 2, %s9
    // Predicated region
    $region37: #{_lambda_.7} parent=5 // pred_check
      %p1093 = pneg %p1092
    $region38: #{_lambda_.7} parent=5 // pred_check_branch
      %1095 = sbr.rel (%p1093) target = $region40
    $region39: #{_lambda_.7} parent=5 // pred_region
      %s1096 = ssub.s32 %s9, 2
      // Predicated region
      $region41: #{_lambda_.7} parent=39 // pred_check
        %p1097 = pneg %p106
      $region42: #{_lambda_.7} parent=39 // pred_check_branch
        %1099 = sbr.rel (%p1097) target = $region44
      $region43: #{_lambda_.7} parent=39 // pred_region
        %p1100 = scmp.lt.s32.totalorder %s15, 1
        %s1101 = scalar_select %p1100, %s15, 1
        %s1102 = smul.addr %s1101, 36
        %s1103 = smul.addr %s1102, 4
        %s1104 = scalar_lea.vmem %s3, %s1103
      $region44: #{_lambda_.7} parent=39 // pred_fallthru
        _
    $region40: #{_lambda_.7} parent=5 // pred_fallthru
      _
  $region6: #{_lambda_.7} parent=0 // loop_footer
    %s13 = sadd.s32 1, %s9
  $region7: #{_lambda_.7} parent=0 // loop_footer_branch
    %8 = sbr.rel target = $region3
  $region8: #{_lambda_.7} parent=0 // loop_exit
    _

</llo_original>
